<compile_context>
chip_gen: v5e
topology: v5e:2x2
jax: 0.10.0
libtpu: 0.0.40
codegen_flags: <defaults>
</compile_context>

<pallas_src>
import functools

import jax
import jax.numpy as jnp
from jax.experimental import pallas as pl
from jax.experimental.pallas import tpu as pltpu

# Above the 16 MiB (v5e) / 32 MiB (v6e, v7x) scoped-VMEM defaults, below v7x's
# 64 MiB physical capacity (leave headroom for the compiler's own scratch).
_VMEM_LIMIT_BYTES = 48 * 1024 * 1024


# ----------------------------- in-kernel helpers -----------------------------

def _layernorm(x, w, b, eps):
    # x: (N, C); w, b: (1, C)
    mu = jnp.mean(x, axis=-1, keepdims=True)
    xc = x - mu
    var = jnp.mean(xc * xc, axis=-1, keepdims=True)
    return xc * jax.lax.rsqrt(var + eps) * w + b


def _erf_poly(x):
    # Abramowitz & Stegun 7.1.26, |err| <= 1.5e-7. Uses only exp/VPU ops, so it
    # lowers on every TPU generation (no erf primitive needed in Mosaic).
    p = 0.3275911
    a1, a2, a3, a4, a5 = 0.254829592, -0.284496736, 1.421413741, -1.453152027, 1.061405429
    ax = jnp.abs(x)
    t = 1.0 / (1.0 + p * ax)
    poly = ((((a5 * t + a4) * t + a3) * t + a2) * t + a1) * t
    y = 1.0 - poly * jnp.exp(-ax * ax)
    return jnp.where(x >= 0, y, -y)


def _gelu(x):
    # Exact (erf-based) GELU, matching torch.nn.GELU() default.
    # tanh-form / pl.reciprocal(approx=True) variants were evaluated but rejected:
    # their ~1e-3 error would endanger the strict f32 validation and could flip
    # near-tie top-k selections (see perf-review correctness concerns).
    return 0.5 * x * (1.0 + _erf_poly(x * 0.7071067811865476))


def _softmax_last(x):
    # One reciprocal per row + cheap vmuls instead of an (N, N) vector divide.
    m = jnp.max(x, axis=-1, keepdims=True)
    e = jnp.exp(x - m)
    inv = 1.0 / jnp.sum(e, axis=-1, keepdims=True)
    return e * inv


def _prec(compute_dtype):
    # f32 validation path keeps exact (multi-pass) matmuls; bf16 path uses the
    # native bf16 MXU (precision flag irrelevant for bf16 operands).
    return (jax.lax.Precision.HIGHEST if compute_dtype == jnp.float32
            else jax.lax.Precision.DEFAULT)


def _dot(a, b, cd, prec):
    # Cast operands to the compute dtype (bf16 on the perf build), accumulate f32.
    return jnp.dot(a.astype(cd), b.astype(cd), precision=prec,
                   preferred_element_type=jnp.float32)


def _dot_nt(a, b, cd, prec):
    # (M, K) x (N, K) -> (M, N): contract the last dim of both (q @ k^T).
    return jax.lax.dot_general(a.astype(cd), b.astype(cd),
                               (((1,), (1,)), ((), ())),
                               precision=prec,
                               preferred_element_type=jnp.float32)


def _mha(xn, qkv_w, qkv_b, proj_w, proj_b, num_heads, want_scores, cd, prec):
    """xn: (N, C) already layer-normed. Returns (attn_out (N, C), scores (1, N)|None).

    Per-head results are folded straight into the output projection
    ((p_h @ v_h) @ proj_w[h*Dh:(h+1)*Dh, :]), so there is no lane-dim concat and
    no H live (N, Dh) tensors."""
    N, C = xn.shape
    H = num_heads
    Dh = C // H
    scale = Dh ** (-0.5)
    qkv = _dot(xn, qkv_w, cd, prec) + qkv_b                                   # (N, 3C) f32
    q, k, v = qkv[:, 0:C], qkv[:, C:2 * C], qkv[:, 2 * C:3 * C]
    out = None
    scores = None
    for h in range(H):
        sl = slice(h * Dh, (h + 1) * Dh)
        s = _dot_nt(q[:, sl], k[:, sl], cd, prec) * scale                     # (N, N) f32
        p = _softmax_last(s)
        if want_scores:
            row = p[0:1, :]
            scores = row if scores is None else scores + row
        pv = _dot(p, v[:, sl], cd, prec)                                      # (N, Dh)
        contrib = _dot(pv, proj_w[sl, :], cd, prec)                           # (N, C)
        out = contrib if out is None else out + contrib
    out = out + proj_b
    if want_scores:
        return out, scores * (1.0 / H)
    return out, None


# --------------------------------- kernels -----------------------------------

def _vit_stack_kernel(x_ref, ln1_w, ln1_b, qkv_w, qkv_b, proj_w, proj_b,
                      ln2_w, ln2_b, fc1_w, fc1_b, fc2_w, fc2_b, o_ref,
                      *, num_heads, eps, compute_dtype):
    # grid = (B, depth): the output block index is constant along the depth axis,
    # so the activation slab stays resident in VMEM across all layers (classic
    # output-revisit / accumulator pattern) while layer d+1 weights prefetch
    # behind layer d compute.
    d = pl.program_id(1)

    @pl.when(d == 0)
    def _():
        o_ref[0] = x_ref[0].astype(o_ref.dtype)

    prec = _prec(compute_dtype)
    x = o_ref[0]                                                              # (N, C) f32
    attn, _ = _mha(_layernorm(x, ln1_w[0], ln1_b[0], eps),
                   qkv_w[0], qkv_b[0], proj_w[0], proj_b[0],
                   num_heads, False, compute_dtype, prec)
    x = x + attn
    h = _layernorm(x, ln2_w[0], ln2_b[0], eps)
    h = _gelu(_dot(h, fc1_w[0], compute_dtype, prec) + fc1_b[0])
    h = _dot(h, fc2_w[0], compute_dtype, prec) + fc2_b[0]
    o_ref[0] = (x + h).astype(o_ref.dtype)


def _select_attn_kernel(x_ref, ln1_w, ln1_b, qkv_w, qkv_b, proj_w, proj_b,
                        o_ref, s_ref, *, num_heads, eps, compute_dtype):
    prec = _prec(compute_dtype)
    x = x_ref[0]                                                              # (N, C)
    attn, scores = _mha(_layernorm(x, ln1_w[...], ln1_b[...], eps),
                        qkv_w[...], qkv_b[...], proj_w[...], proj_b[...],
                        num_heads, True, compute_dtype, prec)
    o_ref[0] = (x + attn).astype(o_ref.dtype)
    s_ref[0] = scores.astype(s_ref.dtype)


def _select_mlp_norm_kernel(x_ref, ln2_w, ln2_b, fc1_w, fc1_b, fc2_w, fc2_b,
                            lnf_w, lnf_b, o_ref, *, eps_block, eps_final,
                            compute_dtype):
    prec = _prec(compute_dtype)
    x = x_ref[0]                                                              # (M, C)
    h = _layernorm(x, ln2_w[...], ln2_b[...], eps_block)
    h = _gelu(_dot(h, fc1_w[...], compute_dtype, prec) + fc1_b[...])
    h = _dot(h, fc2_w[...], compute_dtype, prec) + fc2_b[...]
    y = x + h
    o_ref[0] = _layernorm(y, lnf_w[...], lnf_b[...], eps_final).astype(o_ref.dtype)


# ------------------------------ pallas wrappers -------------------------------

def _resident_weight_spec(shape):
    # Grid-invariant weights: constant index_map keeps them VMEM-resident; single-
    # buffer them (pl.Buffered(1)) so they do not pay for a useless second buffer
    # (relevant for v7x's 64 MiB VMEM budget).
    zeros = (0,) * len(shape)
    index_map = lambda b, _z=zeros: _z
    if hasattr(pl, "Buffered"):
        try:
            return pl.BlockSpec(shape, index_map, pipeline_mode=pl.Buffered(1))
        except TypeError:  # jax version without pipeline_mode on BlockSpec
            pass
    return pl.BlockSpec(shape, index_map)


def _stack_param(blocks, name, dtype=None):
    a = jnp.stack([bp[name] for bp in blocks], axis=0)
    return a if dtype is None else a.astype(dtype)


def _run_vit_stack(x, blocks, *, num_heads, eps, compute_dtype):
    B, N, C = x.shape
    depth = len(blocks)
    cd = jax.dtypes.canonicalize_dtype(compute_dtype)
    # Matmul weight matrices go in at the compute dtype (halves their HBM/DMA
    # traffic on the bf16 perf build); LN params and biases stay f32.
    weights = [
        _stack_param(blocks, "ln1_w"), _stack_param(blocks, "ln1_b"),
        _stack_param(blocks, "qkv_w", cd), _stack_param(blocks, "qkv_b"),
        _stack_param(blocks, "proj_w", cd), _stack_param(blocks, "proj_b"),
        _stack_param(blocks, "ln2_w"), _stack_param(blocks, "ln2_b"),
        _stack_param(blocks, "fc1_w", cd), _stack_param(blocks, "fc1_b"),
        _stack_param(blocks, "fc2_w", cd), _stack_param(blocks, "fc2_b"),
    ]

    def wspec(a):
        zeros = (0,) * (a.ndim - 1)
        # Varies along depth -> keep default double buffering so layer d+1
        # weights prefetch behind layer d compute.
        return pl.BlockSpec((1,) + a.shape[1:], lambda b, d, _z=zeros: (d,) + _z)

    kernel = functools.partial(_vit_stack_kernel, num_heads=num_heads, eps=eps,
                               compute_dtype=cd)
    return pl.pallas_call(
        kernel,
        out_shape=jax.ShapeDtypeStruct((B, N, C), x.dtype),
        grid_spec=pltpu.PrefetchScalarGridSpec(
            num_scalar_prefetch=0, grid=(B, depth),
            in_specs=[pl.BlockSpec((1, N, C), lambda b, d: (b, 0, 0))]
                     + [wspec(a) for a in weights],
            out_specs=pl.BlockSpec((1, N, C), lambda b, d: (b, 0, 0))),
        compiler_params=pltpu.CompilerParams(
            dimension_semantics=("parallel", "arbitrary"),
            vmem_limit_bytes=_VMEM_LIMIT_BYTES),
    )(x, *weights)


def _run_select_attn(x, p, *, num_heads, eps, compute_dtype):
    B, N, C = x.shape
    cd = jax.dtypes.canonicalize_dtype(compute_dtype)
    kernel = functools.partial(_select_attn_kernel, num_heads=num_heads, eps=eps,
                               compute_dtype=cd)
    weights = (p["ln1_w"], p["ln1_b"], p["qkv_w"].astype(cd), p["qkv_b"],
               p["proj_w"].astype(cd), p["proj_b"])
    x_out, scores = pl.pallas_call(
        kernel,
        out_shape=(jax.ShapeDtypeStruct((B, N, C), x.dtype),
                   jax.ShapeDtypeStruct((B, 1, N), jnp.float32)),
        grid_spec=pltpu.PrefetchScalarGridSpec(
            num_scalar_prefetch=0, grid=(B,),
            in_specs=[pl.BlockSpec((1, N, C), lambda b: (b, 0, 0))]
                     + [_resident_weight_spec(w.shape) for w in weights],
            out_specs=[pl.BlockSpec((1, N, C), lambda b: (b, 0, 0)),
                       pl.BlockSpec((1, 1, N), lambda b: (b, 0, 0))]),
        compiler_params=pltpu.CompilerParams(
            dimension_semantics=("parallel",),
            vmem_limit_bytes=_VMEM_LIMIT_BYTES),
    )(x, *weights)
    return x_out, scores[:, 0, :]


def _run_select_mlp_norm(x, p, fnorm, *, eps_block, eps_final, compute_dtype):
    B, M, C = x.shape
    cd = jax.dtypes.canonicalize_dtype(compute_dtype)
    kernel = functools.partial(_select_mlp_norm_kernel, eps_block=eps_block,
                               eps_final=eps_final, compute_dtype=cd)
    weights = (p["ln2_w"], p["ln2_b"], p["fc1_w"].astype(cd), p["fc1_b"],
               p["fc2_w"].astype(cd), p["fc2_b"], fnorm["w"], fnorm["b"])
    return pl.pallas_call(
        kernel,
        out_shape=jax.ShapeDtypeStruct((B, M, C), x.dtype),
        grid_spec=pltpu.PrefetchScalarGridSpec(
            num_scalar_prefetch=0, grid=(B,),
            in_specs=[pl.BlockSpec((1, M, C), lambda b: (b, 0, 0))]
                     + [_resident_weight_spec(w.shape) for w in weights],
            out_specs=pl.BlockSpec((1, M, C), lambda b: (b, 0, 0))),
        compiler_params=pltpu.CompilerParams(
            dimension_semantics=("parallel",),
            vmem_limit_bytes=_VMEM_LIMIT_BYTES),
    )(x, *weights)


def _select_patches(x, scores, *, rate, grid_h, grid_w, keep_indices_old=None):
    # TODO(synk): data-dependent top-k + gather has no clean Pallas equivalent; done in XLA.
    cls_tok = x[:, :1, :]
    patches = x[:, 1:, :]
    s = scores[:, 1:]
    _, n_patch, _ = patches.shape
    keep_num = int(n_patch * rate)
    _, keep_idx = jax.lax.top_k(s, keep_num)                        # sorted descending
    sel = jnp.take_along_axis(patches, keep_idx[..., None], axis=1)
    x_sel = jnp.concatenate([cls_tok, sel], axis=1)
    if keep_indices_old is not None:
        keep_idx = jnp.take_along_axis(keep_indices_old, keep_idx, axis=1)
    patch_h = 224.0 / grid_h
    patch_w = 224.0 / grid_w
    rows = keep_idx // grid_w
    cols = keep_idx % grid_w
    positions = jnp.stack([cols * patch_w, rows * patch_h,
                           (cols + 1) * patch_w, (rows + 1) * patch_h],
                          axis=-1).astype(x.dtype)
    return x_sel, positions, keep_idx


def selectformer_block_forward(x, params, *, num_heads=1, rate=0.25,
                               grid_h=32, grid_w=32,
                               keep_indices_old=None, return_pos=False,
                               compute_dtype=jnp.bfloat16):
    """x: (B, 1 + num_patches, dim) float32. compute_dtype selects the MXU operand
    dtype (bf16 = perf build, f32 = exact validation build)."""
    blocks = params["vit_blocks"]
    if blocks:
        x = _run_vit_stack(x, blocks, num_heads=num_heads, eps=1e-6,
                           compute_dtype=compute_dtype)
    sp = params["select"]
    x_attn, scores = _run_select_attn(x, sp, num_heads=num_heads, eps=1e-5,
                                      compute_dtype=compute_dtype)
    x_sel, positions, keep_idx = _select_patches(
        x_attn, scores, rate=rate, grid_h=grid_h, grid_w=grid_w,
        keep_indices_old=keep_indices_old)
    x_out = _run_select_mlp_norm(x_sel, sp, params["final_norm"],
                                 eps_block=1e-5, eps_final=1e-6,
                                 compute_dtype=compute_dtype)
    if return_pos:
        return x_out, positions, keep_idx
    return x_out, keep_idx


# ------------------------------ pure-JAX reference ----------------------------

def _ref_mm(a, b, cd):
    return jnp.matmul(a.astype(cd), b.astype(cd),
                      precision=jax.lax.Precision.HIGHEST,
                      preferred_element_type=jnp.float32)


def _ref_ln(x, w, b, eps):
    mu = jnp.mean(x, axis=-1, keepdims=True)
    var = jnp.mean((x - mu) ** 2, axis=-1, keepdims=True)
    return (x - mu) / jnp.sqrt(var + eps) * w + b


def _ref_attn(x, p, num_heads, want_scores, cd):
    B, N, C = x.shape
    H, Dh = num_heads, C // num_heads
    qkv = _ref_mm(x, p["qkv_w"], cd) + p["qkv_b"]
    qkv = qkv.reshape(B, N, 3, H, Dh).transpose(2, 0, 3, 1, 4)
    q, k, v = qkv[0], qkv[1], qkv[2]                                # (B,H,N,Dh)
    attn = jnp.einsum("bhnd,bhmd->bhnm", q.astype(cd), k.astype(cd),
                      precision=jax.lax.Precision.HIGHEST,
                      preferred_element_type=jnp.float32) * (Dh ** -0.5)
    attn = jax.nn.softmax(attn, axis=-1)
    scores = attn[:, :, 0, :].mean(axis=1)                          # (B, N)
    out = jnp.einsum("bhnm,bhmd->bhnd", attn.astype(cd), v.astype(cd),
                     precision=jax.lax.Precision.HIGHEST,
                     preferred_element_type=jnp.float32)
    out = out.transpose(0, 2, 1, 3).reshape(B, N, C)
    out = _ref_mm(out, p["proj_w"], cd) + p["proj_b"]
    return (out, scores) if want_scores else (out, None)


def _ref_gelu(x):
    return 0.5 * x * (1.0 + jax.scipy.special.erf(x * 0.7071067811865476))


def _ref_mlp(x, p, cd):
    h = _ref_gelu(_ref_mm(x, p["fc1_w"], cd) + p["fc1_b"])
    return _ref_mm(h, p["fc2_w"], cd) + p["fc2_b"]


def reference_forward(x, params, *, num_heads=1, rate=0.25, grid_h=32, grid_w=32,
                      keep_indices_old=None, compute_dtype=jnp.float32):
    cd = jax.dtypes.canonicalize_dtype(compute_dtype)
    for bp in params["vit_blocks"]:
        a, _ = _ref_attn(_ref_ln(x, bp["ln1_w"], bp["ln1_b"], 1e-6), bp,
                         num_heads, False, cd)
        x = x + a
        x = x + _ref_mlp(_ref_ln(x, bp["ln2_w"], bp["ln2_b"], 1e-6), bp, cd)
    sp = params["select"]
    y, scores = _ref_attn(_ref_ln(x, sp["ln1_w"], sp["ln1_b"], 1e-5), sp,
                          num_heads, True, cd)
    x = x + y
    x_sel, positions, keep_idx = _select_patches(
        x, scores, rate=rate, grid_h=grid_h, grid_w=grid_w,
        keep_indices_old=keep_indices_old)
    x_sel = x_sel + _ref_mlp(_ref_ln(x_sel, sp["ln2_w"], sp["ln2_b"], 1e-5), sp, cd)
    fn = params["final_norm"]
    x_sel = _ref_ln(x_sel, fn["w"], fn["b"], 1e-6)
    return x_sel, positions, keep_idx


# ------------------------------ parameter setup --------------------------------

def init_params(key, dim, depth, mlp_ratio=4.0):
    hidden = int(dim * mlp_ratio)
    ks = iter(jax.random.split(key, 128))

    def xavier(fan_in, fan_out):
        lim = (6.0 / (fan_in + fan_out)) ** 0.5
        return jax.random.uniform(next(ks), (fan_in, fan_out), jnp.float32, -lim, lim)

    def linear(fan_in, fan_out):
        return xavier(fan_in, fan_out), \
               0.02 * jax.random.normal(next(ks), (1, fan_out), jnp.float32)

    def ln():
        return 1.0 + 0.1 * jax.random.normal(next(ks), (1, dim), jnp.float32), \
               0.1 * jax.random.normal(next(ks), (1, dim), jnp.float32)

    def block():
        ln1_w, ln1_b = ln()
        qkv_w, qkv_b = linear(dim, 3 * dim)      # x @ W + b  (torch weight transposed)
        proj_w, proj_b = linear(dim, dim)
        ln2_w, ln2_b = ln()
        fc1_w, fc1_b = linear(dim, hidden)
        fc2_w, fc2_b = linear(hidden, dim)
        return dict(ln1_w=ln1_w, ln1_b=ln1_b, qkv_w=qkv_w, qkv_b=qkv_b,
                    proj_w=proj_w, proj_b=proj_b, ln2_w=ln2_w, ln2_b=ln2_b,
                    fc1_w=fc1_w, fc1_b=fc1_b, fc2_w=fc2_w, fc2_b=fc2_b)

    fw, fb = ln()
    return dict(vit_blocks=[block() for _ in range(depth)],
                select=block(),
                final_norm=dict(w=fw, b=fb))


# ------------------------------------ main --------------------------------------

if __name__ == "__main__":
    B, num_patches, dim = 2, 16, 32
    depth, num_heads, mlp_ratio, rate = 2, 1, 4.0, 0.25
    N = num_patches + 1                      # CLS token + patches
    keep_num = int(num_patches * rate)

    key = jax.random.PRNGKey(0)
    kx, kp = jax.random.split(key)
    x = jax.random.normal(kx, (B, N, dim), dtype=jnp.float32)
    params = init_params(kp, dim, depth, mlp_ratio)

    # --- strict correctness gate: f32 kernel path vs f32 (HIGHEST) reference ---
    out32, idx32 = selectformer_block_forward(x, params, num_heads=num_heads,
                                              rate=rate, compute_dtype=jnp.float32)
    out32 = jax.block_until_ready(out32)
    ref32, ref_pos32, ref_idx32 = reference_forward(
        x, params, num_heads=num_heads, rate=rate, compute_dtype=jnp.float32)
    assert out32.shape == (B, 1 + keep_num, dim), out32.shape
    assert idx32.shape == (B, keep_num), idx32.shape
    assert jnp.array_equal(idx32, ref_idx32), (idx32, ref_idx32)
    err32 = float(jnp.max(jnp.abs(out32 - ref32)))
    assert jnp.allclose(out32, ref32, atol=1e-4, rtol=1e-4), err32

    # return_pos=True path
    out_p, pos_p, idx_p = selectformer_block_forward(
        x, params, num_heads=num_heads, rate=rate, return_pos=True,
        compute_dtype=jnp.float32)
    jax.block_until_ready(out_p)
    assert pos_p.shape == (B, keep_num, 4), pos_p.shape
    assert jnp.allclose(pos_p, ref_pos32), "positions mismatch"

    # multi-head path (exercises the per-head accumulate-into-projection MHA)
    params_h2 = init_params(jax.random.PRNGKey(1), dim, 1, mlp_ratio)
    out_h2, idx_h2 = selectformer_block_forward(x, params_h2, num_heads=2, rate=rate,
                                                compute_dtype=jnp.float32)
    out_h2 = jax.block_until_ready(out_h2)
    ref_h2, _, ref_idx_h2 = reference_forward(x, params_h2, num_heads=2, rate=rate,
                                              compute_dtype=jnp.float32)
    assert jnp.array_equal(idx_h2, ref_idx_h2)
    err_h2 = float(jnp.max(jnp.abs(out_h2 - ref_h2)))
    assert jnp.allclose(out_h2, ref_h2, atol=1e-4, rtol=1e-4), err_h2

    # --- bf16 perf build: native bf16 MXU operands, f32 accumulation ---
    out_bf, idx_bf = selectformer_block_forward(x, params, num_heads=num_heads,
                                                rate=rate, compute_dtype=jnp.bfloat16)
    out_bf = jax.block_until_ready(out_bf)
    assert out_bf.shape == (B, 1 + keep_num, dim), out_bf.shape
    assert bool(jnp.all(jnp.isfinite(out_bf)))
    ref_bf, _, ref_idx_bf = reference_forward(
        x, params, num_heads=num_heads, rate=rate, compute_dtype=jnp.bfloat16)
    # top-k near-ties may legitimately reorder under low-precision rounding, so the
    # value comparison is gated on index agreement (semantics are already pinned by
    # the exact f32 check above).
    if jnp.array_equal(idx_bf, ref_idx_bf):
        err_bf = float(jnp.max(jnp.abs(out_bf - ref_bf)))
        assert jnp.allclose(out_bf, ref_bf, atol=2e-2, rtol=2e-2), err_bf

    print("KERNEL_OK")
</pallas_src>

<mosaic_0001>
module attributes {stable_mosaic.version = 11 : i64} {
  func.func @_vit_stack_kernel(%arg0: i32, %arg1: i32, %arg2: memref<1x17x32xf32, #tpu.memory_space<vmem>>, %arg3: memref<1x1x32xf32, #tpu.memory_space<vmem>>, %arg4: memref<1x1x32xf32, #tpu.memory_space<vmem>>, %arg5: memref<1x32x96xf32, #tpu.memory_space<vmem>>, %arg6: memref<1x1x96xf32, #tpu.memory_space<vmem>>, %arg7: memref<1x32x32xf32, #tpu.memory_space<vmem>>, %arg8: memref<1x1x32xf32, #tpu.memory_space<vmem>>, %arg9: memref<1x1x32xf32, #tpu.memory_space<vmem>>, %arg10: memref<1x1x32xf32, #tpu.memory_space<vmem>>, %arg11: memref<1x32x128xf32, #tpu.memory_space<vmem>>, %arg12: memref<1x1x128xf32, #tpu.memory_space<vmem>>, %arg13: memref<1x128x32xf32, #tpu.memory_space<vmem>>, %arg14: memref<1x1x32xf32, #tpu.memory_space<vmem>>, %arg15: memref<1x17x32xf32, #tpu.memory_space<vmem>>) attributes {dimension_semantics = [#tpu.dimension_semantics<parallel>, #tpu.dimension_semantics<arbitrary>], iteration_bounds = array<i64: 2, 2>, scalar_prefetch = 0 : i64, scratch_operands = 0 : i64, tpu.core_type = #tpu.core_type<tc>, window_params = [{transform_indices = @transform_0, window_bounds = array<i64: 1, 17, 32>}, {transform_indices = @transform_1, window_bounds = array<i64: 1, 1, 32>}, {transform_indices = @transform_2, window_bounds = array<i64: 1, 1, 32>}, {transform_indices = @transform_3, window_bounds = array<i64: 1, 32, 96>}, {transform_indices = @transform_4, window_bounds = array<i64: 1, 1, 96>}, {transform_indices = @transform_5, window_bounds = array<i64: 1, 32, 32>}, {transform_indices = @transform_6, window_bounds = array<i64: 1, 1, 32>}, {transform_indices = @transform_7, window_bounds = array<i64: 1, 1, 32>}, {transform_indices = @transform_8, window_bounds = array<i64: 1, 1, 32>}, {transform_indices = @transform_9, window_bounds = array<i64: 1, 32, 128>}, {transform_indices = @transform_10, window_bounds = array<i64: 1, 1, 128>}, {transform_indices = @transform_11, window_bounds = array<i64: 1, 128, 32>}, {transform_indices = @transform_12, window_bounds = array<i64: 1, 1, 32>}, {transform_indices = @transform_13, window_bounds = array<i64: 1, 17, 32>}]} {
    %c0_i32 = arith.constant 0 : i32
    %0 = arith.cmpi eq, %arg1, %c0_i32 : i32
    %1 = arith.extui %0 : i1 to i32
    %c0_i32_0 = arith.constant 0 : i32
    %2 = arith.cmpi ne, %1, %c0_i32_0 : i32
    scf.if %2 {
      %c0_76 = arith.constant 0 : index
      %c0_77 = arith.constant 0 : index
      %c0_78 = arith.constant 0 : index
      %144 = vector.load %arg2[%c0_76, %c0_77, %c0_78] : memref<1x17x32xf32, #tpu.memory_space<vmem>>, vector<1x17x32xf32>
      %145 = vector.shape_cast %144 : vector<1x17x32xf32> to vector<17x32xf32>
      %c0_79 = arith.constant 0 : index
      %c0_80 = arith.constant 0 : index
      %c0_81 = arith.constant 0 : index
      %146 = vector.load %arg15[%c0_79, %c0_80, %c0_81] : memref<1x17x32xf32, #tpu.memory_space<vmem>>, vector<1x17x32xf32>
      %147 = vector.shape_cast %146 : vector<1x17x32xf32> to vector<17x32xf32>
      %148 = vector.shape_cast %145 : vector<17x32xf32> to vector<1x17x32xf32>
      tpu.vector_store %arg15[%c0_79, %c0_80, %c0_81], %148 {strides = array<i32>} : memref<1x17x32xf32, #tpu.memory_space<vmem>>, vector<1x17x32xf32>,
    } else {
    }
    %c0 = arith.constant 0 : index
    %c0_1 = arith.constant 0 : index
    %c0_2 = arith.constant 0 : index
    %3 = vector.load %arg15[%c0, %c0_1, %c0_2] : memref<1x17x32xf32, #tpu.memory_space<vmem>>, vector<1x17x32xf32>
    %4 = vector.shape_cast %3 : vector<1x17x32xf32> to vector<17x32xf32>
    %c0_3 = arith.constant 0 : index
    %c0_4 = arith.constant 0 : index
    %c0_5 = arith.constant 0 : index
    %5 = vector.load %arg3[%c0_3, %c0_4, %c0_5] : memref<1x1x32xf32, #tpu.memory_space<vmem>>, vector<1x1x32xf32>
    %6 = vector.shape_cast %5 : vector<1x1x32xf32> to vector<1x32xf32>
    %c0_6 = arith.constant 0 : index
    %c0_7 = arith.constant 0 : index
    %c0_8 = arith.constant 0 : index
    %7 = vector.load %arg4[%c0_6, %c0_7, %c0_8] : memref<1x1x32xf32, #tpu.memory_space<vmem>>, vector<1x1x32xf32>
    %8 = vector.shape_cast %7 : vector<1x1x32xf32> to vector<1x32xf32>
    %cst = arith.constant dense<0.000000e+00> : vector<17xf32>
    %9 = vector.multi_reduction <add>, %4, %cst [1] : vector<17x32xf32> to vector<17xf32>
    %10 = vector.shape_cast %9 : vector<17xf32> to vector<17x1xf32>
    %cst_9 = arith.constant 3.200000e+01 : f32
    %11 = vector.broadcast %cst_9 : f32 to vector<17x1xf32>
    %12 = arith.divf %10, %11 : vector<17x1xf32>
    %13 = vector.broadcast %12 : vector<17x1xf32> to vector<17x32xf32>
    %14 = arith.subf %4, %13 : vector<17x32xf32>
    %15 = arith.mulf %14, %14 : vector<17x32xf32>
    %cst_10 = arith.constant dense<0.000000e+00> : vector<17xf32>
    %16 = vector.multi_reduction <add>, %15, %cst_10 [1] : vector<17x32xf32> to vector<17xf32>
    %17 = vector.shape_cast %16 : vector<17xf32> to vector<17x1xf32>
    %cst_11 = arith.constant 3.200000e+01 : f32
    %18 = vector.broadcast %cst_11 : f32 to vector<17x1xf32>
    %19 = arith.divf %17, %18 : vector<17x1xf32>
    %cst_12 = arith.constant 9.99999997E-7 : f32
    %20 = vector.broadcast %cst_12 : f32 to vector<17x1xf32>
    %21 = arith.addf %19, %20 : vector<17x1xf32>
    %22 = math.rsqrt %21 : vector<17x1xf32>
    %23 = vector.broadcast %22 : vector<17x1xf32> to vector<17x32xf32>
    %24 = arith.mulf %14, %23 : vector<17x32xf32>
    %25 = vector.broadcast %6 : vector<1x32xf32> to vector<17x32xf32>
    %26 = arith.mulf %24, %25 : vector<17x32xf32>
    %27 = vector.broadcast %8 : vector<1x32xf32> to vector<17x32xf32>
    %28 = arith.addf %26, %27 : vector<17x32xf32>
    %c0_13 = arith.constant 0 : index
    %c0_14 = arith.constant 0 : index
    %c0_15 = arith.constant 0 : index
    %29 = vector.load %arg5[%c0_13, %c0_14, %c0_15] : memref<1x32x96xf32, #tpu.memory_space<vmem>>, vector<1x32x96xf32>
    %30 = vector.shape_cast %29 : vector<1x32x96xf32> to vector<32x96xf32>
    %c0_16 = arith.constant 0 : index
    %c0_17 = arith.constant 0 : index
    %c0_18 = arith.constant 0 : index
    %31 = vector.load %arg6[%c0_16, %c0_17, %c0_18] : memref<1x1x96xf32, #tpu.memory_space<vmem>>, vector<1x1x96xf32>
    %32 = vector.shape_cast %31 : vector<1x1x96xf32> to vector<1x96xf32>
    %c0_19 = arith.constant 0 : index
    %c0_20 = arith.constant 0 : index
    %c0_21 = arith.constant 0 : index
    %33 = vector.load %arg7[%c0_19, %c0_20, %c0_21] : memref<1x32x32xf32, #tpu.memory_space<vmem>>, vector<1x32x32xf32>
    %34 = vector.shape_cast %33 : vector<1x32x32xf32> to vector<32x32xf32>
    %c0_22 = arith.constant 0 : index
    %c0_23 = arith.constant 0 : index
    %c0_24 = arith.constant 0 : index
    %35 = vector.load %arg8[%c0_22, %c0_23, %c0_24] : memref<1x1x32xf32, #tpu.memory_space<vmem>>, vector<1x1x32xf32>
    %36 = vector.shape_cast %35 : vector<1x1x32xf32> to vector<1x32xf32>
    %cst_25 = arith.constant dense<0.000000e+00> : vector<17x96xf32>
    %37 = tpu.matmul %28, %30, %cst_25 {dimension_numbers = #tpu.dot_dimension_numbers<[1], [0], [0], [1], [0, 0, 1, 1], [], []>, precision = #tpu.contract_precision<fp32>} : vector<17x32xf32>, vector<32x96xf32>, vector<17x96xf32> -> vector<17x96xf32>
    %38 = vector.broadcast %32 : vector<1x96xf32> to vector<17x96xf32>
    %39 = arith.addf %37, %38 : vector<17x96xf32>
    %40 = vector.extract_strided_slice %39 {offsets = [0, 0], sizes = [17, 32], strides = [1, 1]} : vector<17x96xf32> to vector<17x32xf32>
    %41 = vector.extract_strided_slice %39 {offsets = [0, 32], sizes = [17, 32], strides = [1, 1]} : vector<17x96xf32> to vector<17x32xf32>
    %42 = vector.extract_strided_slice %39 {offsets = [0, 64], sizes = [17, 32], strides = [1, 1]} : vector<17x96xf32> to vector<17x32xf32>
    %cst_26 = arith.constant dense<0.000000e+00> : vector<17x17xf32>
    %43 = tpu.matmul %40, %41, %cst_26 {dimension_numbers = #tpu.dot_dimension_numbers<[1], [1], [0], [0], [0, 0, 1, 0], [], []>, precision = #tpu.contract_precision<fp32>} : vector<17x32xf32>, vector<17x32xf32>, vector<17x17xf32> -> vector<17x17xf32>
    %cst_27 = arith.constant 0.176776692 : f32
    %44 = vector.broadcast %cst_27 : f32 to vector<17x17xf32>
    %45 = arith.mulf %43, %44 : vector<17x17xf32>
    %cst_28 = arith.constant dense<0xFF800000> : vector<17xf32>
    %46 = vector.multi_reduction <maximumf>, %45, %cst_28 [1] : vector<17x17xf32> to vector<17xf32>
    %47 = vector.shape_cast %46 : vector<17xf32> to vector<17x1xf32>
    %48 = vector.broadcast %47 : vector<17x1xf32> to vector<17x17xf32>
    %49 = arith.subf %45, %48 : vector<17x17xf32>
    %50 = math.exp %49 : vector<17x17xf32>
    %cst_29 = arith.constant dense<0.000000e+00> : vector<17xf32>
    %51 = vector.multi_reduction <add>, %50, %cst_29 [1] : vector<17x17xf32> to vector<17xf32>
    %52 = vector.shape_cast %51 : vector<17xf32> to vector<17x1xf32>
    %cst_30 = arith.constant 1.000000e+00 : f32
    %53 = vector.broadcast %cst_30 : f32 to vector<17x1xf32>
    %54 = arith.divf %53, %52 : vector<17x1xf32>
    %55 = vector.broadcast %54 : vector<17x1xf32> to vector<17x17xf32>
    %56 = arith.mulf %50, %55 : vector<17x17xf32>
    %cst_31 = arith.constant dense<0.000000e+00> : vector<17x32xf32>
    %57 = tpu.matmul %56, %42, %cst_31 {dimension_numbers = #tpu.dot_dimension_numbers<[1], [0], [0], [1], [0, 0, 1, 1], [], []>, precision = #tpu.contract_precision<fp32>} : vector<17x17xf32>, vector<17x32xf32>, vector<17x32xf32> -> vector<17x32xf32>
    %cst_32 = arith.constant dense<0.000000e+00> : vector<17x32xf32>
    %58 = tpu.matmul %57, %34, %cst_32 {dimension_numbers = #tpu.dot_dimension_numbers<[1], [0], [0], [1], [0, 0, 1, 1], [], []>, precision = #tpu.contract_precision<fp32>} : vector<17x32xf32>, vector<32x32xf32>, vector<17x32xf32> -> vector<17x32xf32>
    %59 = vector.broadcast %36 : vector<1x32xf32> to vector<17x32xf32>
    %60 = arith.addf %58, %59 : vector<17x32xf32>
    %61 = arith.addf %4, %60 : vector<17x32xf32>
    %c0_33 = arith.constant 0 : index
    %c0_34 = arith.constant 0 : index
    %c0_35 = arith.constant 0 : index
    %62 = vector.load %arg9[%c0_33, %c0_34, %c0_35] : memref<1x1x32xf32, #tpu.memory_space<vmem>>, vector<1x1x32xf32>
    %63 = vector.shape_cast %62 : vector<1x1x32xf32> to vector<1x32xf32>
    %c0_36 = arith.constant 0 : index
    %c0_37 = arith.constant 0 : index
    %c0_38 = arith.constant 0 : index
    %64 = vector.load %arg10[%c0_36, %c0_37, %c0_38] : memref<1x1x32xf32, #tpu.memory_space<vmem>>, vector<1x1x32xf32>
    %65 = vector.shape_cast %64 : vector<1x1x32xf32> to vector<1x32xf32>
    %cst_39 = arith.constant dense<0.000000e+00> : vector<17xf32>
    %66 = vector.multi_reduction <add>, %61, %cst_39 [1] : vector<17x32xf32> to vector<17xf32>
    %67 = vector.shape_cast %66 : vector<17xf32> to vector<17x1xf32>
    %cst_40 = arith.constant 3.200000e+01 : f32
    %68 = vector.broadcast %cst_40 : f32 to vector<17x1xf32>
    %69 = arith.divf %67, %68 : vector<17x1xf32>
    %70 = vector.broadcast %69 : vector<17x1xf32> to vector<17x32xf32>
    %71 = arith.subf %61, %70 : vector<17x32xf32>
    %72 = arith.mulf %71, %71 : vector<17x32xf32>
    %cst_41 = arith.constant dense<0.000000e+00> : vector<17xf32>
    %73 = vector.multi_reduction <add>, %72, %cst_41 [1] : vector<17x32xf32> to vector<17xf32>
    %74 = vector.shape_cast %73 : vector<17xf32> to vector<17x1xf32>
    %cst_42 = arith.constant 3.200000e+01 : f32
    %75 = vector.broadcast %cst_42 : f32 to vector<17x1xf32>
    %76 = arith.divf %74, %75 : vector<17x1xf32>
    %cst_43 = arith.constant 9.99999997E-7 : f32
    %77 = vector.broadcast %cst_43 : f32 to vector<17x1xf32>
    %78 = arith.addf %76, %77 : vector<17x1xf32>
    %79 = math.rsqrt %78 : vector<17x1xf32>
    %80 = vector.broadcast %79 : vector<17x1xf32> to vector<17x32xf32>
    %81 = arith.mulf %71, %80 : vector<17x32xf32>
    %82 = vector.broadcast %63 : vector<1x32xf32> to vector<17x32xf32>
    %83 = arith.mulf %81, %82 : vector<17x32xf32>
    %84 = vector.broadcast %65 : vector<1x32xf32> to vector<17x32xf32>
    %85 = arith.addf %83, %84 : vector<17x32xf32>
    %c0_44 = arith.constant 0 : index
    %c0_45 = arith.constant 0 : index
    %c0_46 = arith.constant 0 : index
    %86 = vector.load %arg11[%c0_44, %c0_45, %c0_46] : memref<1x32x128xf32, #tpu.memory_space<vmem>>, vector<1x32x128xf32>
    %87 = vector.shape_cast %86 : vector<1x32x128xf32> to vector<32x128xf32>
    %cst_47 = arith.constant dense<0.000000e+00> : vector<17x128xf32>
    %88 = tpu.matmul %85, %87, %cst_47 {dimension_numbers = #tpu.dot_dimension_numbers<[1], [0], [0], [1], [0, 0, 1, 1], [], []>, precision = #tpu.contract_precision<fp32>} : vector<17x32xf32>, vector<32x128xf32>, vector<17x128xf32> -> vector<17x128xf32>
    %c0_48 = arith.constant 0 : index
    %c0_49 = arith.constant 0 : index
    %c0_50 = arith.constant 0 : index
    %89 = vector.load %arg12[%c0_48, %c0_49, %c0_50] : memref<1x1x128xf32, #tpu.memory_space<vmem>>, vector<1x1x128xf32>
    %90 = vector.shape_cast %89 : vector<1x1x128xf32> to vector<1x128xf32>
    %91 = vector.broadcast %90 : vector<1x128xf32> to vector<17x128xf32>
    %92 = arith.addf %88, %91 : vector<17x128xf32>
    %cst_51 = arith.constant 5.000000e-01 : f32
    %93 = vector.broadcast %cst_51 : f32 to vector<17x128xf32>
    %94 = arith.mulf %93, %92 : vector<17x128xf32>
    %cst_52 = arith.constant 0.707106769 : f32
    %95 = vector.broadcast %cst_52 : f32 to vector<17x128xf32>
    %96 = arith.mulf %92, %95 : vector<17x128xf32>
    %97 = math.absf %96 : vector<17x128xf32>
    %cst_53 = arith.constant 0.327591091 : f32
    %98 = vector.broadcast %cst_53 : f32 to vector<17x128xf32>
    %99 = arith.mulf %98, %97 : vector<17x128xf32>
    %cst_54 = arith.constant 1.000000e+00 : f32
    %100 = vector.broadcast %cst_54 : f32 to vector<17x128xf32>
    %101 = arith.addf %100, %99 : vector<17x128xf32>
    %cst_55 = arith.constant 1.000000e+00 : f32
    %102 = vector.broadcast %cst_55 : f32 to vector<17x128xf32>
    %103 = arith.divf %102, %101 : vector<17x128xf32>
    %cst_56 = arith.constant 1.06140542 : f32
    %104 = vector.broadcast %cst_56 : f32 to vector<17x128xf32>
    %105 = arith.mulf %104, %103 : vector<17x128xf32>
    %cst_57 = arith.constant -1.45315206 : f32
    %106 = vector.broadcast %cst_57 : f32 to vector<17x128xf32>
    %107 = arith.addf %105, %106 : vector<17x128xf32>
    %108 = arith.mulf %107, %103 : vector<17x128xf32>
    %cst_58 = arith.constant 1.42141378 : f32
    %109 = vector.broadcast %cst_58 : f32 to vector<17x128xf32>
    %110 = arith.addf %108, %109 : vector<17x128xf32>
    %111 = arith.mulf %110, %103 : vector<17x128xf32>
    %cst_59 = arith.constant -0.284496725 : f32
    %112 = vector.broadcast %cst_59 : f32 to vector<17x128xf32>
    %113 = arith.addf %111, %112 : vector<17x128xf32>
    %114 = arith.mulf %113, %103 : vector<17x128xf32>
    %cst_60 = arith.constant 0.254829586 : f32
    %115 = vector.broadcast %cst_60 : f32 to vector<17x128xf32>
    %116 = arith.addf %114, %115 : vector<17x128xf32>
    %117 = arith.mulf %116, %103 : vector<17x128xf32>
    %cst_61 = arith.constant 0.000000e+00 : f32
    %118 = vector.broadcast %cst_61 : f32 to vector<17x128xf32>
    %119 = arith.subf %118, %97 : vector<17x128xf32>
    %120 = arith.mulf %119, %97 : vector<17x128xf32>
    %121 = math.exp %120 : vector<17x128xf32>
    %122 = arith.mulf %117, %121 : vector<17x128xf32>
    %cst_62 = arith.constant 1.000000e+00 : f32
    %123 = vector.broadcast %cst_62 : f32 to vector<17x128xf32>
    %124 = arith.subf %123, %122 : vector<17x128xf32>
    %cst_63 = arith.constant 0.000000e+00 : f32
    %125 = vector.broadcast %cst_63 : f32 to vector<17x128xf32>
    %126 = arith.cmpf oge, %96, %125 : vector<17x128xf32>
    %cst_64 = arith.constant 0.000000e+00 : f32
    %127 = vector.broadcast %cst_64 : f32 to vector<17x128xf32>
    %128 = arith.subf %127, %124 : vector<17x128xf32>
    %129 = arith.select %126, %124, %128 : vector<17x128xi1>, vector<17x128xf32>
    %cst_65 = arith.constant 1.000000e+00 : f32
    %130 = vector.broadcast %cst_65 : f32 to vector<17x128xf32>
    %131 = arith.addf %130, %129 : vector<17x128xf32>
    %132 = arith.mulf %94, %131 : vector<17x128xf32>
    %c0_66 = arith.constant 0 : index
    %c0_67 = arith.constant 0 : index
    %c0_68 = arith.constant 0 : index
    %133 = vector.load %arg13[%c0_66, %c0_67, %c0_68] : memref<1x128x32xf32, #tpu.memory_space<vmem>>, vector<1x128x32xf32>
    %134 = vector.shape_cast %133 : vector<1x128x32xf32> to vector<128x32xf32>
    %cst_69 = arith.constant dense<0.000000e+00> : vector<17x32xf32>
    %135 = tpu.matmul %132, %134, %cst_69 {dimension_numbers = #tpu.dot_dimension_numbers<[1], [0], [0], [1], [0, 0, 1, 1], [], []>, precision = #tpu.contract_precision<fp32>} : vector<17x128xf32>, vector<128x32xf32>, vector<17x32xf32> -> vector<17x32xf32>
    %c0_70 = arith.constant 0 : index
    %c0_71 = arith.constant 0 : index
    %c0_72 = arith.constant 0 : index
    %136 = vector.load %arg14[%c0_70, %c0_71, %c0_72] : memref<1x1x32xf32, #tpu.memory_space<vmem>>, vector<1x1x32xf32>
    %137 = vector.shape_cast %136 : vector<1x1x32xf32> to vector<1x32xf32>
    %138 = vector.broadcast %137 : vector<1x32xf32> to vector<17x32xf32>
    %139 = arith.addf %135, %138 : vector<17x32xf32>
    %140 = arith.addf %61, %139 : vector<17x32xf32>
    %c0_73 = arith.constant 0 : index
    %c0_74 = arith.constant 0 : index
    %c0_75 = arith.constant 0 : index
    %141 = vector.load %arg15[%c0_73, %c0_74, %c0_75] : memref<1x17x32xf32, #tpu.memory_space<vmem>>, vector<1x17x32xf32>
    %142 = vector.shape_cast %141 : vector<1x17x32xf32> to vector<17x32xf32>
    %143 = vector.shape_cast %140 : vector<17x32xf32> to vector<1x17x32xf32>
    tpu.vector_store %arg15[%c0_73, %c0_74, %c0_75], %143 {strides = array<i32>} : memref<1x17x32xf32, #tpu.memory_space<vmem>>, vector<1x17x32xf32>,
    return
  }
  func.func @transform_0(%arg0: i32, %arg1: i32) -> (i32, i32, i32) {
    %c0_i32 = arith.constant 0 : i32
    %c0_i32_0 = arith.constant 0 : i32
    %c0_i32_1 = arith.constant 0 : i32
    return %arg0, %c0_i32, %c0_i32_0 : i32, i32, i32
  }
  func.func @transform_1(%arg0: i32, %arg1: i32) -> (i32, i32, i32) {
    %c0_i32 = arith.constant 0 : i32
    %c0_i32_0 = arith.constant 0 : i32
    %c0_i32_1 = arith.constant 0 : i32
    return %arg1, %c0_i32, %c0_i32_0 : i32, i32, i32
  }
  func.func @transform_2(%arg0: i32, %arg1: i32) -> (i32, i32, i32) {
    %c0_i32 = arith.constant 0 : i32
    %c0_i32_0 = arith.constant 0 : i32
    %c0_i32_1 = arith.constant 0 : i32
    return %arg1, %c0_i32, %c0_i32_0 : i32, i32, i32
  }
  func.func @transform_3(%arg0: i32, %arg1: i32) -> (i32, i32, i32) {
    %c0_i32 = arith.constant 0 : i32
    %c0_i32_0 = arith.constant 0 : i32
    %c0_i32_1 = arith.constant 0 : i32
    return %arg1, %c0_i32, %c0_i32_0 : i32, i32, i32
  }
  func.func @transform_4(%arg0: i32, %arg1: i32) -> (i32, i32, i32) {
    %c0_i32 = arith.constant 0 : i32
    %c0_i32_0 = arith.constant 0 : i32
    %c0_i32_1 = arith.constant 0 : i32
    return %arg1, %c0_i32, %c0_i32_0 : i32, i32, i32
  }
  func.func @transform_5(%arg0: i32, %arg1: i32) -> (i32, i32, i32) {
    %c0_i32 = arith.constant 0 : i32
    %c0_i32_0 = arith.constant 0 : i32
    %c0_i32_1 = arith.constant 0 : i32
    return %arg1, %c0_i32, %c0_i32_0 : i32, i32, i32
  }
  func.func @transform_6(%arg0: i32, %arg1: i32) -> (i32, i32, i32) {
    %c0_i32 = arith.constant 0 : i32
    %c0_i32_0 = arith.constant 0 : i32
    %c0_i32_1 = arith.constant 0 : i32
    return %arg1, %c0_i32, %c0_i32_0 : i32, i32, i32
  }
  func.func @transform_7(%arg0: i32, %arg1: i32) -> (i32, i32, i32) {
    %c0_i32 = arith.constant 0 : i32
    %c0_i32_0 = arith.constant 0 : i32
    %c0_i32_1 = arith.constant 0 : i32
    return %arg1, %c0_i32, %c0_i32_0 : i32, i32, i32
  }
  func.func @transform_8(%arg0: i32, %arg1: i32) -> (i32, i32, i32) {
    %c0_i32 = arith.constant 0 : i32
    %c0_i32_0 = arith.constant 0 : i32
    %c0_i32_1 = arith.constant 0 : i32
    return %arg1, %c0_i32, %c0_i32_0 : i32, i32, i32
  }
  func.func @transform_9(%arg0: i32, %arg1: i32) -> (i32, i32, i32) {
    %c0_i32 = arith.constant 0 : i32
    %c0_i32_0 = arith.constant 0 : i32
    %c0_i32_1 = arith.constant 0 : i32
    return %arg1, %c0_i32, %c0_i32_0 : i32, i32, i32
  }
  func.func @transform_10(%arg0: i32, %arg1: i32) -> (i32, i32, i32) {
    %c0_i32 = arith.constant 0 : i32
    %c0_i32_0 = arith.constant 0 : i32
    %c0_i32_1 = arith.constant 0 : i32
    return %arg1, %c0_i32, %c0_i32_0 : i32, i32, i32
  }
  func.func @transform_11(%arg0: i32, %arg1: i32) -> (i32, i32, i32) {
    %c0_i32 = arith.constant 0 : i32
    %c0_i32_0 = arith.constant 0 : i32
    %c0_i32_1 = arith.constant 0 : i32
    return %arg1, %c0_i32, %c0_i32_0 : i32, i32, i32
  }
  func.func @transform_12(%arg0: i32, %arg1: i32) -> (i32, i32, i32) {
    %c0_i32 = arith.constant 0 : i32
    %c0_i32_0 = arith.constant 0 : i32
    %c0_i32_1 = arith.constant 0 : i32
    return %arg1, %c0_i32, %c0_i32_0 : i32, i32, i32
  }
  func.func @transform_13(%arg0: i32, %arg1: i32) -> (i32, i32, i32) {
    %c0_i32 = arith.constant 0 : i32
    %c0_i32_0 = arith.constant 0 : i32
    %c0_i32_1 = arith.constant 0 : i32
    return %arg0, %c0_i32, %c0_i32_0 : i32, i32, i32
  }
}

</mosaic_0001>

<llo_original>
// kernel: tpu_custom_call.1
$region0: #{tpu_custom_call.1}
  #allocation0 [shape = 'u32[]', space=smem, size = 0x4, offset = 0x4, fixed_abs, tag = 'smem constant byte address 0x4 - core index']
  #allocation1 [shape = 'u32[72,128]{1,0:T(1,128)}', space=vmem, size = 0x9000, scoped, tag = 'internal scratch']
  %s0 = inlined_call_operand.vmem [shape: f32[2,17,32], index: 0, kind: input, shape index: {}]
  %s1 = inlined_call_operand.vmem [shape: f32[2,1,32], index: 1, kind: input, shape index: {}]
  %s2 = inlined_call_operand.vmem [shape: f32[2,1,32], index: 2, kind: input, shape index: {}]
  %s3 = inlined_call_operand.vmem [shape: f32[2,32,96], index: 3, kind: input, shape index: {}]
  %s4 = inlined_call_operand.vmem [shape: f32[2,1,96], index: 4, kind: input, shape index: {}]
  %s5 = inlined_call_operand.vmem [shape: f32[2,32,32], index: 5, kind: input, shape index: {}]
  %s6 = inlined_call_operand.vmem [shape: f32[2,1,32], index: 6, kind: input, shape index: {}]
  %s7 = inlined_call_operand.vmem [shape: f32[2,1,32], index: 7, kind: input, shape index: {}]
  %s8 = inlined_call_operand.vmem [shape: f32[2,1,32], index: 8, kind: input, shape index: {}]
  %s9 = inlined_call_operand.vmem [shape: f32[2,32,128], index: 9, kind: input, shape index: {}]
  %s10 = inlined_call_operand.vmem [shape: f32[2,1,128], index: 10, kind: input, shape index: {}]
  %s11 = inlined_call_operand.vmem [shape: f32[2,128,32], index: 11, kind: input, shape index: {}]
  %s12 = inlined_call_operand.vmem [shape: f32[2,1,32], index: 12, kind: input, shape index: {}]
  %s13 = inlined_call_operand.vmem [shape: f32[2,17,32], index: 13, kind: output, shape index: {}]
  %s14 = sld [smem:[#allocation0]]
  $region89: #{tpu_custom_call.1} parent=0
    _
  %s16 = ssub.s32 1, %s14
  %s17 = scalar_select 0, %s16, %s14
  loop: start=0, step=1, limit=6
  $region2: #{tpu_custom_call.1} parent=0 // loop_pre_header
    _
  $region3: #{tpu_custom_call.1} parent=0 // loop_header
    %s19 = sphi 0, %s23
    %p20 = scmp.ge.s32.totalorder %s19, 6
    %s26 = sphi 0, %s38
    %s27 = sphi 0, %s34
    %s28 = sphi 0, %s26
    %s29 = sphi 0, %s27
    %s30 = sphi 0, %s28
    %s31 = sphi 0, %s29
    %s41 = sphi 0, %s43
    %s44 = sphi 0, %s41
    %s45 = sphi 0, %s44
    %s61 = sphi 0, %s45
    %s67 = sphi 0, %s69
    %s70 = sphi 0, %s67
    %s71 = sphi 0, %s70
    %s87 = sphi 0, %s71
    %s93 = sphi 0, %s95
    %s96 = sphi 0, %s93
    %s97 = sphi 0, %s96
    %s113 = sphi 0, %s97
    %s119 = sphi 0, %s121
    %s122 = sphi 0, %s119
    %s123 = sphi 0, %s122
    %s139 = sphi 0, %s123
    %s145 = sphi 0, %s147
    %s148 = sphi 0, %s145
    %s149 = sphi 0, %s148
    %s165 = sphi 0, %s149
    %s171 = sphi 0, %s173
    %s174 = sphi 0, %s171
    %s175 = sphi 0, %s174
    %s191 = sphi 0, %s175
    %s197 = sphi 0, %s199
    %s200 = sphi 0, %s197
    %s201 = sphi 0, %s200
    %s217 = sphi 0, %s201
    %s223 = sphi 0, %s225
    %s226 = sphi 0, %s223
    %s227 = sphi 0, %s226
    %s243 = sphi 0, %s227
    %s249 = sphi 0, %s251
    %s252 = sphi 0, %s249
    %s253 = sphi 0, %s252
    %s269 = sphi 0, %s253
    %s275 = sphi 0, %s277
    %s278 = sphi 0, %s275
    %s279 = sphi 0, %s278
    %s295 = sphi 0, %s279
    %s301 = sphi 0, %s303
    %s304 = sphi 0, %s301
    %s305 = sphi 0, %s304
    %s321 = sphi 0, %s305
    %s327 = sphi 0, %s329
    %s330 = sphi 0, %s327
    %s331 = sphi 0, %s330
    %s347 = sphi 0, %s331
    %s353 = sphi 0, %s355
    %s356 = sphi 0, %s353
    %s357 = sphi 0, %s356
    %s373 = sphi 0, %s357
    %s379 = sphi 0, %s381
    %s382 = sphi 0, %s379
    %s383 = sphi 0, %s382
    %s399 = sphi 0, %s383
  $region4: #{tpu_custom_call.1} parent=0 // loop_header_branch
    %22 = sbr.rel (%p20) target = $region8
  $region5: #{tpu_custom_call.1} parent=0 // loop_body
    %s24 = ssub.s32 %s19, 1
    %s25 = ssub.s32 %s19, 2
    %s32 = sadd.s32 1, %s27
    %p33 = scmp.ge.s32.totalorder %s32, 2
    %s34 = scalar_select %p33, 0, %s32
    %s35 = sadd.s32 1, %s26
    %s36 = scalar_select %p33, %s35, %s26
    %p37 = scmp.ge.s32.totalorder %s36, 2
    %s38 = scalar_select %p37, 0, %s36
    %s39 = ssub.s32 %s26, %s38
    %p40 = scmp.eq.s32.totalorder %s39, 0
    %s42 = sadd.s32 %s41, 1
    %s43 = scalar_select %p40, %s41, %s42
    %p46 = pneg %p40
    %p47 = scmp.eq.s32.totalorder %s19, 3
    %p48 = por %p46, %p47
    %p49 = scmp.ne.s32.totalorder %s41, %s44
    %p50 = scmp.eq.s32.totalorder %s19, 0
    %p51 = por %p49, %p50
    %p52 = scmp.ne.s32.totalorder %s41, %s44
    %p53 = scmp.eq.s32.totalorder %s24, 3
    %p54 = por %p52, %p53
    %p55 = scmp.ne.s32.totalorder %s44, %s45
    %p56 = scmp.eq.s32.totalorder %s24, 0
    %p57 = por %p55, %p56
    %p58 = scmp.ne.s32.totalorder %s44, %s45
    %p59 = scmp.eq.s32.totalorder %s25, 3
    %p60 = por %p58, %p59
    %p62 = scmp.ne.s32.totalorder %s45, %s61
    %p63 = scmp.eq.s32.totalorder %s25, 0
    %p64 = por %p62, %p63
    %s65 = ssub.s32 %s27, %s34
    %p66 = scmp.eq.s32.totalorder %s65, 0
    %s68 = sadd.s32 %s67, 1
    %s69 = scalar_select %p66, %s67, %s68
    %p72 = pneg %p66
    %p73 = scmp.eq.s32.totalorder %s19, 3
    %p74 = por %p72, %p73
    %p75 = scmp.ne.s32.totalorder %s67, %s70
    %p76 = scmp.eq.s32.totalorder %s19, 0
    %p77 = por %p75, %p76
    %p78 = scmp.ne.s32.totalorder %s67, %s70
    %p79 = scmp.eq.s32.totalorder %s24, 3
    %p80 = por %p78, %p79
    %p81 = scmp.ne.s32.totalorder %s70, %s71
    %p82 = scmp.eq.s32.totalorder %s24, 0
    %p83 = por %p81, %p82
    %p84 = scmp.ne.s32.totalorder %s70, %s71
    %p85 = scmp.eq.s32.totalorder %s25, 3
    %p86 = por %p84, %p85
    %p88 = scmp.ne.s32.totalorder %s71, %s87
    %p89 = scmp.eq.s32.totalorder %s25, 0
    %p90 = por %p88, %p89
    %s91 = ssub.s32 %s27, %s34
    %p92 = scmp.eq.s32.totalorder %s91, 0
    %s94 = sadd.s32 %s93, 1
    %s95 = scalar_select %p92, %s93, %s94
    %p98 = pneg %p92
    %p99 = scmp.eq.s32.totalorder %s19, 3
    %p100 = por %p98, %p99
    %p101 = scmp.ne.s32.totalorder %s93, %s96
    %p102 = scmp.eq.s32.totalorder %s19, 0
    %p103 = por %p101, %p102
    %p104 = scmp.ne.s32.totalorder %s93, %s96
    %p105 = scmp.eq.s32.totalorder %s24, 3
    %p106 = por %p104, %p105
    %p107 = scmp.ne.s32.totalorder %s96, %s97
    %p108 = scmp.eq.s32.totalorder %s24, 0
    %p109 = por %p107, %p108
    %p110 = scmp.ne.s32.totalorder %s96, %s97
    %p111 = scmp.eq.s32.totalorder %s25, 3
    %p112 = por %p110, %p111
    %p114 = scmp.ne.s32.totalorder %s97, %s113
    %p115 = scmp.eq.s32.totalorder %s25, 0
    %p116 = por %p114, %p115
    %s117 = ssub.s32 %s27, %s34
    %p118 = scmp.eq.s32.totalorder %s117, 0
    %s120 = sadd.s32 %s119, 1
    %s121 = scalar_select %p118, %s119, %s120
    %p124 = pneg %p118
    %p125 = scmp.eq.s32.totalorder %s19, 3
    %p126 = por %p124, %p125
    %p127 = scmp.ne.s32.totalorder %s119, %s122
    %p128 = scmp.eq.s32.totalorder %s19, 0
    %p129 = por %p127, %p128
    %p130 = scmp.ne.s32.totalorder %s119, %s122
    %p131 = scmp.eq.s32.totalorder %s24, 3
    %p132 = por %p130, %p131
    %p133 = scmp.ne.s32.totalorder %s122, %s123
    %p134 = scmp.eq.s32.totalorder %s24, 0
    %p135 = por %p133, %p134
    %p136 = scmp.ne.s32.totalorder %s122, %s123
    %p137 = scmp.eq.s32.totalorder %s25, 3
    %p138 = por %p136, %p137
    %p140 = scmp.ne.s32.totalorder %s123, %s139
    %p141 = scmp.eq.s32.totalorder %s25, 0
    %p142 = por %p140, %p141
    %s143 = ssub.s32 %s27, %s34
    %p144 = scmp.eq.s32.totalorder %s143, 0
    %s146 = sadd.s32 %s145, 1
    %s147 = scalar_select %p144, %s145, %s146
    %p150 = pneg %p144
    %p151 = scmp.eq.s32.totalorder %s19, 3
    %p152 = por %p150, %p151
    %p153 = scmp.ne.s32.totalorder %s145, %s148
    %p154 = scmp.eq.s32.totalorder %s19, 0
    %p155 = por %p153, %p154
    %p156 = scmp.ne.s32.totalorder %s145, %s148
    %p157 = scmp.eq.s32.totalorder %s24, 3
    %p158 = por %p156, %p157
    %p159 = scmp.ne.s32.totalorder %s148, %s149
    %p160 = scmp.eq.s32.totalorder %s24, 0
    %p161 = por %p159, %p160
    %p162 = scmp.ne.s32.totalorder %s148, %s149
    %p163 = scmp.eq.s32.totalorder %s25, 3
    %p164 = por %p162, %p163
    %p166 = scmp.ne.s32.totalorder %s149, %s165
    %p167 = scmp.eq.s32.totalorder %s25, 0
    %p168 = por %p166, %p167
    %s169 = ssub.s32 %s27, %s34
    %p170 = scmp.eq.s32.totalorder %s169, 0
    %s172 = sadd.s32 %s171, 1
    %s173 = scalar_select %p170, %s171, %s172
    %p176 = pneg %p170
    %p177 = scmp.eq.s32.totalorder %s19, 3
    %p178 = por %p176, %p177
    %p179 = scmp.ne.s32.totalorder %s171, %s174
    %p180 = scmp.eq.s32.totalorder %s19, 0
    %p181 = por %p179, %p180
    %p182 = scmp.ne.s32.totalorder %s171, %s174
    %p183 = scmp.eq.s32.totalorder %s24, 3
    %p184 = por %p182, %p183
    %p185 = scmp.ne.s32.totalorder %s174, %s175
    %p186 = scmp.eq.s32.totalorder %s24, 0
    %p187 = por %p185, %p186
    %p188 = scmp.ne.s32.totalorder %s174, %s175
    %p189 = scmp.eq.s32.totalorder %s25, 3
    %p190 = por %p188, %p189
    %p192 = scmp.ne.s32.totalorder %s175, %s191
    %p193 = scmp.eq.s32.totalorder %s25, 0
    %p194 = por %p192, %p193
    %s195 = ssub.s32 %s27, %s34
    %p196 = scmp.eq.s32.totalorder %s195, 0
    %s198 = sadd.s32 %s197, 1
    %s199 = scalar_select %p196, %s197, %s198
    %p202 = pneg %p196
    %p203 = scmp.eq.s32.totalorder %s19, 3
    %p204 = por %p202, %p203
    %p205 = scmp.ne.s32.totalorder %s197, %s200
    %p206 = scmp.eq.s32.totalorder %s19, 0
    %p207 = por %p205, %p206
    %p208 = scmp.ne.s32.totalorder %s197, %s200
    %p209 = scmp.eq.s32.totalorder %s24, 3
    %p210 = por %p208, %p209
    %p211 = scmp.ne.s32.totalorder %s200, %s201
    %p212 = scmp.eq.s32.totalorder %s24, 0
    %p213 = por %p211, %p212
    %p214 = scmp.ne.s32.totalorder %s200, %s201
    %p215 = scmp.eq.s32.totalorder %s25, 3
    %p216 = por %p214, %p215
    %p218 = scmp.ne.s32.totalorder %s201, %s217
    %p219 = scmp.eq.s32.totalorder %s25, 0
    %p220 = por %p218, %p219
    %s221 = ssub.s32 %s27, %s34
    %p222 = scmp.eq.s32.totalorder %s221, 0
    %s224 = sadd.s32 %s223, 1
    %s225 = scalar_select %p222, %s223, %s224
    %p228 = pneg %p222
    %p229 = scmp.eq.s32.totalorder %s19, 3
    %p230 = por %p228, %p229
    %p231 = scmp.ne.s32.totalorder %s223, %s226
    %p232 = scmp.eq.s32.totalorder %s19, 0
    %p233 = por %p231, %p232
    %p234 = scmp.ne.s32.totalorder %s223, %s226
    %p235 = scmp.eq.s32.totalorder %s24, 3
    %p236 = por %p234, %p235
    %p237 = scmp.ne.s32.totalorder %s226, %s227
    %p238 = scmp.eq.s32.totalorder %s24, 0
    %p239 = por %p237, %p238
    %p240 = scmp.ne.s32.totalorder %s226, %s227
    %p241 = scmp.eq.s32.totalorder %s25, 3
    %p242 = por %p240, %p241
    %p244 = scmp.ne.s32.totalorder %s227, %s243
    %p245 = scmp.eq.s32.totalorder %s25, 0
    %p246 = por %p244, %p245
    %s247 = ssub.s32 %s27, %s34
    %p248 = scmp.eq.s32.totalorder %s247, 0
    %s250 = sadd.s32 %s249, 1
    %s251 = scalar_select %p248, %s249, %s250
    %p254 = pneg %p248
    %p255 = scmp.eq.s32.totalorder %s19, 3
    %p256 = por %p254, %p255
    %p257 = scmp.ne.s32.totalorder %s249, %s252
    %p258 = scmp.eq.s32.totalorder %s19, 0
    %p259 = por %p257, %p258
    %p260 = scmp.ne.s32.totalorder %s249, %s252
    %p261 = scmp.eq.s32.totalorder %s24, 3
    %p262 = por %p260, %p261
    %p263 = scmp.ne.s32.totalorder %s252, %s253
    %p264 = scmp.eq.s32.totalorder %s24, 0
    %p265 = por %p263, %p264
    %p266 = scmp.ne.s32.totalorder %s252, %s253
    %p267 = scmp.eq.s32.totalorder %s25, 3
    %p268 = por %p266, %p267
    %p270 = scmp.ne.s32.totalorder %s253, %s269
    %p271 = scmp.eq.s32.totalorder %s25, 0
    %p272 = por %p270, %p271
    %s273 = ssub.s32 %s27, %s34
    %p274 = scmp.eq.s32.totalorder %s273, 0
    %s276 = sadd.s32 %s275, 1
    %s277 = scalar_select %p274, %s275, %s276
    %p280 = pneg %p274
    %p281 = scmp.eq.s32.totalorder %s19, 3
    %p282 = por %p280, %p281
    %p283 = scmp.ne.s32.totalorder %s275, %s278
    %p284 = scmp.eq.s32.totalorder %s19, 0
    %p285 = por %p283, %p284
    %p286 = scmp.ne.s32.totalorder %s275, %s278
    %p287 = scmp.eq.s32.totalorder %s24, 3
    %p288 = por %p286, %p287
    %p289 = scmp.ne.s32.totalorder %s278, %s279
    %p290 = scmp.eq.s32.totalorder %s24, 0
    %p291 = por %p289, %p290
    %p292 = scmp.ne.s32.totalorder %s278, %s279
    %p293 = scmp.eq.s32.totalorder %s25, 3
    %p294 = por %p292, %p293
    %p296 = scmp.ne.s32.totalorder %s279, %s295
    %p297 = scmp.eq.s32.totalorder %s25, 0
    %p298 = por %p296, %p297
    %s299 = ssub.s32 %s27, %s34
    %p300 = scmp.eq.s32.totalorder %s299, 0
    %s302 = sadd.s32 %s301, 1
    %s303 = scalar_select %p300, %s301, %s302
    %p306 = pneg %p300
    %p307 = scmp.eq.s32.totalorder %s19, 3
    %p308 = por %p306, %p307
    %p309 = scmp.ne.s32.totalorder %s301, %s304
    %p310 = scmp.eq.s32.totalorder %s19, 0
    %p311 = por %p309, %p310
    %p312 = scmp.ne.s32.totalorder %s301, %s304
    %p313 = scmp.eq.s32.totalorder %s24, 3
    %p314 = por %p312, %p313
    %p315 = scmp.ne.s32.totalorder %s304, %s305
    %p316 = scmp.eq.s32.totalorder %s24, 0
    %p317 = por %p315, %p316
    %p318 = scmp.ne.s32.totalorder %s304, %s305
    %p319 = scmp.eq.s32.totalorder %s25, 3
    %p320 = por %p318, %p319
    %p322 = scmp.ne.s32.totalorder %s305, %s321
    %p323 = scmp.eq.s32.totalorder %s25, 0
    %p324 = por %p322, %p323
    %s325 = ssub.s32 %s27, %s34
    %p326 = scmp.eq.s32.totalorder %s325, 0
    %s328 = sadd.s32 %s327, 1
    %s329 = scalar_select %p326, %s327, %s328
    %p332 = pneg %p326
    %p333 = scmp.eq.s32.totalorder %s19, 3
    %p334 = por %p332, %p333
    %p335 = scmp.ne.s32.totalorder %s327, %s330
    %p336 = scmp.eq.s32.totalorder %s19, 0
    %p337 = por %p335, %p336
    %p338 = scmp.ne.s32.totalorder %s327, %s330
    %p339 = scmp.eq.s32.totalorder %s24, 3
    %p340 = por %p338, %p339
    %p341 = scmp.ne.s32.totalorder %s330, %s331
    %p342 = scmp.eq.s32.totalorder %s24, 0
    %p343 = por %p341, %p342
    %p344 = scmp.ne.s32.totalorder %s330, %s331
    %p345 = scmp.eq.s32.totalorder %s25, 3
    %p346 = por %p344, %p345
    %p348 = scmp.ne.s32.totalorder %s331, %s347
    %p349 = scmp.eq.s32.totalorder %s25, 0
    %p350 = por %p348, %p349
    %s351 = ssub.s32 %s27, %s34
    %p352 = scmp.eq.s32.totalorder %s351, 0
    %s354 = sadd.s32 %s353, 1
    %s355 = scalar_select %p352, %s353, %s354
    %p358 = pneg %p352
    %p359 = scmp.eq.s32.totalorder %s19, 3
    %p360 = por %p358, %p359
    %p361 = scmp.ne.s32.totalorder %s353, %s356
    %p362 = scmp.eq.s32.totalorder %s19, 0
    %p363 = por %p361, %p362
    %p364 = scmp.ne.s32.totalorder %s353, %s356
    %p365 = scmp.eq.s32.totalorder %s24, 3
    %p366 = por %p364, %p365
    %p367 = scmp.ne.s32.totalorder %s356, %s357
    %p368 = scmp.eq.s32.totalorder %s24, 0
    %p369 = por %p367, %p368
    %p370 = scmp.ne.s32.totalorder %s356, %s357
    %p371 = scmp.eq.s32.totalorder %s25, 3
    %p372 = por %p370, %p371
    %p374 = scmp.ne.s32.totalorder %s357, %s373
    %p375 = scmp.eq.s32.totalorder %s25, 0
    %p376 = por %p374, %p375
    %s377 = ssub.s32 %s26, %s38
    %p378 = scmp.eq.s32.totalorder %s377, 0
    %s380 = sadd.s32 %s379, 1
    %s381 = scalar_select %p378, %s379, %s380
    %p384 = pneg %p378
    %p385 = scmp.eq.s32.totalorder %s19, 3
    %p386 = por %p384, %p385
    %p387 = scmp.ne.s32.totalorder %s379, %s382
    %p388 = scmp.eq.s32.totalorder %s19, 0
    %p389 = por %p387, %p388
    %p390 = scmp.ne.s32.totalorder %s379, %s382
    %p391 = scmp.eq.s32.totalorder %s24, 3
    %p392 = por %p390, %p391
    %p393 = scmp.ne.s32.totalorder %s382, %s383
    %p394 = scmp.eq.s32.totalorder %s24, 0
    %p395 = por %p393, %p394
    %p396 = scmp.ne.s32.totalorder %s382, %s383
    %p397 = scmp.eq.s32.totalorder %s25, 3
    %p398 = por %p396, %p397
    %p400 = scmp.ne.s32.totalorder %s383, %s399
    %p401 = scmp.eq.s32.totalorder %s25, 0
    %p402 = por %p400, %p401
    %p403 = scmp.le.s32.totalorder 1, %s19
    %p404 = scmp.lt.s32.totalorder %s19, 5
    %p405 = pnand %p403, %p404
    %p406 = pneg %p405
    // Predicated region
    $region9: #{tpu_custom_call.1} parent=5 // pred_check
      _
    $region10: #{tpu_custom_call.1} parent=5 // pred_check_branch
      %408 = sbr.rel (%p405) target = $region12
    $region11: #{tpu_custom_call.1} parent=5 // pred_region
      %s409 = ssub.s32 %s19, 1
    $region12: #{tpu_custom_call.1} parent=5 // pred_fallthru
      _
    %p410 = scmp.lt.s32.totalorder %s19, 4
    // Predicated region
    $region13: #{tpu_custom_call.1} parent=5 // pred_check
      %p411 = pneg %p410
    $region14: #{tpu_custom_call.1} parent=5 // pred_check_branch
      %413 = sbr.rel (%p411) target = $region16
    $region15: #{tpu_custom_call.1} parent=5 // pred_region
      // Predicated region
      $region17: #{tpu_custom_call.1} parent=15 // pred_check
        %p414 = pneg %p51
      $region18: #{tpu_custom_call.1} parent=15 // pred_check_branch
        %416 = sbr.rel (%p414) target = $region20
      $region19: #{tpu_custom_call.1} parent=15 // pred_region
        %p417 = scmp.lt.s32.totalorder %s26, 1
        %s418 = scalar_select %p417, %s26, 1
        %s419 = smul.addr %s418, 3
        %s420 = smul.addr %s419, 8
        %s421 = scalar_lea.vmem %s0, %s420
      $region20: #{tpu_custom_call.1} parent=15 // pred_fallthru
        _
      // Predicated region
      $region21: #{tpu_custom_call.1} parent=15 // pred_check
        %p422 = pneg %p77
      $region22: #{tpu_custom_call.1} parent=15 // pred_check_branch
        %424 = sbr.rel (%p422) target = $region24
      $region23: #{tpu_custom_call.1} parent=15 // pred_region
        %p425 = scmp.lt.s32.totalorder %s27, 1
        %s426 = scalar_select %p425, %s27, 1
        %s427 = scalar_lea.vmem %s1, %s426
      $region24: #{tpu_custom_call.1} parent=15 // pred_fallthru
        _
      // Predicated region
      $region25: #{tpu_custom_call.1} parent=15 // pred_check
        %p428 = pneg %p103
      $region26: #{tpu_custom_call.1} parent=15 // pred_check_branch
        %430 = sbr.rel (%p428) target = $region28
      $region27: #{tpu_custom_call.1} parent=15 // pred_region
        %p431 = scmp.lt.s32.totalorder %s27, 1
        %s432 = scalar_select %p431, %s27, 1
        %s433 = scalar_lea.vmem %s2, %s432
      $region28: #{tpu_custom_call.1} parent=15 // pred_fallthru
        _
      // Predicated region
      $region29: #{tpu_custom_call.1} parent=15 // pred_check
        %p434 = pneg %p129
      $region30: #{tpu_custom_call.1} parent=15 // pred_check_branch
        %436 = sbr.rel (%p434) target = $region32
      $region31: #{tpu_custom_call.1} parent=15 // pred_region
        %p437 = scmp.lt.s32.totalorder %s27, 1
        %s438 = scalar_select %p437, %s27, 1
        %s439 = smul.addr %s438, 4
        %s440 = smul.addr %s439, 8
        %s441 = scalar_lea.vmem %s3, %s440
      $region32: #{tpu_custom_call.1} parent=15 // pred_fallthru
        _
      // Predicated region
      $region33: #{tpu_custom_call.1} parent=15 // pred_check
        %p442 = pneg %p155
      $region34: #{tpu_custom_call.1} parent=15 // pred_check_branch
        %444 = sbr.rel (%p442) target = $region36
      $region35: #{tpu_custom_call.1} parent=15 // pred_region
        %p445 = scmp.lt.s32.totalorder %s27, 1
        %s446 = scalar_select %p445, %s27, 1
        %s447 = scalar_lea.vmem %s4, %s446
      $region36: #{tpu_custom_call.1} parent=15 // pred_fallthru
        _
      // Predicated region
      $region37: #{tpu_custom_call.1} parent=15 // pred_check
        %p448 = pneg %p181
      $region38: #{tpu_custom_call.1} parent=15 // pred_check_branch
        %450 = sbr.rel (%p448) target = $region40
      $region39: #{tpu_custom_call.1} parent=15 // pred_region
        %p451 = scmp.lt.s32.totalorder %s27, 1
        %s452 = scalar_select %p451, %s27, 1
        %s453 = smul.addr %s452, 4
        %s454 = smul.addr %s453, 8
        %s455 = scalar_lea.vmem %s5, %s454
      $region40: #{tpu_custom_call.1} parent=15 // pred_fallthru
        _
      // Predicated region
      $region41: #{tpu_custom_call.1} parent=15 // pred_check
        %p456 = pneg %p207
      $region42: #{tpu_custom_call.1} parent=15 // pred_check_branch
        %458 = sbr.rel (%p456) target = $region44
      $region43: #{tpu_custom_call.1} parent=15 // pred_region
        %p459 = scmp.lt.s32.totalorder %s27, 1
        %s460 = scalar_select %p459, %s27, 1
        %s461 = scalar_lea.vmem %s6, %s460
      $region44: #{tpu_custom_call.1} parent=15 // pred_fallthru
        _
      // Predicated region
      $region45: #{tpu_custom_call.1} parent=15 // pred_check
        %p462 = pneg %p233
      $region46: #{tpu_custom_call.1} parent=15 // pred_check_branch
        %464 = sbr.rel (%p462) target = $region48
      $region47: #{tpu_custom_call.1} parent=15 // pred_region
        %p465 = scmp.lt.s32.totalorder %s27, 1
        %s466 = scalar_select %p465, %s27, 1
        %s467 = scalar_lea.vmem %s7, %s466
      $region48: #{tpu_custom_call.1} parent=15 // pred_fallthru
        _
      // Predicated region
      $region49: #{tpu_custom_call.1} parent=15 // pred_check
        %p468 = pneg %p259
      $region50: #{tpu_custom_call.1} parent=15 // pred_check_branch
        %470 = sbr.rel (%p468) target = $region52
      $region51: #{tpu_custom_call.1} parent=15 // pred_region
        %p471 = scmp.lt.s32.totalorder %s27, 1
        %s472 = scalar_select %p471, %s27, 1
        %s473 = scalar_lea.vmem %s8, %s472
      $region52: #{tpu_custom_call.1} parent=15 // pred_fallthru
        _
      // Predicated region
      $region53: #{tpu_custom_call.1} parent=15 // pred_check
        %p474 = pneg %p285
      $region54: #{tpu_custom_call.1} parent=15 // pred_check_branch
        %476 = sbr.rel (%p474) target = $region56
      $region55: #{tpu_custom_call.1} parent=15 // pred_region
        %p477 = scmp.lt.s32.totalorder %s27, 1
        %s478 = scalar_select %p477, %s27, 1
        %s479 = smul.addr %s478, 4
        %s480 = smul.addr %s479, 8
        %s481 = scalar_lea.vmem %s9, %s480
      $region56: #{tpu_custom_call.1} parent=15 // pred_fallthru
        _
      // Predicated region
      $region57: #{tpu_custom_call.1} parent=15 // pred_check
        %p482 = pneg %p311
      $region58: #{tpu_custom_call.1} parent=15 // pred_check_branch
        %484 = sbr.rel (%p482) target = $region60
      $region59: #{tpu_custom_call.1} parent=15 // pred_region
        %p485 = scmp.lt.s32.totalorder %s27, 1
        %s486 = scalar_select %p485, %s27, 1
        %s487 = scalar_lea.vmem %s10, %s486
      $region60: #{tpu_custom_call.1} parent=15 // pred_fallthru
        _
      // Predicated region
      $region61: #{tpu_custom_call.1} parent=15 // pred_check
        %p488 = pneg %p337
      $region62: #{tpu_custom_call.1} parent=15 // pred_check_branch
        %490 = sbr.rel (%p488) target = $region64
      $region63: #{tpu_custom_call.1} parent=15 // pred_region
        %p491 = scmp.lt.s32.totalorder %s27, 1
        %s492 = scalar_select %p491, %s27, 1
        %s493 = smul.addr %s492, 16
        %s494 = smul.addr %s493, 8
        %s495 = scalar_lea.vmem %s11, %s494
      $region64: #{tpu_custom_call.1} parent=15 // pred_fallthru
        _
      // Predicated region
      $region65: #{tpu_custom_call.1} parent=15 // pred_check
        %p496 = pneg %p363
      $region66: #{tpu_custom_call.1} parent=15 // pred_check_branch
        %498 = sbr.rel (%p496) target = $region68
      $region67: #{tpu_custom_call.1} parent=15 // pred_region
        %p499 = scmp.lt.s32.totalorder %s27, 1
        %s500 = scalar_select %p499, %s27, 1
        %s501 = scalar_lea.vmem %s12, %s500
      $region68: #{tpu_custom_call.1} parent=15 // pred_fallthru
        _
    $region16: #{tpu_custom_call.1} parent=5 // pred_fallthru
      _
    %p502 = scmp.le.s32.totalorder 1, %s19
    %p503 = scmp.lt.s32.totalorder %s19, 5
    %p504 = pnand %p502, %p503
    %p505 = pneg %p504
    // Predicated region
    $region69: #{tpu_custom_call.1} parent=5 // pred_check
      _
    $region70: #{tpu_custom_call.1} parent=5 // pred_check_branch
      %507 = sbr.rel (%p504) target = $region72
    $region71: #{tpu_custom_call.1} parent=5 // pred_region
      %s508 = ssub.s32 %s19, 1
      %p509 = scmp.lt.s32.totalorder %s28, 1
      %s510 = scalar_select %p509, %s28, 1
      %s511 = smul.addr %s510, 3
      %s512 = smul.addr %s511, 8
      %s513 = scalar_lea.vmem %s0, %s512
      %p514 = pneg %p57
      %p515 = pneg %p54
      %p516 = scmp.lt.s32.totalorder %s29, 1
      %s517 = scalar_select %p516, %s29, 1
      %s518 = scalar_lea.vmem %s1, %s517
      %p519 = pneg %p83
      %p520 = pneg %p80
      %p521 = scmp.lt.s32.totalorder %s29, 1
      %s522 = scalar_select %p521, %s29, 1
      %s523 = scalar_lea.vmem %s2, %s522
      %p524 = pneg %p109
      %p525 = pneg %p106
      %p526 = scmp.lt.s32.totalorder %s29, 1
      %s527 = scalar_select %p526, %s29, 1
      %s528 = smul.addr %s527, 4
      %s529 = smul.addr %s528, 8
      %s530 = scalar_lea.vmem %s3, %s529
      %p531 = pneg %p135
      %p532 = pneg %p132
      %p533 = scmp.lt.s32.totalorder %s29, 1
      %s534 = scalar_select %p533, %s29, 1
      %s535 = scalar_lea.vmem %s4, %s534
      %p536 = pneg %p161
      %p537 = pneg %p158
      %p538 = scmp.lt.s32.totalorder %s29, 1
      %s539 = scalar_select %p538, %s29, 1
      %s540 = smul.addr %s539, 4
      %s541 = smul.addr %s540, 8
      %s542 = scalar_lea.vmem %s5, %s541
      %p543 = pneg %p187
      %p544 = pneg %p184
      %p545 = scmp.lt.s32.totalorder %s29, 1
      %s546 = scalar_select %p545, %s29, 1
      %s547 = scalar_lea.vmem %s6, %s546
      %p548 = pneg %p213
      %p549 = pneg %p210
      %p550 = scmp.lt.s32.totalorder %s29, 1
      %s551 = scalar_select %p550, %s29, 1
      %s552 = scalar_lea.vmem %s7, %s551
      %p553 = pneg %p239
      %p554 = pneg %p236
      %p555 = scmp.lt.s32.totalorder %s29, 1
      %s556 = scalar_select %p555, %s29, 1
      %s557 = scalar_lea.vmem %s8, %s556
      %p558 = pneg %p265
      %p559 = pneg %p262
      %p560 = scmp.lt.s32.totalorder %s29, 1
      %s561 = scalar_select %p560, %s29, 1
      %s562 = smul.addr %s561, 4
      %s563 = smul.addr %s562, 8
      %s564 = scalar_lea.vmem %s9, %s563
      %p565 = pneg %p291
      %p566 = pneg %p288
      %p567 = scmp.lt.s32.totalorder %s29, 1
      %s568 = scalar_select %p567, %s29, 1
      %s569 = scalar_lea.vmem %s10, %s568
      %p570 = pneg %p317
      %p571 = pneg %p314
      %p572 = scmp.lt.s32.totalorder %s29, 1
      %s573 = scalar_select %p572, %s29, 1
      %s574 = smul.addr %s573, 16
      %s575 = smul.addr %s574, 8
      %s576 = scalar_lea.vmem %s11, %s575
      %p577 = pneg %p343
      %p578 = pneg %p340
      %p579 = scmp.lt.s32.totalorder %s29, 1
      %s580 = scalar_select %p579, %s29, 1
      %s581 = scalar_lea.vmem %s12, %s580
      %p582 = pneg %p369
      %p583 = pneg %p366
      %p584 = pneg %p395
      %p585 = pneg %p392
      %p586 = scmp.lt.s32.totalorder %s28, 1
      %s587 = scalar_select %p586, %s28, 1
      %s588 = smul.addr %s587, 3
      %s589 = smul.addr %s588, 8
      %s590 = scalar_lea.vmem %s13, %s589
      %p591 = scmp.lt.s32.totalorder %s28, 1
      %s592 = scalar_select %p591, %s28, 1
      %s593 = smul.addr %s592, 3
      %s594 = smul.addr %s593, 8
      %s595 = scalar_lea.vmem %s0, %s594
      %p596 = scmp.lt.s32.totalorder %s29, 1
      %s597 = scalar_select %p596, %s29, 1
      %s598 = scalar_lea.vmem %s1, %s597
      %p599 = scmp.lt.s32.totalorder %s29, 1
      %s600 = scalar_select %p599, %s29, 1
      %s601 = scalar_lea.vmem %s2, %s600
      %p602 = scmp.lt.s32.totalorder %s29, 1
      %s603 = scalar_select %p602, %s29, 1
      %s604 = smul.addr %s603, 4
      %s605 = smul.addr %s604, 8
      %s606 = scalar_lea.vmem %s3, %s605
      %p607 = scmp.lt.s32.totalorder %s29, 1
      %s608 = scalar_select %p607, %s29, 1
      %s609 = scalar_lea.vmem %s4, %s608
      %p610 = scmp.lt.s32.totalorder %s29, 1
      %s611 = scalar_select %p610, %s29, 1
      %s612 = smul.addr %s611, 4
      %s613 = smul.addr %s612, 8
      %s614 = scalar_lea.vmem %s5, %s613
      %p615 = scmp.lt.s32.totalorder %s29, 1
      %s616 = scalar_select %p615, %s29, 1
      %s617 = scalar_lea.vmem %s6, %s616
      %p618 = scmp.lt.s32.totalorder %s29, 1
      %s619 = scalar_select %p618, %s29, 1
      %s620 = scalar_lea.vmem %s7, %s619
      %p621 = scmp.lt.s32.totalorder %s29, 1
      %s622 = scalar_select %p621, %s29, 1
      %s623 = scalar_lea.vmem %s8, %s622
      %p624 = scmp.lt.s32.totalorder %s29, 1
      %s625 = scalar_select %p624, %s29, 1
      %s626 = smul.addr %s625, 4
      %s627 = smul.addr %s626, 8
      %s628 = scalar_lea.vmem %s9, %s627
      %p629 = scmp.lt.s32.totalorder %s29, 1
      %s630 = scalar_select %p629, %s29, 1
      %s631 = scalar_lea.vmem %s10, %s630
      %p632 = scmp.lt.s32.totalorder %s29, 1
      %s633 = scalar_select %p632, %s29, 1
      %s634 = smul.addr %s633, 16
      %s635 = smul.addr %s634, 8
      %s636 = scalar_lea.vmem %s11, %s635
      %p637 = scmp.lt.s32.totalorder %s29, 1
      %s638 = scalar_select %p637, %s29, 1
      %s639 = scalar_lea.vmem %s12, %s638
      %p640 = scmp.lt.s32.totalorder %s28, 1
      %s641 = scalar_select %p640, %s28, 1
      %s642 = smul.addr %s641, 3
      %s643 = smul.addr %s642, 8
      %s644 = scalar_lea.vmem %s13, %s643
      %p645 = scmp.eq.s32.totalorder %s29, 0
      // Predicated region
      $region73: #{tpu_custom_call.1} parent=71 // pred_check
        %p646 = pneg %p645
      $region74: #{tpu_custom_call.1} parent=71 // pred_check_branch
        %648 = sbr.rel (%p646) target = $region76
      $region75: #{tpu_custom_call.1} parent=71 // pred_region
        %v649 = vld [vmem:[%s595] sm:$0xff]
        %v650 = vld [vmem:[%s595 + $0x8] sm:$0xff]
        %v651 = vld [vmem:[%s595 + $0x10] sm:$0x1]
        %vm652 = vcmask 261120
        %653 = vst.msk [vmem:[%s644] sm:$0xff] %vm652, %v649
        %654 = vst.msk [vmem:[%s644 + $0x8] sm:$0xff] %vm652, %v650
        %vm655 = vcmask 253952
        %656 = vst.msk [vmem:[%s644 + $0x10] sm:$0x1] %vm655, %v651
      $region76: #{tpu_custom_call.1} parent=71 // pred_fallthru
        _
      %v657 = vld [vmem:[%s644] sm:$0xff]
      %v658 = vld [vmem:[%s644 + $0x8] sm:$0xff]
      %v659 = vld [vmem:[%s644 + $0x10] sm:$0x1]
      %v660 = vld [vmem:[%s598] sm:$0x1]
      %v661 = vld [vmem:[%s601] sm:$0x1]
      %vm662 = vcmask 261120
      %v663 = vsel %vm662, %v657, 0.0
      %664 = vadd.xlane.f32.xlu0 %v663
      %v665 = vpop.xlane.xlu0 %664
      %v666 = vsel %vm662, %v658, 0.0
      %667 = vadd.xlane.f32.xlu0 %v666
      %v668 = vpop.xlane.xlu0 %667
      %vm669 = vcmask 253952
      %v670 = vsel %vm669, %v659, 0.0
      %671 = vadd.xlane.f32.xlu0 %v670
      %v672 = vpop.xlane.xlu0 %671
      %v673 = vrcp.pop 32.0
      %v674 = vmul.f32 32.0, %v673
      %v675 = vsub.f32 1.0, %v674
      %v676 = vmul.f32 %v673, %v675
      %v677 = vadd.f32 %v673, %v676
      %vm678 = vweird.f32 %v673
      %v679 = vsel %vm678, %v673, %v677
      %v680 = vmul.f32 %v665, %v679
      %v681 = vmul.f32 %v668, %v679
      %v682 = vmul.f32 %v672, %v679
      %v683 = vsub.f32 %v657, %v680
      %v684 = vsub.f32 %v658, %v681
      %v685 = vsub.f32 %v659, %v682
      %v686 = vmul.f32 %v683, %v683
      %v687 = vmul.f32 %v684, %v684
      %v688 = vmul.f32 %v685, %v685
      %v689 = vsel %vm662, %v686, 0.0
      %690 = vadd.xlane.f32.xlu0 %v689
      %v691 = vpop.xlane.xlu0 %690
      %v692 = vsel %vm662, %v687, 0.0
      %693 = vadd.xlane.f32.xlu0 %v692
      %v694 = vpop.xlane.xlu0 %693
      %v695 = vsel %vm669, %v688, 0.0
      %696 = vadd.xlane.f32.xlu0 %v695
      %v697 = vpop.xlane.xlu0 %696
      %v698 = vmul.f32 %v691, %v679
      %v699 = vmul.f32 %v694, %v679
      %v700 = vmul.f32 %v697, %v679
      %v701 = vadd.f32 %v698, 1e-06
      %v702 = vadd.f32 %v699, 1e-06
      %v703 = vadd.f32 %v700, 1e-06
      %v704 = vrsqrt.pop %v701
      %v705 = vmul.f32 %v704, %v701
      %v706 = vmul.f32 %v705, %v704
      %v707 = vmul.f32 0.5, %v706
      %v708 = vsub.f32 1.5, %v707
      %v709 = vmul.f32 %v704, %v708
      %vm710 = vweird.f32 %v701
      %vm711 = vweird.f32 %v704
      %vm712 = vmor %vm710, %vm711
      %v713 = vsel %vm712, %v704, %v709
      %v714 = vrsqrt.pop %v702
      %v715 = vmul.f32 %v714, %v702
      %v716 = vmul.f32 %v715, %v714
      %v717 = vmul.f32 0.5, %v716
      %v718 = vsub.f32 1.5, %v717
      %v719 = vmul.f32 %v714, %v718
      %vm720 = vweird.f32 %v702
      %vm721 = vweird.f32 %v714
      %vm722 = vmor %vm720, %vm721
      %v723 = vsel %vm722, %v714, %v719
      %v724 = vrsqrt.pop %v703
      %v725 = vmul.f32 %v724, %v703
      %v726 = vmul.f32 %v725, %v724
      %v727 = vmul.f32 0.5, %v726
      %v728 = vsub.f32 1.5, %v727
      %v729 = vmul.f32 %v724, %v728
      %vm730 = vweird.f32 %v703
      %vm731 = vweird.f32 %v724
      %vm732 = vmor %vm730, %vm731
      %v733 = vsel %vm732, %v724, %v729
      %v734 = vmul.f32 %v683, %v713
      %v735 = vmul.f32 %v684, %v723
      %v736 = vmul.f32 %v685, %v733
      %v738 = vperm.slane %v660, 0
      %v740 = vmul.f32 %v734, %v738
      %v741 = vmul.f32 %v735, %v738
      %v742 = vmul.f32 %v736, %v738
      %v744 = vperm.slane %v661, 0
      %v746 = vadd.f32 %v740, %v744
      %v747 = vadd.f32 %v741, %v744
      %v748 = vadd.f32 %v742, %v744
      %v749 = vld [vmem:[%s606] sm:$0xff]
      %v750 = vld [vmem:[%s606 + $0x8] sm:$0xff]
      %v751 = vld [vmem:[%s606 + $0x10] sm:$0xff]
      %v752 = vld [vmem:[%s606 + $0x18] sm:$0xff]
      %v753 = vld [vmem:[%s609] sm:$0x1]
      %v754 = vld [vmem:[%s614] sm:$0xff]
      %v755 = vld [vmem:[%s614 + $0x8] sm:$0xff]
      %v756 = vld [vmem:[%s614 + $0x10] sm:$0xff]
      %v757 = vld [vmem:[%s614 + $0x18] sm:$0xff]
      %v758 = vld [vmem:[%s617] sm:$0x1]
      %v760 = vperm.slane %v753, 0
      %v763 = vsel %vm662, %v746, 0
      %v766 = vsel %vm662, %v747, 0
      %v769 = vsel %vm662, %v748, 0
      %771 = vmatpush.msra.mxu0 0.0
      %772 = vmatpush.msra.mxu0 0.0
      %773 = vmatpush.msra.mxu0 0.0
      %774 = vmatpush.msra.mxu0 0.0
      %775 = vmatpush.msra.mxu0 0.0
      %776 = vmatpush.msra.mxu0 0.0
      %777 = vmatpush.msra.mxu0 0.0
      %778 = vmatpush.msra.mxu0 0.0
      %779 = vmatpush.msra.mxu0 0.0
      %780 = vmatpush.msra.mxu0 0.0
      %781 = vmatpush.msra.mxu0 0.0
      %782 = vmatpush.msra.mxu0 0.0
      %v783 = vand.u32 %v752, 4294901760
      %784 = vmatpush.msra.mxu0 %v783
      %v785 = vand.u32 %v751, 4294901760
      %786 = vmatpush.msra.mxu0 %v785
      %v787 = vand.u32 %v750, 4294901760
      %788 = vmatpush.msra.mxu0 %v787
      %v789 = vand.u32 %v749, 4294901760
      %790 = vmatpush.msra.mxu0 %v789
      %v791 = vand.u32 %v763, 4294901760
      %v792 = vsub.f32 %v763, %v791
      %v793 = vand.u32 %v792, 4294901760
      %v794 = vsub.f32 %v792, %v793
      %v795 = vand.u32 %v794, 4294901760
      %796 = vmatmul.f32.gmra.mxu0 %v795
      %v797 = vpop.f32.mrf.mxu0
      %v798 = vadd.f32 %v760, %v797
      %v799 = vand.u32 %v766, 4294901760
      %v800 = vsub.f32 %v766, %v799
      %v801 = vand.u32 %v800, 4294901760
      %v802 = vsub.f32 %v800, %v801
      %v803 = vand.u32 %v802, 4294901760
      %804 = vmatmul.f32.gmra.mxu0 %v803
      %v805 = vpop.f32.mrf.mxu0
      %v806 = vadd.f32 %v760, %v805
      %v807 = vand.u32 %v769, 4294901760
      %v808 = vsub.f32 %v769, %v807
      %v809 = vand.u32 %v808, 4294901760
      %v810 = vsub.f32 %v808, %v809
      %v811 = vand.u32 %v810, 4294901760
      %812 = vmatmul.f32.gmra.mxu0 %v811
      %v813 = vpop.f32.mrf.mxu0
      %v814 = vadd.f32 %v760, %v813
      %815 = vdwg.mxu0
      %816 = vmatpush.msra.mxu0 0.0
      %817 = vmatpush.msra.mxu0 0.0
      %818 = vmatpush.msra.mxu0 0.0
      %819 = vmatpush.msra.mxu0 0.0
      %820 = vmatpush.msra.mxu0 0.0
      %821 = vmatpush.msra.mxu0 0.0
      %822 = vmatpush.msra.mxu0 0.0
      %823 = vmatpush.msra.mxu0 0.0
      %824 = vmatpush.msra.mxu0 0.0
      %825 = vmatpush.msra.mxu0 0.0
      %826 = vmatpush.msra.mxu0 0.0
      %827 = vmatpush.msra.mxu0 0.0
      %v828 = vand.u32 %v752, 4294901760
      %v829 = vsub.f32 %v752, %v828
      %v830 = vand.u32 %v829, 4294901760
      %v831 = vsub.f32 %v829, %v830
      %v832 = vand.u32 %v831, 4294901760
      %833 = vmatpush.msra.mxu0 %v832
      %v834 = vand.u32 %v751, 4294901760
      %v835 = vsub.f32 %v751, %v834
      %v836 = vand.u32 %v835, 4294901760
      %v837 = vsub.f32 %v835, %v836
      %v838 = vand.u32 %v837, 4294901760
      %839 = vmatpush.msra.mxu0 %v838
      %v840 = vand.u32 %v750, 4294901760
      %v841 = vsub.f32 %v750, %v840
      %v842 = vand.u32 %v841, 4294901760
      %v843 = vsub.f32 %v841, %v842
      %v844 = vand.u32 %v843, 4294901760
      %845 = vmatpush.msra.mxu0 %v844
      %v846 = vand.u32 %v749, 4294901760
      %v847 = vsub.f32 %v749, %v846
      %v848 = vand.u32 %v847, 4294901760
      %v849 = vsub.f32 %v847, %v848
      %v850 = vand.u32 %v849, 4294901760
      %851 = vmatpush.msra.mxu0 %v850
      %v852 = vand.u32 %v763, 4294901760
      %853 = vmatmul.f32.gmra.mxu0 %v852
      %v854 = vpop.f32.mrf.mxu0
      %v855 = vadd.f32 %v798, %v854
      %v856 = vand.u32 %v766, 4294901760
      %857 = vmatmul.f32.gmra.mxu0 %v856
      %v858 = vpop.f32.mrf.mxu0
      %v859 = vadd.f32 %v806, %v858
      %v860 = vand.u32 %v769, 4294901760
      %861 = vmatmul.f32.gmra.mxu0 %v860
      %v862 = vpop.f32.mrf.mxu0
      %v863 = vadd.f32 %v814, %v862
      %864 = vdwg.mxu0
      %865 = vmatpush.msra.mxu0 0.0
      %866 = vmatpush.msra.mxu0 0.0
      %867 = vmatpush.msra.mxu0 0.0
      %868 = vmatpush.msra.mxu0 0.0
      %869 = vmatpush.msra.mxu0 0.0
      %870 = vmatpush.msra.mxu0 0.0
      %871 = vmatpush.msra.mxu0 0.0
      %872 = vmatpush.msra.mxu0 0.0
      %873 = vmatpush.msra.mxu0 0.0
      %874 = vmatpush.msra.mxu0 0.0
      %875 = vmatpush.msra.mxu0 0.0
      %876 = vmatpush.msra.mxu0 0.0
      %v877 = vand.u32 %v752, 4294901760
      %v878 = vsub.f32 %v752, %v877
      %879 = vmatpush.msra.mxu0 %v878
      %v880 = vand.u32 %v751, 4294901760
      %v881 = vsub.f32 %v751, %v880
      %882 = vmatpush.msra.mxu0 %v881
      %v883 = vand.u32 %v750, 4294901760
      %v884 = vsub.f32 %v750, %v883
      %885 = vmatpush.msra.mxu0 %v884
      %v886 = vand.u32 %v749, 4294901760
      %v887 = vsub.f32 %v749, %v886
      %888 = vmatpush.msra.mxu0 %v887
      %v889 = vand.u32 %v763, 4294901760
      %v890 = vsub.f32 %v763, %v889
      %891 = vmatmul.f32.gmra.mxu0 %v890
      %v892 = vpop.f32.mrf.mxu0
      %v893 = vadd.f32 %v855, %v892
      %v894 = vand.u32 %v766, 4294901760
      %v895 = vsub.f32 %v766, %v894
      %896 = vmatmul.f32.gmra.mxu0 %v895
      %v897 = vpop.f32.mrf.mxu0
      %v898 = vadd.f32 %v859, %v897
      %v899 = vand.u32 %v769, 4294901760
      %v900 = vsub.f32 %v769, %v899
      %901 = vmatmul.f32.gmra.mxu0 %v900
      %v902 = vpop.f32.mrf.mxu0
      %v903 = vadd.f32 %v863, %v902
      %904 = vdwg.mxu0
      %905 = vmatpush.msra.mxu0 0.0
      %906 = vmatpush.msra.mxu0 0.0
      %907 = vmatpush.msra.mxu0 0.0
      %908 = vmatpush.msra.mxu0 0.0
      %909 = vmatpush.msra.mxu0 0.0
      %910 = vmatpush.msra.mxu0 0.0
      %911 = vmatpush.msra.mxu0 0.0
      %912 = vmatpush.msra.mxu0 0.0
      %913 = vmatpush.msra.mxu0 0.0
      %914 = vmatpush.msra.mxu0 0.0
      %915 = vmatpush.msra.mxu0 0.0
      %916 = vmatpush.msra.mxu0 0.0
      %v917 = vand.u32 %v752, 4294901760
      %918 = vmatpush.msra.mxu0 %v917
      %v919 = vand.u32 %v751, 4294901760
      %920 = vmatpush.msra.mxu0 %v919
      %v921 = vand.u32 %v750, 4294901760
      %922 = vmatpush.msra.mxu0 %v921
      %v923 = vand.u32 %v749, 4294901760
      %924 = vmatpush.msra.mxu0 %v923
      %v925 = vand.u32 %v763, 4294901760
      %v926 = vsub.f32 %v763, %v925
      %v927 = vand.u32 %v926, 4294901760
      %928 = vmatmul.f32.gmra.mxu0 %v927
      %v929 = vpop.f32.mrf.mxu0
      %v930 = vadd.f32 %v893, %v929
      %v931 = vand.u32 %v766, 4294901760
      %v932 = vsub.f32 %v766, %v931
      %v933 = vand.u32 %v932, 4294901760
      %934 = vmatmul.f32.gmra.mxu0 %v933
      %v935 = vpop.f32.mrf.mxu0
      %v936 = vadd.f32 %v898, %v935
      %v937 = vand.u32 %v769, 4294901760
      %v938 = vsub.f32 %v769, %v937
      %v939 = vand.u32 %v938, 4294901760
      %940 = vmatmul.f32.gmra.mxu0 %v939
      %v941 = vpop.f32.mrf.mxu0
      %v942 = vadd.f32 %v903, %v941
      %943 = vdwg.mxu0
      %944 = vmatpush.msra.mxu0 0.0
      %945 = vmatpush.msra.mxu0 0.0
      %946 = vmatpush.msra.mxu0 0.0
      %947 = vmatpush.msra.mxu0 0.0
      %948 = vmatpush.msra.mxu0 0.0
      %949 = vmatpush.msra.mxu0 0.0
      %950 = vmatpush.msra.mxu0 0.0
      %951 = vmatpush.msra.mxu0 0.0
      %952 = vmatpush.msra.mxu0 0.0
      %953 = vmatpush.msra.mxu0 0.0
      %954 = vmatpush.msra.mxu0 0.0
      %955 = vmatpush.msra.mxu0 0.0
      %v956 = vand.u32 %v752, 4294901760
      %v957 = vsub.f32 %v752, %v956
      %v958 = vand.u32 %v957, 4294901760
      %959 = vmatpush.msra.mxu0 %v958
      %v960 = vand.u32 %v751, 4294901760
      %v961 = vsub.f32 %v751, %v960
      %v962 = vand.u32 %v961, 4294901760
      %963 = vmatpush.msra.mxu0 %v962
      %v964 = vand.u32 %v750, 4294901760
      %v965 = vsub.f32 %v750, %v964
      %v966 = vand.u32 %v965, 4294901760
      %967 = vmatpush.msra.mxu0 %v966
      %v968 = vand.u32 %v749, 4294901760
      %v969 = vsub.f32 %v749, %v968
      %v970 = vand.u32 %v969, 4294901760
      %971 = vmatpush.msra.mxu0 %v970
      %v972 = vand.u32 %v763, 4294901760
      %973 = vmatmul.f32.gmra.mxu0 %v972
      %v974 = vpop.f32.mrf.mxu0
      %v975 = vadd.f32 %v930, %v974
      %v976 = vand.u32 %v766, 4294901760
      %977 = vmatmul.f32.gmra.mxu0 %v976
      %v978 = vpop.f32.mrf.mxu0
      %v979 = vadd.f32 %v936, %v978
      %v980 = vand.u32 %v769, 4294901760
      %981 = vmatmul.f32.gmra.mxu0 %v980
      %v982 = vpop.f32.mrf.mxu0
      %v983 = vadd.f32 %v942, %v982
      %984 = vdwg.mxu0
      %985 = vmatpush.msra.mxu0 0.0
      %986 = vmatpush.msra.mxu0 0.0
      %987 = vmatpush.msra.mxu0 0.0
      %988 = vmatpush.msra.mxu0 0.0
      %989 = vmatpush.msra.mxu0 0.0
      %990 = vmatpush.msra.mxu0 0.0
      %991 = vmatpush.msra.mxu0 0.0
      %992 = vmatpush.msra.mxu0 0.0
      %993 = vmatpush.msra.mxu0 0.0
      %994 = vmatpush.msra.mxu0 0.0
      %995 = vmatpush.msra.mxu0 0.0
      %996 = vmatpush.msra.mxu0 0.0
      %v997 = vand.u32 %v752, 4294901760
      %998 = vmatpush.msra.mxu0 %v997
      %v999 = vand.u32 %v751, 4294901760
      %1000 = vmatpush.msra.mxu0 %v999
      %v1001 = vand.u32 %v750, 4294901760
      %1002 = vmatpush.msra.mxu0 %v1001
      %v1003 = vand.u32 %v749, 4294901760
      %1004 = vmatpush.msra.mxu0 %v1003
      %v1005 = vand.u32 %v763, 4294901760
      %1006 = vmatmul.f32.gmra.mxu0 %v1005
      %v1007 = vpop.f32.mrf.mxu0
      %v1008 = vadd.f32 %v975, %v1007
      %v1009 = vand.u32 %v766, 4294901760
      %1010 = vmatmul.f32.gmra.mxu0 %v1009
      %v1011 = vpop.f32.mrf.mxu0
      %v1012 = vadd.f32 %v979, %v1011
      %v1013 = vand.u32 %v769, 4294901760
      %1014 = vmatmul.f32.gmra.mxu0 %v1013
      %v1015 = vpop.f32.mrf.mxu0
      %v1016 = vadd.f32 %v983, %v1015
      %1017 = vdwg.mxu0
      %1021 = vrot.lane.b32.xlu0 %v1008, 96
      %v1022 = vpop.permute.xlu0 %1021
      %1023 = vrot.lane.b32.xlu0 %v1012, 96
      %v1024 = vpop.permute.xlu0 %1023
      %1025 = vrot.lane.b32.xlu0 %v1016, 96
      %v1026 = vpop.permute.xlu0 %1025
      %v1027 = vsel %vm662, %v1008, 0
      %v1029 = vsel %vm662, %v1012, 0
      %v1031 = vsel %vm662, %v1016, 0
      %v1033 = vsel %vm662, %v1022, 0
      %v1035 = vsel %vm662, %v1024, 0
      %v1037 = vsel %vm662, %v1026, 0
      %1039 = vmatpush.xpose.msra.mxu0 0.0
      %1040 = vmatpush.xpose.msra.mxu0 0.0
      %1041 = vmatpush.xpose.msra.mxu0 0.0
      %1042 = vmatpush.xpose.msra.mxu0 0.0
      %1043 = vmatpush.xpose.msra.mxu0 0.0
      %1044 = vmatpush.xpose.msra.mxu0 0.0
      %1045 = vmatpush.xpose.msra.mxu0 0.0
      %1046 = vmatpush.xpose.msra.mxu0 0.0
      %1047 = vmatpush.xpose.msra.mxu0 0.0
      %1048 = vmatpush.xpose.msra.mxu0 0.0
      %1049 = vmatpush.xpose.msra.mxu0 0.0
      %1050 = vmatpush.xpose.msra.mxu0 0.0
      %1051 = vmatpush.xpose.msra.mxu0 0.0
      %v1052 = vand.u32 %v1037, 4294901760
      %1053 = vmatpush.xpose.msra.mxu0 %v1052
      %v1054 = vand.u32 %v1035, 4294901760
      %1055 = vmatpush.xpose.msra.mxu0 %v1054
      %v1056 = vand.u32 %v1033, 4294901760
      %1057 = vmatpush.xpose.msra.mxu0 %v1056
      %v1058 = vand.u32 %v1027, 4294901760
      %v1059 = vsub.f32 %v1027, %v1058
      %v1060 = vand.u32 %v1059, 4294901760
      %v1061 = vsub.f32 %v1059, %v1060
      %v1062 = vand.u32 %v1061, 4294901760
      %1063 = vmatmul.f32.gmra.mxu0 %v1062
      %v1064 = vpop.f32.mrf.mxu0
      %v1065 = vadd.f32 0.0, %v1064
      %v1066 = vand.u32 %v1029, 4294901760
      %v1067 = vsub.f32 %v1029, %v1066
      %v1068 = vand.u32 %v1067, 4294901760
      %v1069 = vsub.f32 %v1067, %v1068
      %v1070 = vand.u32 %v1069, 4294901760
      %1071 = vmatmul.f32.gmra.mxu0 %v1070
      %v1072 = vpop.f32.mrf.mxu0
      %v1073 = vadd.f32 0.0, %v1072
      %v1074 = vand.u32 %v1031, 4294901760
      %v1075 = vsub.f32 %v1031, %v1074
      %v1076 = vand.u32 %v1075, 4294901760
      %v1077 = vsub.f32 %v1075, %v1076
      %v1078 = vand.u32 %v1077, 4294901760
      %1079 = vmatmul.f32.gmra.mxu0 %v1078
      %v1080 = vpop.f32.mrf.mxu0
      %v1081 = vadd.f32 0.0, %v1080
      %1082 = vdwg.mxu0
      %1083 = vmatpush.xpose.msra.mxu0 0.0
      %1084 = vmatpush.xpose.msra.mxu0 0.0
      %1085 = vmatpush.xpose.msra.mxu0 0.0
      %1086 = vmatpush.xpose.msra.mxu0 0.0
      %1087 = vmatpush.xpose.msra.mxu0 0.0
      %1088 = vmatpush.xpose.msra.mxu0 0.0
      %1089 = vmatpush.xpose.msra.mxu0 0.0
      %1090 = vmatpush.xpose.msra.mxu0 0.0
      %1091 = vmatpush.xpose.msra.mxu0 0.0
      %1092 = vmatpush.xpose.msra.mxu0 0.0
      %1093 = vmatpush.xpose.msra.mxu0 0.0
      %1094 = vmatpush.xpose.msra.mxu0 0.0
      %1095 = vmatpush.xpose.msra.mxu0 0.0
      %v1096 = vand.u32 %v1037, 4294901760
      %v1097 = vsub.f32 %v1037, %v1096
      %v1098 = vand.u32 %v1097, 4294901760
      %v1099 = vsub.f32 %v1097, %v1098
      %v1100 = vand.u32 %v1099, 4294901760
      %1101 = vmatpush.xpose.msra.mxu0 %v1100
      %v1102 = vand.u32 %v1035, 4294901760
      %v1103 = vsub.f32 %v1035, %v1102
      %v1104 = vand.u32 %v1103, 4294901760
      %v1105 = vsub.f32 %v1103, %v1104
      %v1106 = vand.u32 %v1105, 4294901760
      %1107 = vmatpush.xpose.msra.mxu0 %v1106
      %v1108 = vand.u32 %v1033, 4294901760
      %v1109 = vsub.f32 %v1033, %v1108
      %v1110 = vand.u32 %v1109, 4294901760
      %v1111 = vsub.f32 %v1109, %v1110
      %v1112 = vand.u32 %v1111, 4294901760
      %1113 = vmatpush.xpose.msra.mxu0 %v1112
      %v1114 = vand.u32 %v1027, 4294901760
      %1115 = vmatmul.f32.gmra.mxu0 %v1114
      %v1116 = vpop.f32.mrf.mxu0
      %v1117 = vadd.f32 %v1065, %v1116
      %v1118 = vand.u32 %v1029, 4294901760
      %1119 = vmatmul.f32.gmra.mxu0 %v1118
      %v1120 = vpop.f32.mrf.mxu0
      %v1121 = vadd.f32 %v1073, %v1120
      %v1122 = vand.u32 %v1031, 4294901760
      %1123 = vmatmul.f32.gmra.mxu0 %v1122
      %v1124 = vpop.f32.mrf.mxu0
      %v1125 = vadd.f32 %v1081, %v1124
      %1126 = vdwg.mxu0
      %1127 = vmatpush.xpose.msra.mxu0 0.0
      %1128 = vmatpush.xpose.msra.mxu0 0.0
      %1129 = vmatpush.xpose.msra.mxu0 0.0
      %1130 = vmatpush.xpose.msra.mxu0 0.0
      %1131 = vmatpush.xpose.msra.mxu0 0.0
      %1132 = vmatpush.xpose.msra.mxu0 0.0
      %1133 = vmatpush.xpose.msra.mxu0 0.0
      %1134 = vmatpush.xpose.msra.mxu0 0.0
      %1135 = vmatpush.xpose.msra.mxu0 0.0
      %1136 = vmatpush.xpose.msra.mxu0 0.0
      %1137 = vmatpush.xpose.msra.mxu0 0.0
      %1138 = vmatpush.xpose.msra.mxu0 0.0
      %1139 = vmatpush.xpose.msra.mxu0 0.0
      %v1140 = vand.u32 %v1037, 4294901760
      %v1141 = vsub.f32 %v1037, %v1140
      %1142 = vmatpush.xpose.msra.mxu0 %v1141
      %v1143 = vand.u32 %v1035, 4294901760
      %v1144 = vsub.f32 %v1035, %v1143
      %1145 = vmatpush.xpose.msra.mxu0 %v1144
      %v1146 = vand.u32 %v1033, 4294901760
      %v1147 = vsub.f32 %v1033, %v1146
      %1148 = vmatpush.xpose.msra.mxu0 %v1147
      %v1149 = vand.u32 %v1027, 4294901760
      %v1150 = vsub.f32 %v1027, %v1149
      %1151 = vmatmul.f32.gmra.mxu0 %v1150
      %v1152 = vpop.f32.mrf.mxu0
      %v1153 = vadd.f32 %v1117, %v1152
      %v1154 = vand.u32 %v1029, 4294901760
      %v1155 = vsub.f32 %v1029, %v1154
      %1156 = vmatmul.f32.gmra.mxu0 %v1155
      %v1157 = vpop.f32.mrf.mxu0
      %v1158 = vadd.f32 %v1121, %v1157
      %v1159 = vand.u32 %v1031, 4294901760
      %v1160 = vsub.f32 %v1031, %v1159
      %1161 = vmatmul.f32.gmra.mxu0 %v1160
      %v1162 = vpop.f32.mrf.mxu0
      %v1163 = vadd.f32 %v1125, %v1162
      %1164 = vdwg.mxu0
      %1165 = vmatpush.xpose.msra.mxu0 0.0
      %1166 = vmatpush.xpose.msra.mxu0 0.0
      %1167 = vmatpush.xpose.msra.mxu0 0.0
      %1168 = vmatpush.xpose.msra.mxu0 0.0
      %1169 = vmatpush.xpose.msra.mxu0 0.0
      %1170 = vmatpush.xpose.msra.mxu0 0.0
      %1171 = vmatpush.xpose.msra.mxu0 0.0
      %1172 = vmatpush.xpose.msra.mxu0 0.0
      %1173 = vmatpush.xpose.msra.mxu0 0.0
      %1174 = vmatpush.xpose.msra.mxu0 0.0
      %1175 = vmatpush.xpose.msra.mxu0 0.0
      %1176 = vmatpush.xpose.msra.mxu0 0.0
      %1177 = vmatpush.xpose.msra.mxu0 0.0
      %v1178 = vand.u32 %v1037, 4294901760
      %1179 = vmatpush.xpose.msra.mxu0 %v1178
      %v1180 = vand.u32 %v1035, 4294901760
      %1181 = vmatpush.xpose.msra.mxu0 %v1180
      %v1182 = vand.u32 %v1033, 4294901760
      %1183 = vmatpush.xpose.msra.mxu0 %v1182
      %v1184 = vand.u32 %v1027, 4294901760
      %v1185 = vsub.f32 %v1027, %v1184
      %v1186 = vand.u32 %v1185, 4294901760
      %1187 = vmatmul.f32.gmra.mxu0 %v1186
      %v1188 = vpop.f32.mrf.mxu0
      %v1189 = vadd.f32 %v1153, %v1188
      %v1190 = vand.u32 %v1029, 4294901760
      %v1191 = vsub.f32 %v1029, %v1190
      %v1192 = vand.u32 %v1191, 4294901760
      %1193 = vmatmul.f32.gmra.mxu0 %v1192
      %v1194 = vpop.f32.mrf.mxu0
      %v1195 = vadd.f32 %v1158, %v1194
      %v1196 = vand.u32 %v1031, 4294901760
      %v1197 = vsub.f32 %v1031, %v1196
      %v1198 = vand.u32 %v1197, 4294901760
      %1199 = vmatmul.f32.gmra.mxu0 %v1198
      %v1200 = vpop.f32.mrf.mxu0
      %v1201 = vadd.f32 %v1163, %v1200
      %1202 = vdwg.mxu0
      %1203 = vmatpush.xpose.msra.mxu0 0.0
      %1204 = vmatpush.xpose.msra.mxu0 0.0
      %1205 = vmatpush.xpose.msra.mxu0 0.0
      %1206 = vmatpush.xpose.msra.mxu0 0.0
      %1207 = vmatpush.xpose.msra.mxu0 0.0
      %1208 = vmatpush.xpose.msra.mxu0 0.0
      %1209 = vmatpush.xpose.msra.mxu0 0.0
      %1210 = vmatpush.xpose.msra.mxu0 0.0
      %1211 = vmatpush.xpose.msra.mxu0 0.0
      %1212 = vmatpush.xpose.msra.mxu0 0.0
      %1213 = vmatpush.xpose.msra.mxu0 0.0
      %1214 = vmatpush.xpose.msra.mxu0 0.0
      %1215 = vmatpush.xpose.msra.mxu0 0.0
      %v1216 = vand.u32 %v1037, 4294901760
      %v1217 = vsub.f32 %v1037, %v1216
      %v1218 = vand.u32 %v1217, 4294901760
      %1219 = vmatpush.xpose.msra.mxu0 %v1218
      %v1220 = vand.u32 %v1035, 4294901760
      %v1221 = vsub.f32 %v1035, %v1220
      %v1222 = vand.u32 %v1221, 4294901760
      %1223 = vmatpush.xpose.msra.mxu0 %v1222
      %v1224 = vand.u32 %v1033, 4294901760
      %v1225 = vsub.f32 %v1033, %v1224
      %v1226 = vand.u32 %v1225, 4294901760
      %1227 = vmatpush.xpose.msra.mxu0 %v1226
      %v1228 = vand.u32 %v1027, 4294901760
      %1229 = vmatmul.f32.gmra.mxu0 %v1228
      %v1230 = vpop.f32.mrf.mxu0
      %v1231 = vadd.f32 %v1189, %v1230
      %v1232 = vand.u32 %v1029, 4294901760
      %1233 = vmatmul.f32.gmra.mxu0 %v1232
      %v1234 = vpop.f32.mrf.mxu0
      %v1235 = vadd.f32 %v1195, %v1234
      %v1236 = vand.u32 %v1031, 4294901760
      %1237 = vmatmul.f32.gmra.mxu0 %v1236
      %v1238 = vpop.f32.mrf.mxu0
      %v1239 = vadd.f32 %v1201, %v1238
      %1240 = vdwg.mxu0
      %1241 = vmatpush.xpose.msra.mxu0 0.0
      %1242 = vmatpush.xpose.msra.mxu0 0.0
      %1243 = vmatpush.xpose.msra.mxu0 0.0
      %1244 = vmatpush.xpose.msra.mxu0 0.0
      %1245 = vmatpush.xpose.msra.mxu0 0.0
      %1246 = vmatpush.xpose.msra.mxu0 0.0
      %1247 = vmatpush.xpose.msra.mxu0 0.0
      %1248 = vmatpush.xpose.msra.mxu0 0.0
      %1249 = vmatpush.xpose.msra.mxu0 0.0
      %1250 = vmatpush.xpose.msra.mxu0 0.0
      %1251 = vmatpush.xpose.msra.mxu0 0.0
      %1252 = vmatpush.xpose.msra.mxu0 0.0
      %1253 = vmatpush.xpose.msra.mxu0 0.0
      %v1254 = vand.u32 %v1037, 4294901760
      %1255 = vmatpush.xpose.msra.mxu0 %v1254
      %v1256 = vand.u32 %v1035, 4294901760
      %1257 = vmatpush.xpose.msra.mxu0 %v1256
      %v1258 = vand.u32 %v1033, 4294901760
      %1259 = vmatpush.xpose.msra.mxu0 %v1258
      %v1260 = vand.u32 %v1027, 4294901760
      %1261 = vmatmul.f32.gmra.mxu0 %v1260
      %v1262 = vpop.f32.mrf.mxu0
      %v1263 = vadd.f32 %v1231, %v1262
      %v1264 = vand.u32 %v1029, 4294901760
      %1265 = vmatmul.f32.gmra.mxu0 %v1264
      %v1266 = vpop.f32.mrf.mxu0
      %v1267 = vadd.f32 %v1235, %v1266
      %v1268 = vand.u32 %v1031, 4294901760
      %1269 = vmatmul.f32.gmra.mxu0 %v1268
      %v1270 = vpop.f32.mrf.mxu0
      %v1271 = vadd.f32 %v1239, %v1270
      %1272 = vdwg.mxu0
      %v1273 = vmul.f32 %v1263, 0.17677669
      %v1274 = vmul.f32 %v1267, 0.17677669
      %v1275 = vmul.f32 %v1271, 0.17677669
      %vm1276 = vcmask 138240
      %v1277 = vsel %vm1276, %v1273, -inf
      %1278 = vmax.xlane.f32.xlu0 %v1277
      %v1279 = vpop.xlane.xlu0 %1278
      %v1280 = vsel %vm1276, %v1274, -inf
      %1281 = vmax.xlane.f32.xlu0 %v1280
      %v1282 = vpop.xlane.xlu0 %1281
      %vm1283 = vcmask 131072
      %v1284 = vsel %vm1283, %v1275, -inf
      %1285 = vmax.xlane.f32.xlu0 %v1284
      %v1286 = vpop.xlane.xlu0 %1285
      %v1287 = vsub.f32 %v1273, %v1279
      %v1288 = vsub.f32 %v1274, %v1282
      %v1289 = vsub.f32 %v1275, %v1286
      %v1290 = vmul.f32 %v1287, 1.442695
      %v1291 = vpow.pop %v1290
      %v1292 = vmul.f32 %v1288, 1.442695
      %v1293 = vpow.pop %v1292
      %v1294 = vmul.f32 %v1289, 1.442695
      %v1295 = vpow.pop %v1294
      %v1296 = vsel %vm1276, %v1291, 0.0
      %1297 = vadd.xlane.f32.xlu0 %v1296
      %v1298 = vpop.xlane.xlu0 %1297
      %v1299 = vsel %vm1276, %v1293, 0.0
      %1300 = vadd.xlane.f32.xlu0 %v1299
      %v1301 = vpop.xlane.xlu0 %1300
      %v1302 = vsel %vm1283, %v1295, 0.0
      %1303 = vadd.xlane.f32.xlu0 %v1302
      %v1304 = vpop.xlane.xlu0 %1303
      %v1305 = vrcp.pop %v1298
      %v1306 = vmul.f32 %v1298, %v1305
      %v1307 = vsub.f32 1.0, %v1306
      %v1308 = vmul.f32 %v1305, %v1307
      %v1309 = vadd.f32 %v1305, %v1308
      %vm1310 = vweird.f32 %v1298
      %vm1311 = vweird.f32 %v1305
      %vm1312 = vmor %vm1310, %vm1311
      %v1313 = vsel %vm1312, %v1305, %v1309
      %v1314 = vand.u32 2147483647, %v1298
      %vm1315 = vcmp.eq.f32.partialorder %v1314, 8.507059e+37
      %v1316 = vand.u32 %v1298, 2147483648
      %v1317 = vor.u32 1.1754944e-38, %v1316
      %v1318 = vsel %vm1315, %v1317, %v1313
      %v1319 = vmul.f32 1.0, %v1318
      %v1320 = vrcp.pop %v1301
      %v1321 = vmul.f32 %v1301, %v1320
      %v1322 = vsub.f32 1.0, %v1321
      %v1323 = vmul.f32 %v1320, %v1322
      %v1324 = vadd.f32 %v1320, %v1323
      %vm1325 = vweird.f32 %v1301
      %vm1326 = vweird.f32 %v1320
      %vm1327 = vmor %vm1325, %vm1326
      %v1328 = vsel %vm1327, %v1320, %v1324
      %v1329 = vand.u32 2147483647, %v1301
      %vm1330 = vcmp.eq.f32.partialorder %v1329, 8.507059e+37
      %v1331 = vand.u32 %v1301, 2147483648
      %v1332 = vor.u32 1.1754944e-38, %v1331
      %v1333 = vsel %vm1330, %v1332, %v1328
      %v1334 = vmul.f32 1.0, %v1333
      %v1335 = vrcp.pop %v1304
      %v1336 = vmul.f32 %v1304, %v1335
      %v1337 = vsub.f32 1.0, %v1336
      %v1338 = vmul.f32 %v1335, %v1337
      %v1339 = vadd.f32 %v1335, %v1338
      %vm1340 = vweird.f32 %v1304
      %vm1341 = vweird.f32 %v1335
      %vm1342 = vmor %vm1340, %vm1341
      %v1343 = vsel %vm1342, %v1335, %v1339
      %v1344 = vand.u32 2147483647, %v1304
      %vm1345 = vcmp.eq.f32.partialorder %v1344, 8.507059e+37
      %v1346 = vand.u32 %v1304, 2147483648
      %v1347 = vor.u32 1.1754944e-38, %v1346
      %v1348 = vsel %vm1345, %v1347, %v1343
      %v1349 = vmul.f32 1.0, %v1348
      %v1350 = vmul.f32 %v1291, %v1319
      %v1351 = vmul.f32 %v1293, %v1334
      %v1352 = vmul.f32 %v1295, %v1349
      %1353 = vrot.lane.b32.xlu0 %v1008, 64
      %v1354 = vpop.permute.xlu0 %1353
      %1355 = vrot.lane.b32.xlu0 %v1012, 64
      %v1356 = vpop.permute.xlu0 %1355
      %1357 = vrot.lane.b32.xlu0 %v1016, 64
      %v1358 = vpop.permute.xlu0 %1357
      %v1362 = vsel %vm1276, %v1350, 0
      %v1365 = vsel %vm1276, %v1351, 0
      %v1368 = vsel %vm1276, %v1352, 0
      %vm1370 = vcmask 1040384
      %v1371 = vsel %vm1370, %v1358, 0
      %1373 = vmatpush.msra.mxu0 0.0
      %1374 = vmatpush.msra.mxu0 0.0
      %1375 = vmatpush.msra.mxu0 0.0
      %1376 = vmatpush.msra.mxu0 0.0
      %1377 = vmatpush.msra.mxu0 0.0
      %1378 = vmatpush.msra.mxu0 0.0
      %1379 = vmatpush.msra.mxu0 0.0
      %1380 = vmatpush.msra.mxu0 0.0
      %1381 = vmatpush.msra.mxu0 0.0
      %1382 = vmatpush.msra.mxu0 0.0
      %1383 = vmatpush.msra.mxu0 0.0
      %1384 = vmatpush.msra.mxu0 0.0
      %1385 = vmatpush.msra.mxu0 0.0
      %v1386 = vand.u32 %v1371, 4294901760
      %1387 = vmatpush.msra.mxu0 %v1386
      %v1388 = vand.u32 %v1356, 4294901760
      %1389 = vmatpush.msra.mxu0 %v1388
      %v1390 = vand.u32 %v1354, 4294901760
      %1391 = vmatpush.msra.mxu0 %v1390
      %v1392 = vand.u32 %v1362, 4294901760
      %v1393 = vsub.f32 %v1362, %v1392
      %v1394 = vand.u32 %v1393, 4294901760
      %v1395 = vsub.f32 %v1393, %v1394
      %v1396 = vand.u32 %v1395, 4294901760
      %1397 = vmatmul.f32.gmra.mxu0 %v1396
      %v1398 = vpop.f32.mrf.mxu0
      %v1399 = vadd.f32 0.0, %v1398
      %v1400 = vand.u32 %v1365, 4294901760
      %v1401 = vsub.f32 %v1365, %v1400
      %v1402 = vand.u32 %v1401, 4294901760
      %v1403 = vsub.f32 %v1401, %v1402
      %v1404 = vand.u32 %v1403, 4294901760
      %1405 = vmatmul.f32.gmra.mxu0 %v1404
      %v1406 = vpop.f32.mrf.mxu0
      %v1407 = vadd.f32 0.0, %v1406
      %v1408 = vand.u32 %v1368, 4294901760
      %v1409 = vsub.f32 %v1368, %v1408
      %v1410 = vand.u32 %v1409, 4294901760
      %v1411 = vsub.f32 %v1409, %v1410
      %v1412 = vand.u32 %v1411, 4294901760
      %1413 = vmatmul.f32.gmra.mxu0 %v1412
      %v1414 = vpop.f32.mrf.mxu0
      %v1415 = vadd.f32 0.0, %v1414
      %1416 = vdwg.mxu0
      %1417 = vmatpush.msra.mxu0 0.0
      %1418 = vmatpush.msra.mxu0 0.0
      %1419 = vmatpush.msra.mxu0 0.0
      %1420 = vmatpush.msra.mxu0 0.0
      %1421 = vmatpush.msra.mxu0 0.0
      %1422 = vmatpush.msra.mxu0 0.0
      %1423 = vmatpush.msra.mxu0 0.0
      %1424 = vmatpush.msra.mxu0 0.0
      %1425 = vmatpush.msra.mxu0 0.0
      %1426 = vmatpush.msra.mxu0 0.0
      %1427 = vmatpush.msra.mxu0 0.0
      %1428 = vmatpush.msra.mxu0 0.0
      %1429 = vmatpush.msra.mxu0 0.0
      %v1430 = vand.u32 %v1371, 4294901760
      %v1431 = vsub.f32 %v1371, %v1430
      %v1432 = vand.u32 %v1431, 4294901760
      %v1433 = vsub.f32 %v1431, %v1432
      %v1434 = vand.u32 %v1433, 4294901760
      %1435 = vmatpush.msra.mxu0 %v1434
      %v1436 = vand.u32 %v1356, 4294901760
      %v1437 = vsub.f32 %v1356, %v1436
      %v1438 = vand.u32 %v1437, 4294901760
      %v1439 = vsub.f32 %v1437, %v1438
      %v1440 = vand.u32 %v1439, 4294901760
      %1441 = vmatpush.msra.mxu0 %v1440
      %v1442 = vand.u32 %v1354, 4294901760
      %v1443 = vsub.f32 %v1354, %v1442
      %v1444 = vand.u32 %v1443, 4294901760
      %v1445 = vsub.f32 %v1443, %v1444
      %v1446 = vand.u32 %v1445, 4294901760
      %1447 = vmatpush.msra.mxu0 %v1446
      %v1448 = vand.u32 %v1362, 4294901760
      %1449 = vmatmul.f32.gmra.mxu0 %v1448
      %v1450 = vpop.f32.mrf.mxu0
      %v1451 = vadd.f32 %v1399, %v1450
      %v1452 = vand.u32 %v1365, 4294901760
      %1453 = vmatmul.f32.gmra.mxu0 %v1452
      %v1454 = vpop.f32.mrf.mxu0
      %v1455 = vadd.f32 %v1407, %v1454
      %v1456 = vand.u32 %v1368, 4294901760
      %1457 = vmatmul.f32.gmra.mxu0 %v1456
      %v1458 = vpop.f32.mrf.mxu0
      %v1459 = vadd.f32 %v1415, %v1458
      %1460 = vdwg.mxu0
      %1461 = vmatpush.msra.mxu0 0.0
      %1462 = vmatpush.msra.mxu0 0.0
      %1463 = vmatpush.msra.mxu0 0.0
      %1464 = vmatpush.msra.mxu0 0.0
      %1465 = vmatpush.msra.mxu0 0.0
      %1466 = vmatpush.msra.mxu0 0.0
      %1467 = vmatpush.msra.mxu0 0.0
      %1468 = vmatpush.msra.mxu0 0.0
      %1469 = vmatpush.msra.mxu0 0.0
      %1470 = vmatpush.msra.mxu0 0.0
      %1471 = vmatpush.msra.mxu0 0.0
      %1472 = vmatpush.msra.mxu0 0.0
      %1473 = vmatpush.msra.mxu0 0.0
      %v1474 = vand.u32 %v1371, 4294901760
      %v1475 = vsub.f32 %v1371, %v1474
      %1476 = vmatpush.msra.mxu0 %v1475
      %v1477 = vand.u32 %v1356, 4294901760
      %v1478 = vsub.f32 %v1356, %v1477
      %1479 = vmatpush.msra.mxu0 %v1478
      %v1480 = vand.u32 %v1354, 4294901760
      %v1481 = vsub.f32 %v1354, %v1480
      %1482 = vmatpush.msra.mxu0 %v1481
      %v1483 = vand.u32 %v1362, 4294901760
      %v1484 = vsub.f32 %v1362, %v1483
      %1485 = vmatmul.f32.gmra.mxu0 %v1484
      %v1486 = vpop.f32.mrf.mxu0
      %v1487 = vadd.f32 %v1451, %v1486
      %v1488 = vand.u32 %v1365, 4294901760
      %v1489 = vsub.f32 %v1365, %v1488
      %1490 = vmatmul.f32.gmra.mxu0 %v1489
      %v1491 = vpop.f32.mrf.mxu0
      %v1492 = vadd.f32 %v1455, %v1491
      %v1493 = vand.u32 %v1368, 4294901760
      %v1494 = vsub.f32 %v1368, %v1493
      %1495 = vmatmul.f32.gmra.mxu0 %v1494
      %v1496 = vpop.f32.mrf.mxu0
      %v1497 = vadd.f32 %v1459, %v1496
      %1498 = vdwg.mxu0
      %1499 = vmatpush.msra.mxu0 0.0
      %1500 = vmatpush.msra.mxu0 0.0
      %1501 = vmatpush.msra.mxu0 0.0
      %1502 = vmatpush.msra.mxu0 0.0
      %1503 = vmatpush.msra.mxu0 0.0
      %1504 = vmatpush.msra.mxu0 0.0
      %1505 = vmatpush.msra.mxu0 0.0
      %1506 = vmatpush.msra.mxu0 0.0
      %1507 = vmatpush.msra.mxu0 0.0
      %1508 = vmatpush.msra.mxu0 0.0
      %1509 = vmatpush.msra.mxu0 0.0
      %1510 = vmatpush.msra.mxu0 0.0
      %1511 = vmatpush.msra.mxu0 0.0
      %v1512 = vand.u32 %v1371, 4294901760
      %1513 = vmatpush.msra.mxu0 %v1512
      %v1514 = vand.u32 %v1356, 4294901760
      %1515 = vmatpush.msra.mxu0 %v1514
      %v1516 = vand.u32 %v1354, 4294901760
      %1517 = vmatpush.msra.mxu0 %v1516
      %v1518 = vand.u32 %v1362, 4294901760
      %v1519 = vsub.f32 %v1362, %v1518
      %v1520 = vand.u32 %v1519, 4294901760
      %1521 = vmatmul.f32.gmra.mxu0 %v1520
      %v1522 = vpop.f32.mrf.mxu0
      %v1523 = vadd.f32 %v1487, %v1522
      %v1524 = vand.u32 %v1365, 4294901760
      %v1525 = vsub.f32 %v1365, %v1524
      %v1526 = vand.u32 %v1525, 4294901760
      %1527 = vmatmul.f32.gmra.mxu0 %v1526
      %v1528 = vpop.f32.mrf.mxu0
      %v1529 = vadd.f32 %v1492, %v1528
      %v1530 = vand.u32 %v1368, 4294901760
      %v1531 = vsub.f32 %v1368, %v1530
      %v1532 = vand.u32 %v1531, 4294901760
      %1533 = vmatmul.f32.gmra.mxu0 %v1532
      %v1534 = vpop.f32.mrf.mxu0
      %v1535 = vadd.f32 %v1497, %v1534
      %1536 = vdwg.mxu0
      %1537 = vmatpush.msra.mxu0 0.0
      %1538 = vmatpush.msra.mxu0 0.0
      %1539 = vmatpush.msra.mxu0 0.0
      %1540 = vmatpush.msra.mxu0 0.0
      %1541 = vmatpush.msra.mxu0 0.0
      %1542 = vmatpush.msra.mxu0 0.0
      %1543 = vmatpush.msra.mxu0 0.0
      %1544 = vmatpush.msra.mxu0 0.0
      %1545 = vmatpush.msra.mxu0 0.0
      %1546 = vmatpush.msra.mxu0 0.0
      %1547 = vmatpush.msra.mxu0 0.0
      %1548 = vmatpush.msra.mxu0 0.0
      %1549 = vmatpush.msra.mxu0 0.0
      %v1550 = vand.u32 %v1371, 4294901760
      %v1551 = vsub.f32 %v1371, %v1550
      %v1552 = vand.u32 %v1551, 4294901760
      %1553 = vmatpush.msra.mxu0 %v1552
      %v1554 = vand.u32 %v1356, 4294901760
      %v1555 = vsub.f32 %v1356, %v1554
      %v1556 = vand.u32 %v1555, 4294901760
      %1557 = vmatpush.msra.mxu0 %v1556
      %v1558 = vand.u32 %v1354, 4294901760
      %v1559 = vsub.f32 %v1354, %v1558
      %v1560 = vand.u32 %v1559, 4294901760
      %1561 = vmatpush.msra.mxu0 %v1560
      %v1562 = vand.u32 %v1362, 4294901760
      %1563 = vmatmul.f32.gmra.mxu0 %v1562
      %v1564 = vpop.f32.mrf.mxu0
      %v1565 = vadd.f32 %v1523, %v1564
      %v1566 = vand.u32 %v1365, 4294901760
      %1567 = vmatmul.f32.gmra.mxu0 %v1566
      %v1568 = vpop.f32.mrf.mxu0
      %v1569 = vadd.f32 %v1529, %v1568
      %v1570 = vand.u32 %v1368, 4294901760
      %1571 = vmatmul.f32.gmra.mxu0 %v1570
      %v1572 = vpop.f32.mrf.mxu0
      %v1573 = vadd.f32 %v1535, %v1572
      %1574 = vdwg.mxu0
      %1575 = vmatpush.msra.mxu0 0.0
      %1576 = vmatpush.msra.mxu0 0.0
      %1577 = vmatpush.msra.mxu0 0.0
      %1578 = vmatpush.msra.mxu0 0.0
      %1579 = vmatpush.msra.mxu0 0.0
      %1580 = vmatpush.msra.mxu0 0.0
      %1581 = vmatpush.msra.mxu0 0.0
      %1582 = vmatpush.msra.mxu0 0.0
      %1583 = vmatpush.msra.mxu0 0.0
      %1584 = vmatpush.msra.mxu0 0.0
      %1585 = vmatpush.msra.mxu0 0.0
      %1586 = vmatpush.msra.mxu0 0.0
      %1587 = vmatpush.msra.mxu0 0.0
      %v1588 = vand.u32 %v1371, 4294901760
      %1589 = vmatpush.msra.mxu0 %v1588
      %v1590 = vand.u32 %v1356, 4294901760
      %1591 = vmatpush.msra.mxu0 %v1590
      %v1592 = vand.u32 %v1354, 4294901760
      %1593 = vmatpush.msra.mxu0 %v1592
      %v1594 = vand.u32 %v1362, 4294901760
      %1595 = vmatmul.f32.gmra.mxu0 %v1594
      %v1596 = vpop.f32.mrf.mxu0
      %v1597 = vadd.f32 %v1565, %v1596
      %v1598 = vand.u32 %v1365, 4294901760
      %1599 = vmatmul.f32.gmra.mxu0 %v1598
      %v1600 = vpop.f32.mrf.mxu0
      %v1601 = vadd.f32 %v1569, %v1600
      %v1602 = vand.u32 %v1368, 4294901760
      %1603 = vmatmul.f32.gmra.mxu0 %v1602
      %v1604 = vpop.f32.mrf.mxu0
      %v1605 = vadd.f32 %v1573, %v1604
      %1606 = vdwg.mxu0
      %v1608 = vperm.slane %v758, 0
      %v1611 = vsel %vm662, %v1597, 0
      %v1614 = vsel %vm662, %v1601, 0
      %v1617 = vsel %vm662, %v1605, 0
      %1619 = vmatpush.msra.mxu0 0.0
      %1620 = vmatpush.msra.mxu0 0.0
      %1621 = vmatpush.msra.mxu0 0.0
      %1622 = vmatpush.msra.mxu0 0.0
      %1623 = vmatpush.msra.mxu0 0.0
      %1624 = vmatpush.msra.mxu0 0.0
      %1625 = vmatpush.msra.mxu0 0.0
      %1626 = vmatpush.msra.mxu0 0.0
      %1627 = vmatpush.msra.mxu0 0.0
      %1628 = vmatpush.msra.mxu0 0.0
      %1629 = vmatpush.msra.mxu0 0.0
      %1630 = vmatpush.msra.mxu0 0.0
      %v1631 = vand.u32 %v757, 4294901760
      %1632 = vmatpush.msra.mxu0 %v1631
      %v1633 = vand.u32 %v756, 4294901760
      %1634 = vmatpush.msra.mxu0 %v1633
      %v1635 = vand.u32 %v755, 4294901760
      %1636 = vmatpush.msra.mxu0 %v1635
      %v1637 = vand.u32 %v754, 4294901760
      %1638 = vmatpush.msra.mxu0 %v1637
      %v1639 = vand.u32 %v1611, 4294901760
      %v1640 = vsub.f32 %v1611, %v1639
      %v1641 = vand.u32 %v1640, 4294901760
      %v1642 = vsub.f32 %v1640, %v1641
      %v1643 = vand.u32 %v1642, 4294901760
      %1644 = vmatmul.f32.gmra.mxu0 %v1643
      %v1645 = vpop.f32.mrf.mxu0
      %v1646 = vadd.f32 %v1608, %v1645
      %v1647 = vand.u32 %v1614, 4294901760
      %v1648 = vsub.f32 %v1614, %v1647
      %v1649 = vand.u32 %v1648, 4294901760
      %v1650 = vsub.f32 %v1648, %v1649
      %v1651 = vand.u32 %v1650, 4294901760
      %1652 = vmatmul.f32.gmra.mxu0 %v1651
      %v1653 = vpop.f32.mrf.mxu0
      %v1654 = vadd.f32 %v1608, %v1653
      %v1655 = vand.u32 %v1617, 4294901760
      %v1656 = vsub.f32 %v1617, %v1655
      %v1657 = vand.u32 %v1656, 4294901760
      %v1658 = vsub.f32 %v1656, %v1657
      %v1659 = vand.u32 %v1658, 4294901760
      %1660 = vmatmul.f32.gmra.mxu0 %v1659
      %v1661 = vpop.f32.mrf.mxu0
      %v1662 = vadd.f32 %v1608, %v1661
      %1663 = vdwg.mxu0
      %1664 = vmatpush.msra.mxu0 0.0
      %1665 = vmatpush.msra.mxu0 0.0
      %1666 = vmatpush.msra.mxu0 0.0
      %1667 = vmatpush.msra.mxu0 0.0
      %1668 = vmatpush.msra.mxu0 0.0
      %1669 = vmatpush.msra.mxu0 0.0
      %1670 = vmatpush.msra.mxu0 0.0
      %1671 = vmatpush.msra.mxu0 0.0
      %1672 = vmatpush.msra.mxu0 0.0
      %1673 = vmatpush.msra.mxu0 0.0
      %1674 = vmatpush.msra.mxu0 0.0
      %1675 = vmatpush.msra.mxu0 0.0
      %v1676 = vand.u32 %v757, 4294901760
      %v1677 = vsub.f32 %v757, %v1676
      %v1678 = vand.u32 %v1677, 4294901760
      %v1679 = vsub.f32 %v1677, %v1678
      %v1680 = vand.u32 %v1679, 4294901760
      %1681 = vmatpush.msra.mxu0 %v1680
      %v1682 = vand.u32 %v756, 4294901760
      %v1683 = vsub.f32 %v756, %v1682
      %v1684 = vand.u32 %v1683, 4294901760
      %v1685 = vsub.f32 %v1683, %v1684
      %v1686 = vand.u32 %v1685, 4294901760
      %1687 = vmatpush.msra.mxu0 %v1686
      %v1688 = vand.u32 %v755, 4294901760
      %v1689 = vsub.f32 %v755, %v1688
      %v1690 = vand.u32 %v1689, 4294901760
      %v1691 = vsub.f32 %v1689, %v1690
      %v1692 = vand.u32 %v1691, 4294901760
      %1693 = vmatpush.msra.mxu0 %v1692
      %v1694 = vand.u32 %v754, 4294901760
      %v1695 = vsub.f32 %v754, %v1694
      %v1696 = vand.u32 %v1695, 4294901760
      %v1697 = vsub.f32 %v1695, %v1696
      %v1698 = vand.u32 %v1697, 4294901760
      %1699 = vmatpush.msra.mxu0 %v1698
      %v1700 = vand.u32 %v1611, 4294901760
      %1701 = vmatmul.f32.gmra.mxu0 %v1700
      %v1702 = vpop.f32.mrf.mxu0
      %v1703 = vadd.f32 %v1646, %v1702
      %v1704 = vand.u32 %v1614, 4294901760
      %1705 = vmatmul.f32.gmra.mxu0 %v1704
      %v1706 = vpop.f32.mrf.mxu0
      %v1707 = vadd.f32 %v1654, %v1706
      %v1708 = vand.u32 %v1617, 4294901760
      %1709 = vmatmul.f32.gmra.mxu0 %v1708
      %v1710 = vpop.f32.mrf.mxu0
      %v1711 = vadd.f32 %v1662, %v1710
      %1712 = vdwg.mxu0
      %1713 = vmatpush.msra.mxu0 0.0
      %1714 = vmatpush.msra.mxu0 0.0
      %1715 = vmatpush.msra.mxu0 0.0
      %1716 = vmatpush.msra.mxu0 0.0
      %1717 = vmatpush.msra.mxu0 0.0
      %1718 = vmatpush.msra.mxu0 0.0
      %1719 = vmatpush.msra.mxu0 0.0
      %1720 = vmatpush.msra.mxu0 0.0
      %1721 = vmatpush.msra.mxu0 0.0
      %1722 = vmatpush.msra.mxu0 0.0
      %1723 = vmatpush.msra.mxu0 0.0
      %1724 = vmatpush.msra.mxu0 0.0
      %v1725 = vand.u32 %v757, 4294901760
      %v1726 = vsub.f32 %v757, %v1725
      %1727 = vmatpush.msra.mxu0 %v1726
      %v1728 = vand.u32 %v756, 4294901760
      %v1729 = vsub.f32 %v756, %v1728
      %1730 = vmatpush.msra.mxu0 %v1729
      %v1731 = vand.u32 %v755, 4294901760
      %v1732 = vsub.f32 %v755, %v1731
      %1733 = vmatpush.msra.mxu0 %v1732
      %v1734 = vand.u32 %v754, 4294901760
      %v1735 = vsub.f32 %v754, %v1734
      %1736 = vmatpush.msra.mxu0 %v1735
      %v1737 = vand.u32 %v1611, 4294901760
      %v1738 = vsub.f32 %v1611, %v1737
      %1739 = vmatmul.f32.gmra.mxu0 %v1738
      %v1740 = vpop.f32.mrf.mxu0
      %v1741 = vadd.f32 %v1703, %v1740
      %v1742 = vand.u32 %v1614, 4294901760
      %v1743 = vsub.f32 %v1614, %v1742
      %1744 = vmatmul.f32.gmra.mxu0 %v1743
      %v1745 = vpop.f32.mrf.mxu0
      %v1746 = vadd.f32 %v1707, %v1745
      %v1747 = vand.u32 %v1617, 4294901760
      %v1748 = vsub.f32 %v1617, %v1747
      %1749 = vmatmul.f32.gmra.mxu0 %v1748
      %v1750 = vpop.f32.mrf.mxu0
      %v1751 = vadd.f32 %v1711, %v1750
      %1752 = vdwg.mxu0
      %1753 = vmatpush.msra.mxu0 0.0
      %1754 = vmatpush.msra.mxu0 0.0
      %1755 = vmatpush.msra.mxu0 0.0
      %1756 = vmatpush.msra.mxu0 0.0
      %1757 = vmatpush.msra.mxu0 0.0
      %1758 = vmatpush.msra.mxu0 0.0
      %1759 = vmatpush.msra.mxu0 0.0
      %1760 = vmatpush.msra.mxu0 0.0
      %1761 = vmatpush.msra.mxu0 0.0
      %1762 = vmatpush.msra.mxu0 0.0
      %1763 = vmatpush.msra.mxu0 0.0
      %1764 = vmatpush.msra.mxu0 0.0
      %v1765 = vand.u32 %v757, 4294901760
      %1766 = vmatpush.msra.mxu0 %v1765
      %v1767 = vand.u32 %v756, 4294901760
      %1768 = vmatpush.msra.mxu0 %v1767
      %v1769 = vand.u32 %v755, 4294901760
      %1770 = vmatpush.msra.mxu0 %v1769
      %v1771 = vand.u32 %v754, 4294901760
      %1772 = vmatpush.msra.mxu0 %v1771
      %v1773 = vand.u32 %v1611, 4294901760
      %v1774 = vsub.f32 %v1611, %v1773
      %v1775 = vand.u32 %v1774, 4294901760
      %1776 = vmatmul.f32.gmra.mxu0 %v1775
      %v1777 = vpop.f32.mrf.mxu0
      %v1778 = vadd.f32 %v1741, %v1777
      %v1779 = vand.u32 %v1614, 4294901760
      %v1780 = vsub.f32 %v1614, %v1779
      %v1781 = vand.u32 %v1780, 4294901760
      %1782 = vmatmul.f32.gmra.mxu0 %v1781
      %v1783 = vpop.f32.mrf.mxu0
      %v1784 = vadd.f32 %v1746, %v1783
      %v1785 = vand.u32 %v1617, 4294901760
      %v1786 = vsub.f32 %v1617, %v1785
      %v1787 = vand.u32 %v1786, 4294901760
      %1788 = vmatmul.f32.gmra.mxu0 %v1787
      %v1789 = vpop.f32.mrf.mxu0
      %v1790 = vadd.f32 %v1751, %v1789
      %1791 = vdwg.mxu0
      %1792 = vmatpush.msra.mxu0 0.0
      %1793 = vmatpush.msra.mxu0 0.0
      %1794 = vmatpush.msra.mxu0 0.0
      %1795 = vmatpush.msra.mxu0 0.0
      %1796 = vmatpush.msra.mxu0 0.0
      %1797 = vmatpush.msra.mxu0 0.0
      %1798 = vmatpush.msra.mxu0 0.0
      %1799 = vmatpush.msra.mxu0 0.0
      %1800 = vmatpush.msra.mxu0 0.0
      %1801 = vmatpush.msra.mxu0 0.0
      %1802 = vmatpush.msra.mxu0 0.0
      %1803 = vmatpush.msra.mxu0 0.0
      %v1804 = vand.u32 %v757, 4294901760
      %v1805 = vsub.f32 %v757, %v1804
      %v1806 = vand.u32 %v1805, 4294901760
      %1807 = vmatpush.msra.mxu0 %v1806
      %v1808 = vand.u32 %v756, 4294901760
      %v1809 = vsub.f32 %v756, %v1808
      %v1810 = vand.u32 %v1809, 4294901760
      %1811 = vmatpush.msra.mxu0 %v1810
      %v1812 = vand.u32 %v755, 4294901760
      %v1813 = vsub.f32 %v755, %v1812
      %v1814 = vand.u32 %v1813, 4294901760
      %1815 = vmatpush.msra.mxu0 %v1814
      %v1816 = vand.u32 %v754, 4294901760
      %v1817 = vsub.f32 %v754, %v1816
      %v1818 = vand.u32 %v1817, 4294901760
      %1819 = vmatpush.msra.mxu0 %v1818
      %v1820 = vand.u32 %v1611, 4294901760
      %1821 = vmatmul.f32.gmra.mxu0 %v1820
      %v1822 = vpop.f32.mrf.mxu0
      %v1823 = vadd.f32 %v1778, %v1822
      %v1824 = vand.u32 %v1614, 4294901760
      %1825 = vmatmul.f32.gmra.mxu0 %v1824
      %v1826 = vpop.f32.mrf.mxu0
      %v1827 = vadd.f32 %v1784, %v1826
      %v1828 = vand.u32 %v1617, 4294901760
      %1829 = vmatmul.f32.gmra.mxu0 %v1828
      %v1830 = vpop.f32.mrf.mxu0
      %v1831 = vadd.f32 %v1790, %v1830
      %1832 = vdwg.mxu0
      %1833 = vmatpush.msra.mxu0 0.0
      %1834 = vmatpush.msra.mxu0 0.0
      %1835 = vmatpush.msra.mxu0 0.0
      %1836 = vmatpush.msra.mxu0 0.0
      %1837 = vmatpush.msra.mxu0 0.0
      %1838 = vmatpush.msra.mxu0 0.0
      %1839 = vmatpush.msra.mxu0 0.0
      %1840 = vmatpush.msra.mxu0 0.0
      %1841 = vmatpush.msra.mxu0 0.0
      %1842 = vmatpush.msra.mxu0 0.0
      %1843 = vmatpush.msra.mxu0 0.0
      %1844 = vmatpush.msra.mxu0 0.0
      %v1845 = vand.u32 %v757, 4294901760
      %1846 = vmatpush.msra.mxu0 %v1845
      %v1847 = vand.u32 %v756, 4294901760
      %1848 = vmatpush.msra.mxu0 %v1847
      %v1849 = vand.u32 %v755, 4294901760
      %1850 = vmatpush.msra.mxu0 %v1849
      %v1851 = vand.u32 %v754, 4294901760
      %1852 = vmatpush.msra.mxu0 %v1851
      %v1853 = vand.u32 %v1611, 4294901760
      %1854 = vmatmul.f32.gmra.mxu0 %v1853
      %v1855 = vpop.f32.mrf.mxu0
      %v1856 = vadd.f32 %v1823, %v1855
      %v1857 = vand.u32 %v1614, 4294901760
      %1858 = vmatmul.f32.gmra.mxu0 %v1857
      %v1859 = vpop.f32.mrf.mxu0
      %v1860 = vadd.f32 %v1827, %v1859
      %v1861 = vand.u32 %v1617, 4294901760
      %1862 = vmatmul.f32.gmra.mxu0 %v1861
      %v1863 = vpop.f32.mrf.mxu0
      %v1864 = vadd.f32 %v1831, %v1863
      %1865 = vdwg.mxu0
      %v1866 = vadd.f32 %v657, %v1856
      %v1867 = vadd.f32 %v658, %v1860
      %v1868 = vadd.f32 %v659, %v1864
      %v1869 = vld [vmem:[%s620] sm:$0x1]
      %v1870 = vld [vmem:[%s623] sm:$0x1]
      %v1871 = vsel %vm662, %v1866, 0.0
      %1872 = vadd.xlane.f32.xlu0 %v1871
      %v1873 = vpop.xlane.xlu0 %1872
      %v1874 = vsel %vm662, %v1867, 0.0
      %1875 = vadd.xlane.f32.xlu0 %v1874
      %v1876 = vpop.xlane.xlu0 %1875
      %v1877 = vsel %vm669, %v1868, 0.0
      %1878 = vadd.xlane.f32.xlu0 %v1877
      %v1879 = vpop.xlane.xlu0 %1878
      %v1880 = vmul.f32 %v1873, %v679
      %v1881 = vmul.f32 %v1876, %v679
      %v1882 = vmul.f32 %v1879, %v679
      %v1883 = vsub.f32 %v1866, %v1880
      %v1884 = vsub.f32 %v1867, %v1881
      %v1885 = vsub.f32 %v1868, %v1882
      %v1886 = vmul.f32 %v1883, %v1883
      %v1887 = vmul.f32 %v1884, %v1884
      %v1888 = vmul.f32 %v1885, %v1885
      %v1889 = vsel %vm662, %v1886, 0.0
      %1890 = vadd.xlane.f32.xlu0 %v1889
      %v1891 = vpop.xlane.xlu0 %1890
      %v1892 = vsel %vm662, %v1887, 0.0
      %1893 = vadd.xlane.f32.xlu0 %v1892
      %v1894 = vpop.xlane.xlu0 %1893
      %v1895 = vsel %vm669, %v1888, 0.0
      %1896 = vadd.xlane.f32.xlu0 %v1895
      %v1897 = vpop.xlane.xlu0 %1896
      %v1898 = vmul.f32 %v1891, %v679
      %v1899 = vmul.f32 %v1894, %v679
      %v1900 = vmul.f32 %v1897, %v679
      %v1901 = vadd.f32 %v1898, 1e-06
      %v1902 = vadd.f32 %v1899, 1e-06
      %v1903 = vadd.f32 %v1900, 1e-06
      %v1904 = vrsqrt.pop %v1901
      %v1905 = vmul.f32 %v1904, %v1901
      %v1906 = vmul.f32 %v1905, %v1904
      %v1907 = vmul.f32 0.5, %v1906
      %v1908 = vsub.f32 1.5, %v1907
      %v1909 = vmul.f32 %v1904, %v1908
      %vm1910 = vweird.f32 %v1901
      %vm1911 = vweird.f32 %v1904
      %vm1912 = vmor %vm1910, %vm1911
      %v1913 = vsel %vm1912, %v1904, %v1909
      %v1914 = vrsqrt.pop %v1902
      %v1915 = vmul.f32 %v1914, %v1902
      %v1916 = vmul.f32 %v1915, %v1914
      %v1917 = vmul.f32 0.5, %v1916
      %v1918 = vsub.f32 1.5, %v1917
      %v1919 = vmul.f32 %v1914, %v1918
      %vm1920 = vweird.f32 %v1902
      %vm1921 = vweird.f32 %v1914
      %vm1922 = vmor %vm1920, %vm1921
      %v1923 = vsel %vm1922, %v1914, %v1919
      %v1924 = vrsqrt.pop %v1903
      %v1925 = vmul.f32 %v1924, %v1903
      %v1926 = vmul.f32 %v1925, %v1924
      %v1927 = vmul.f32 0.5, %v1926
      %v1928 = vsub.f32 1.5, %v1927
      %v1929 = vmul.f32 %v1924, %v1928
      %vm1930 = vweird.f32 %v1903
      %vm1931 = vweird.f32 %v1924
      %vm1932 = vmor %vm1930, %vm1931
      %v1933 = vsel %vm1932, %v1924, %v1929
      %v1934 = vmul.f32 %v1883, %v1913
      %v1935 = vmul.f32 %v1884, %v1923
      %v1936 = vmul.f32 %v1885, %v1933
      %v1938 = vperm.slane %v1869, 0
      %v1940 = vmul.f32 %v1934, %v1938
      %v1941 = vmul.f32 %v1935, %v1938
      %v1942 = vmul.f32 %v1936, %v1938
      %v1944 = vperm.slane %v1870, 0
      %v1946 = vadd.f32 %v1940, %v1944
      %v1947 = vadd.f32 %v1941, %v1944
      %v1948 = vadd.f32 %v1942, %v1944
      %v1949 = vld [vmem:[%s628] sm:$0xff]
      %v1950 = vld [vmem:[%s628 + $0x8] sm:$0xff]
      %v1951 = vld [vmem:[%s628 + $0x10] sm:$0xff]
      %v1952 = vld [vmem:[%s628 + $0x18] sm:$0xff]
      %v1953 = vld [vmem:[%s631] sm:$0x1]
      %v1955 = vperm.slane %v1953, 0
      %v1958 = vsel %vm662, %v1946, 0
      %v1961 = vsel %vm662, %v1947, 0
      %v1964 = vsel %vm662, %v1948, 0
      %1966 = vmatpush.msra.mxu0 0.0
      %1967 = vmatpush.msra.mxu0 0.0
      %1968 = vmatpush.msra.mxu0 0.0
      %1969 = vmatpush.msra.mxu0 0.0
      %1970 = vmatpush.msra.mxu0 0.0
      %1971 = vmatpush.msra.mxu0 0.0
      %1972 = vmatpush.msra.mxu0 0.0
      %1973 = vmatpush.msra.mxu0 0.0
      %1974 = vmatpush.msra.mxu0 0.0
      %1975 = vmatpush.msra.mxu0 0.0
      %1976 = vmatpush.msra.mxu0 0.0
      %1977 = vmatpush.msra.mxu0 0.0
      %v1978 = vand.u32 %v1952, 4294901760
      %1979 = vmatpush.msra.mxu0 %v1978
      %v1980 = vand.u32 %v1951, 4294901760
      %1981 = vmatpush.msra.mxu0 %v1980
      %v1982 = vand.u32 %v1950, 4294901760
      %1983 = vmatpush.msra.mxu0 %v1982
      %v1984 = vand.u32 %v1949, 4294901760
      %1985 = vmatpush.msra.mxu0 %v1984
      %v1986 = vand.u32 %v1958, 4294901760
      %v1987 = vsub.f32 %v1958, %v1986
      %v1988 = vand.u32 %v1987, 4294901760
      %v1989 = vsub.f32 %v1987, %v1988
      %v1990 = vand.u32 %v1989, 4294901760
      %1991 = vmatmul.f32.gmra.mxu0 %v1990
      %v1992 = vpop.f32.mrf.mxu0
      %v1993 = vadd.f32 %v1955, %v1992
      %v1994 = vand.u32 %v1961, 4294901760
      %v1995 = vsub.f32 %v1961, %v1994
      %v1996 = vand.u32 %v1995, 4294901760
      %v1997 = vsub.f32 %v1995, %v1996
      %v1998 = vand.u32 %v1997, 4294901760
      %1999 = vmatmul.f32.gmra.mxu0 %v1998
      %v2000 = vpop.f32.mrf.mxu0
      %v2001 = vadd.f32 %v1955, %v2000
      %v2002 = vand.u32 %v1964, 4294901760
      %v2003 = vsub.f32 %v1964, %v2002
      %v2004 = vand.u32 %v2003, 4294901760
      %v2005 = vsub.f32 %v2003, %v2004
      %v2006 = vand.u32 %v2005, 4294901760
      %2007 = vmatmul.f32.gmra.mxu0 %v2006
      %v2008 = vpop.f32.mrf.mxu0
      %v2009 = vadd.f32 %v1955, %v2008
      %2010 = vdwg.mxu0
      %2011 = vmatpush.msra.mxu0 0.0
      %2012 = vmatpush.msra.mxu0 0.0
      %2013 = vmatpush.msra.mxu0 0.0
      %2014 = vmatpush.msra.mxu0 0.0
      %2015 = vmatpush.msra.mxu0 0.0
      %2016 = vmatpush.msra.mxu0 0.0
      %2017 = vmatpush.msra.mxu0 0.0
      %2018 = vmatpush.msra.mxu0 0.0
      %2019 = vmatpush.msra.mxu0 0.0
      %2020 = vmatpush.msra.mxu0 0.0
      %2021 = vmatpush.msra.mxu0 0.0
      %2022 = vmatpush.msra.mxu0 0.0
      %v2023 = vand.u32 %v1952, 4294901760
      %v2024 = vsub.f32 %v1952, %v2023
      %v2025 = vand.u32 %v2024, 4294901760
      %v2026 = vsub.f32 %v2024, %v2025
      %v2027 = vand.u32 %v2026, 4294901760
      %2028 = vmatpush.msra.mxu0 %v2027
      %v2029 = vand.u32 %v1951, 4294901760
      %v2030 = vsub.f32 %v1951, %v2029
      %v2031 = vand.u32 %v2030, 4294901760
      %v2032 = vsub.f32 %v2030, %v2031
      %v2033 = vand.u32 %v2032, 4294901760
      %2034 = vmatpush.msra.mxu0 %v2033
      %v2035 = vand.u32 %v1950, 4294901760
      %v2036 = vsub.f32 %v1950, %v2035
      %v2037 = vand.u32 %v2036, 4294901760
      %v2038 = vsub.f32 %v2036, %v2037
      %v2039 = vand.u32 %v2038, 4294901760
      %2040 = vmatpush.msra.mxu0 %v2039
      %v2041 = vand.u32 %v1949, 4294901760
      %v2042 = vsub.f32 %v1949, %v2041
      %v2043 = vand.u32 %v2042, 4294901760
      %v2044 = vsub.f32 %v2042, %v2043
      %v2045 = vand.u32 %v2044, 4294901760
      %2046 = vmatpush.msra.mxu0 %v2045
      %v2047 = vand.u32 %v1958, 4294901760
      %2048 = vmatmul.f32.gmra.mxu0 %v2047
      %v2049 = vpop.f32.mrf.mxu0
      %v2050 = vadd.f32 %v1993, %v2049
      %v2051 = vand.u32 %v1961, 4294901760
      %2052 = vmatmul.f32.gmra.mxu0 %v2051
      %v2053 = vpop.f32.mrf.mxu0
      %v2054 = vadd.f32 %v2001, %v2053
      %v2055 = vand.u32 %v1964, 4294901760
      %2056 = vmatmul.f32.gmra.mxu0 %v2055
      %v2057 = vpop.f32.mrf.mxu0
      %v2058 = vadd.f32 %v2009, %v2057
      %2059 = vdwg.mxu0
      %2060 = vmatpush.msra.mxu0 0.0
      %2061 = vmatpush.msra.mxu0 0.0
      %2062 = vmatpush.msra.mxu0 0.0
      %2063 = vmatpush.msra.mxu0 0.0
      %2064 = vmatpush.msra.mxu0 0.0
      %2065 = vmatpush.msra.mxu0 0.0
      %2066 = vmatpush.msra.mxu0 0.0
      %2067 = vmatpush.msra.mxu0 0.0
      %2068 = vmatpush.msra.mxu0 0.0
      %2069 = vmatpush.msra.mxu0 0.0
      %2070 = vmatpush.msra.mxu0 0.0
      %2071 = vmatpush.msra.mxu0 0.0
      %v2072 = vand.u32 %v1952, 4294901760
      %v2073 = vsub.f32 %v1952, %v2072
      %2074 = vmatpush.msra.mxu0 %v2073
      %v2075 = vand.u32 %v1951, 4294901760
      %v2076 = vsub.f32 %v1951, %v2075
      %2077 = vmatpush.msra.mxu0 %v2076
      %v2078 = vand.u32 %v1950, 4294901760
      %v2079 = vsub.f32 %v1950, %v2078
      %2080 = vmatpush.msra.mxu0 %v2079
      %v2081 = vand.u32 %v1949, 4294901760
      %v2082 = vsub.f32 %v1949, %v2081
      %2083 = vmatpush.msra.mxu0 %v2082
      %v2084 = vand.u32 %v1958, 4294901760
      %v2085 = vsub.f32 %v1958, %v2084
      %2086 = vmatmul.f32.gmra.mxu0 %v2085
      %v2087 = vpop.f32.mrf.mxu0
      %v2088 = vadd.f32 %v2050, %v2087
      %v2089 = vand.u32 %v1961, 4294901760
      %v2090 = vsub.f32 %v1961, %v2089
      %2091 = vmatmul.f32.gmra.mxu0 %v2090
      %v2092 = vpop.f32.mrf.mxu0
      %v2093 = vadd.f32 %v2054, %v2092
      %v2094 = vand.u32 %v1964, 4294901760
      %v2095 = vsub.f32 %v1964, %v2094
      %2096 = vmatmul.f32.gmra.mxu0 %v2095
      %v2097 = vpop.f32.mrf.mxu0
      %v2098 = vadd.f32 %v2058, %v2097
      %2099 = vdwg.mxu0
      %2100 = vmatpush.msra.mxu0 0.0
      %2101 = vmatpush.msra.mxu0 0.0
      %2102 = vmatpush.msra.mxu0 0.0
      %2103 = vmatpush.msra.mxu0 0.0
      %2104 = vmatpush.msra.mxu0 0.0
      %2105 = vmatpush.msra.mxu0 0.0
      %2106 = vmatpush.msra.mxu0 0.0
      %2107 = vmatpush.msra.mxu0 0.0
      %2108 = vmatpush.msra.mxu0 0.0
      %2109 = vmatpush.msra.mxu0 0.0
      %2110 = vmatpush.msra.mxu0 0.0
      %2111 = vmatpush.msra.mxu0 0.0
      %v2112 = vand.u32 %v1952, 4294901760
      %2113 = vmatpush.msra.mxu0 %v2112
      %v2114 = vand.u32 %v1951, 4294901760
      %2115 = vmatpush.msra.mxu0 %v2114
      %v2116 = vand.u32 %v1950, 4294901760
      %2117 = vmatpush.msra.mxu0 %v2116
      %v2118 = vand.u32 %v1949, 4294901760
      %2119 = vmatpush.msra.mxu0 %v2118
      %v2120 = vand.u32 %v1958, 4294901760
      %v2121 = vsub.f32 %v1958, %v2120
      %v2122 = vand.u32 %v2121, 4294901760
      %2123 = vmatmul.f32.gmra.mxu0 %v2122
      %v2124 = vpop.f32.mrf.mxu0
      %v2125 = vadd.f32 %v2088, %v2124
      %v2126 = vand.u32 %v1961, 4294901760
      %v2127 = vsub.f32 %v1961, %v2126
      %v2128 = vand.u32 %v2127, 4294901760
      %2129 = vmatmul.f32.gmra.mxu0 %v2128
      %v2130 = vpop.f32.mrf.mxu0
      %v2131 = vadd.f32 %v2093, %v2130
      %v2132 = vand.u32 %v1964, 4294901760
      %v2133 = vsub.f32 %v1964, %v2132
      %v2134 = vand.u32 %v2133, 4294901760
      %2135 = vmatmul.f32.gmra.mxu0 %v2134
      %v2136 = vpop.f32.mrf.mxu0
      %v2137 = vadd.f32 %v2098, %v2136
      %2138 = vdwg.mxu0
      %2139 = vmatpush.msra.mxu0 0.0
      %2140 = vmatpush.msra.mxu0 0.0
      %2141 = vmatpush.msra.mxu0 0.0
      %2142 = vmatpush.msra.mxu0 0.0
      %2143 = vmatpush.msra.mxu0 0.0
      %2144 = vmatpush.msra.mxu0 0.0
      %2145 = vmatpush.msra.mxu0 0.0
      %2146 = vmatpush.msra.mxu0 0.0
      %2147 = vmatpush.msra.mxu0 0.0
      %2148 = vmatpush.msra.mxu0 0.0
      %2149 = vmatpush.msra.mxu0 0.0
      %2150 = vmatpush.msra.mxu0 0.0
      %v2151 = vand.u32 %v1952, 4294901760
      %v2152 = vsub.f32 %v1952, %v2151
      %v2153 = vand.u32 %v2152, 4294901760
      %2154 = vmatpush.msra.mxu0 %v2153
      %v2155 = vand.u32 %v1951, 4294901760
      %v2156 = vsub.f32 %v1951, %v2155
      %v2157 = vand.u32 %v2156, 4294901760
      %2158 = vmatpush.msra.mxu0 %v2157
      %v2159 = vand.u32 %v1950, 4294901760
      %v2160 = vsub.f32 %v1950, %v2159
      %v2161 = vand.u32 %v2160, 4294901760
      %2162 = vmatpush.msra.mxu0 %v2161
      %v2163 = vand.u32 %v1949, 4294901760
      %v2164 = vsub.f32 %v1949, %v2163
      %v2165 = vand.u32 %v2164, 4294901760
      %2166 = vmatpush.msra.mxu0 %v2165
      %v2167 = vand.u32 %v1958, 4294901760
      %2168 = vmatmul.f32.gmra.mxu0 %v2167
      %v2169 = vpop.f32.mrf.mxu0
      %v2170 = vadd.f32 %v2125, %v2169
      %v2171 = vand.u32 %v1961, 4294901760
      %2172 = vmatmul.f32.gmra.mxu0 %v2171
      %v2173 = vpop.f32.mrf.mxu0
      %v2174 = vadd.f32 %v2131, %v2173
      %v2175 = vand.u32 %v1964, 4294901760
      %2176 = vmatmul.f32.gmra.mxu0 %v2175
      %v2177 = vpop.f32.mrf.mxu0
      %v2178 = vadd.f32 %v2137, %v2177
      %2179 = vdwg.mxu0
      %2180 = vmatpush.msra.mxu0 0.0
      %2181 = vmatpush.msra.mxu0 0.0
      %2182 = vmatpush.msra.mxu0 0.0
      %2183 = vmatpush.msra.mxu0 0.0
      %2184 = vmatpush.msra.mxu0 0.0
      %2185 = vmatpush.msra.mxu0 0.0
      %2186 = vmatpush.msra.mxu0 0.0
      %2187 = vmatpush.msra.mxu0 0.0
      %2188 = vmatpush.msra.mxu0 0.0
      %2189 = vmatpush.msra.mxu0 0.0
      %2190 = vmatpush.msra.mxu0 0.0
      %2191 = vmatpush.msra.mxu0 0.0
      %v2192 = vand.u32 %v1952, 4294901760
      %2193 = vmatpush.msra.mxu0 %v2192
      %v2194 = vand.u32 %v1951, 4294901760
      %2195 = vmatpush.msra.mxu0 %v2194
      %v2196 = vand.u32 %v1950, 4294901760
      %2197 = vmatpush.msra.mxu0 %v2196
      %v2198 = vand.u32 %v1949, 4294901760
      %2199 = vmatpush.msra.mxu0 %v2198
      %v2200 = vand.u32 %v1958, 4294901760
      %2201 = vmatmul.f32.gmra.mxu0 %v2200
      %v2202 = vpop.f32.mrf.mxu0
      %v2203 = vadd.f32 %v2170, %v2202
      %v2204 = vand.u32 %v1961, 4294901760
      %2205 = vmatmul.f32.gmra.mxu0 %v2204
      %v2206 = vpop.f32.mrf.mxu0
      %v2207 = vadd.f32 %v2174, %v2206
      %v2208 = vand.u32 %v1964, 4294901760
      %2209 = vmatmul.f32.gmra.mxu0 %v2208
      %v2210 = vpop.f32.mrf.mxu0
      %v2211 = vadd.f32 %v2178, %v2210
      %2212 = vdwg.mxu0
      %v2213 = vmul.f32 %v2203, 0.5
      %v2214 = vmul.f32 %v2207, 0.5
      %v2215 = vmul.f32 %v2211, 0.5
      %v2216 = vmul.f32 %v2203, 0.70710677
      %v2217 = vmul.f32 %v2207, 0.70710677
      %v2218 = vmul.f32 %v2211, 0.70710677
      %v2219 = vand.u32 2147483647, %v2216
      %v2220 = vand.u32 2147483647, %v2217
      %v2221 = vand.u32 2147483647, %v2218
      %v2222 = vmul.f32 %v2219, 0.3275911
      %v2223 = vmul.f32 %v2220, 0.3275911
      %v2224 = vmul.f32 %v2221, 0.3275911
      %v2225 = vadd.f32 %v2222, 1.0
      %v2226 = vadd.f32 %v2223, 1.0
      %v2227 = vadd.f32 %v2224, 1.0
      %v2228 = vrcp.pop %v2225
      %v2229 = vmul.f32 %v2225, %v2228
      %v2230 = vsub.f32 1.0, %v2229
      %v2231 = vmul.f32 %v2228, %v2230
      %v2232 = vadd.f32 %v2228, %v2231
      %vm2233 = vweird.f32 %v2225
      %vm2234 = vweird.f32 %v2228
      %vm2235 = vmor %vm2233, %vm2234
      %v2236 = vsel %vm2235, %v2228, %v2232
      %v2237 = vand.u32 2147483647, %v2225
      %vm2238 = vcmp.eq.f32.partialorder %v2237, 8.507059e+37
      %v2239 = vand.u32 %v2225, 2147483648
      %v2240 = vor.u32 1.1754944e-38, %v2239
      %v2241 = vsel %vm2238, %v2240, %v2236
      %v2242 = vmul.f32 1.0, %v2241
      %v2243 = vrcp.pop %v2226
      %v2244 = vmul.f32 %v2226, %v2243
      %v2245 = vsub.f32 1.0, %v2244
      %v2246 = vmul.f32 %v2243, %v2245
      %v2247 = vadd.f32 %v2243, %v2246
      %vm2248 = vweird.f32 %v2226
      %vm2249 = vweird.f32 %v2243
      %vm2250 = vmor %vm2248, %vm2249
      %v2251 = vsel %vm2250, %v2243, %v2247
      %v2252 = vand.u32 2147483647, %v2226
      %vm2253 = vcmp.eq.f32.partialorder %v2252, 8.507059e+37
      %v2254 = vand.u32 %v2226, 2147483648
      %v2255 = vor.u32 1.1754944e-38, %v2254
      %v2256 = vsel %vm2253, %v2255, %v2251
      %v2257 = vmul.f32 1.0, %v2256
      %v2258 = vrcp.pop %v2227
      %v2259 = vmul.f32 %v2227, %v2258
      %v2260 = vsub.f32 1.0, %v2259
      %v2261 = vmul.f32 %v2258, %v2260
      %v2262 = vadd.f32 %v2258, %v2261
      %vm2263 = vweird.f32 %v2227
      %vm2264 = vweird.f32 %v2258
      %vm2265 = vmor %vm2263, %vm2264
      %v2266 = vsel %vm2265, %v2258, %v2262
      %v2267 = vand.u32 2147483647, %v2227
      %vm2268 = vcmp.eq.f32.partialorder %v2267, 8.507059e+37
      %v2269 = vand.u32 %v2227, 2147483648
      %v2270 = vor.u32 1.1754944e-38, %v2269
      %v2271 = vsel %vm2268, %v2270, %v2266
      %v2272 = vmul.f32 1.0, %v2271
      %v2273 = vmul.f32 %v2242, 1.0614054
      %v2274 = vmul.f32 %v2257, 1.0614054
      %v2275 = vmul.f32 %v2272, 1.0614054
      %v2276 = vadd.f32 %v2273, -1.4531521
      %v2277 = vadd.f32 %v2274, -1.4531521
      %v2278 = vadd.f32 %v2275, -1.4531521
      %v2279 = vmul.f32 %v2276, %v2242
      %v2280 = vmul.f32 %v2277, %v2257
      %v2281 = vmul.f32 %v2278, %v2272
      %v2282 = vadd.f32 %v2279, 1.4214138
      %v2283 = vadd.f32 %v2280, 1.4214138
      %v2284 = vadd.f32 %v2281, 1.4214138
      %v2285 = vmul.f32 %v2282, %v2242
      %v2286 = vmul.f32 %v2283, %v2257
      %v2287 = vmul.f32 %v2284, %v2272
      %v2288 = vadd.f32 %v2285, -0.28449672
      %v2289 = vadd.f32 %v2286, -0.28449672
      %v2290 = vadd.f32 %v2287, -0.28449672
      %v2291 = vmul.f32 %v2288, %v2242
      %v2292 = vmul.f32 %v2289, %v2257
      %v2293 = vmul.f32 %v2290, %v2272
      %v2294 = vadd.f32 %v2291, 0.2548296
      %v2295 = vadd.f32 %v2292, 0.2548296
      %v2296 = vadd.f32 %v2293, 0.2548296
      %v2297 = vmul.f32 %v2294, %v2242
      %v2298 = vmul.f32 %v2295, %v2257
      %v2299 = vmul.f32 %v2296, %v2272
      %v2300 = vsub.f32 0.0, %v2219
      %v2301 = vsub.f32 0.0, %v2220
      %v2302 = vsub.f32 0.0, %v2221
      %v2303 = vmul.f32 %v2300, %v2219
      %v2304 = vmul.f32 %v2301, %v2220
      %v2305 = vmul.f32 %v2302, %v2221
      %v2306 = vmul.f32 %v2303, 1.442695
      %v2307 = vpow.pop %v2306
      %v2308 = vmul.f32 %v2304, 1.442695
      %v2309 = vpow.pop %v2308
      %v2310 = vmul.f32 %v2305, 1.442695
      %v2311 = vpow.pop %v2310
      %v2312 = vmul.f32 %v2297, %v2307
      %v2313 = vmul.f32 %v2298, %v2309
      %v2314 = vmul.f32 %v2299, %v2311
      %v2315 = vsub.f32 1.0, %v2312
      %v2316 = vsub.f32 1.0, %v2313
      %v2317 = vsub.f32 1.0, %v2314
      %vm2318 = vcmp.ge.f32.partialorder %v2216, 0.0
      %vm2319 = vcmp.ge.f32.partialorder %v2217, 0.0
      %vm2320 = vcmp.ge.f32.partialorder %v2218, 0.0
      %v2321 = vsub.f32 0.0, %v2315
      %v2322 = vsub.f32 0.0, %v2316
      %v2323 = vsub.f32 0.0, %v2317
      %v2324 = vsel %vm2318, %v2315, %v2321
      %v2325 = vsel %vm2319, %v2316, %v2322
      %v2326 = vsel %vm2320, %v2317, %v2323
      %v2327 = vadd.f32 %v2324, 1.0
      %v2328 = vadd.f32 %v2325, 1.0
      %v2329 = vadd.f32 %v2326, 1.0
      %v2330 = vmul.f32 %v2213, %v2327
      %v2331 = vmul.f32 %v2214, %v2328
      %v2332 = vmul.f32 %v2215, %v2329
      %v2333 = vld [vmem:[%s636] sm:$0xff]
      %v2334 = vld [vmem:[%s636 + $0x8] sm:$0xff]
      %v2335 = vld [vmem:[%s636 + $0x10] sm:$0xff]
      %v2336 = vld [vmem:[%s636 + $0x18] sm:$0xff]
      %v2337 = vld [vmem:[%s636 + $0x20] sm:$0xff]
      %v2338 = vld [vmem:[%s636 + $0x28] sm:$0xff]
      %v2339 = vld [vmem:[%s636 + $0x30] sm:$0xff]
      %v2340 = vld [vmem:[%s636 + $0x38] sm:$0xff]
      %v2341 = vld [vmem:[%s636 + $0x40] sm:$0xff]
      %v2342 = vld [vmem:[%s636 + $0x48] sm:$0xff]
      %v2343 = vld [vmem:[%s636 + $0x50] sm:$0xff]
      %v2344 = vld [vmem:[%s636 + $0x58] sm:$0xff]
      %v2345 = vld [vmem:[%s636 + $0x60] sm:$0xff]
      %v2346 = vld [vmem:[%s636 + $0x68] sm:$0xff]
      %v2347 = vld [vmem:[%s636 + $0x70] sm:$0xff]
      %v2348 = vld [vmem:[%s636 + $0x78] sm:$0xff]
      %v2349 = vld [vmem:[%s639] sm:$0x1]
      %v2351 = vperm.slane %v2349, 0
      %v2353 = vand.u32 %v2348, 4294901760
      %2354 = vmatpush.msra.mxu0 %v2353
      %v2355 = vand.u32 %v2347, 4294901760
      %2356 = vmatpush.msra.mxu0 %v2355
      %v2357 = vand.u32 %v2346, 4294901760
      %2358 = vmatpush.msra.mxu0 %v2357
      %v2359 = vand.u32 %v2345, 4294901760
      %2360 = vmatpush.msra.mxu0 %v2359
      %v2361 = vand.u32 %v2344, 4294901760
      %2362 = vmatpush.msra.mxu0 %v2361
      %v2363 = vand.u32 %v2343, 4294901760
      %2364 = vmatpush.msra.mxu0 %v2363
      %v2365 = vand.u32 %v2342, 4294901760
      %2366 = vmatpush.msra.mxu0 %v2365
      %v2367 = vand.u32 %v2341, 4294901760
      %2368 = vmatpush.msra.mxu0 %v2367
      %v2369 = vand.u32 %v2340, 4294901760
      %2370 = vmatpush.msra.mxu0 %v2369
      %v2371 = vand.u32 %v2339, 4294901760
      %2372 = vmatpush.msra.mxu0 %v2371
      %v2373 = vand.u32 %v2338, 4294901760
      %2374 = vmatpush.msra.mxu0 %v2373
      %v2375 = vand.u32 %v2337, 4294901760
      %2376 = vmatpush.msra.mxu0 %v2375
      %v2377 = vand.u32 %v2336, 4294901760
      %2378 = vmatpush.msra.mxu0 %v2377
      %v2379 = vand.u32 %v2335, 4294901760
      %2380 = vmatpush.msra.mxu0 %v2379
      %v2381 = vand.u32 %v2334, 4294901760
      %2382 = vmatpush.msra.mxu0 %v2381
      %v2383 = vand.u32 %v2333, 4294901760
      %2384 = vmatpush.msra.mxu0 %v2383
      %v2385 = vand.u32 %v2330, 4294901760
      %v2386 = vsub.f32 %v2330, %v2385
      %v2387 = vand.u32 %v2386, 4294901760
      %v2388 = vsub.f32 %v2386, %v2387
      %v2389 = vand.u32 %v2388, 4294901760
      %2390 = vmatmul.f32.gmra.mxu0 %v2389
      %v2391 = vpop.f32.mrf.mxu0
      %v2392 = vadd.f32 %v2351, %v2391
      %v2393 = vand.u32 %v2331, 4294901760
      %v2394 = vsub.f32 %v2331, %v2393
      %v2395 = vand.u32 %v2394, 4294901760
      %v2396 = vsub.f32 %v2394, %v2395
      %v2397 = vand.u32 %v2396, 4294901760
      %2398 = vmatmul.f32.gmra.mxu0 %v2397
      %v2399 = vpop.f32.mrf.mxu0
      %v2400 = vadd.f32 %v2351, %v2399
      %v2401 = vand.u32 %v2332, 4294901760
      %v2402 = vsub.f32 %v2332, %v2401
      %v2403 = vand.u32 %v2402, 4294901760
      %v2404 = vsub.f32 %v2402, %v2403
      %v2405 = vand.u32 %v2404, 4294901760
      %2406 = vmatmul.f32.gmra.mxu0 %v2405
      %v2407 = vpop.f32.mrf.mxu0
      %v2408 = vadd.f32 %v2351, %v2407
      %2409 = vdwg.mxu0
      %v2410 = vand.u32 %v2348, 4294901760
      %v2411 = vsub.f32 %v2348, %v2410
      %v2412 = vand.u32 %v2411, 4294901760
      %v2413 = vsub.f32 %v2411, %v2412
      %v2414 = vand.u32 %v2413, 4294901760
      %2415 = vmatpush.msra.mxu0 %v2414
      %v2416 = vand.u32 %v2347, 4294901760
      %v2417 = vsub.f32 %v2347, %v2416
      %v2418 = vand.u32 %v2417, 4294901760
      %v2419 = vsub.f32 %v2417, %v2418
      %v2420 = vand.u32 %v2419, 4294901760
      %2421 = vmatpush.msra.mxu0 %v2420
      %v2422 = vand.u32 %v2346, 4294901760
      %v2423 = vsub.f32 %v2346, %v2422
      %v2424 = vand.u32 %v2423, 4294901760
      %v2425 = vsub.f32 %v2423, %v2424
      %v2426 = vand.u32 %v2425, 4294901760
      %2427 = vmatpush.msra.mxu0 %v2426
      %v2428 = vand.u32 %v2345, 4294901760
      %v2429 = vsub.f32 %v2345, %v2428
      %v2430 = vand.u32 %v2429, 4294901760
      %v2431 = vsub.f32 %v2429, %v2430
      %v2432 = vand.u32 %v2431, 4294901760
      %2433 = vmatpush.msra.mxu0 %v2432
      %v2434 = vand.u32 %v2344, 4294901760
      %v2435 = vsub.f32 %v2344, %v2434
      %v2436 = vand.u32 %v2435, 4294901760
      %v2437 = vsub.f32 %v2435, %v2436
      %v2438 = vand.u32 %v2437, 4294901760
      %2439 = vmatpush.msra.mxu0 %v2438
      %v2440 = vand.u32 %v2343, 4294901760
      %v2441 = vsub.f32 %v2343, %v2440
      %v2442 = vand.u32 %v2441, 4294901760
      %v2443 = vsub.f32 %v2441, %v2442
      %v2444 = vand.u32 %v2443, 4294901760
      %2445 = vmatpush.msra.mxu0 %v2444
      %v2446 = vand.u32 %v2342, 4294901760
      %v2447 = vsub.f32 %v2342, %v2446
      %v2448 = vand.u32 %v2447, 4294901760
      %v2449 = vsub.f32 %v2447, %v2448
      %v2450 = vand.u32 %v2449, 4294901760
      %2451 = vmatpush.msra.mxu0 %v2450
      %v2452 = vand.u32 %v2341, 4294901760
      %v2453 = vsub.f32 %v2341, %v2452
      %v2454 = vand.u32 %v2453, 4294901760
      %v2455 = vsub.f32 %v2453, %v2454
      %v2456 = vand.u32 %v2455, 4294901760
      %2457 = vmatpush.msra.mxu0 %v2456
      %v2458 = vand.u32 %v2340, 4294901760
      %v2459 = vsub.f32 %v2340, %v2458
      %v2460 = vand.u32 %v2459, 4294901760
      %v2461 = vsub.f32 %v2459, %v2460
      %v2462 = vand.u32 %v2461, 4294901760
      %2463 = vmatpush.msra.mxu0 %v2462
      %v2464 = vand.u32 %v2339, 4294901760
      %v2465 = vsub.f32 %v2339, %v2464
      %v2466 = vand.u32 %v2465, 4294901760
      %v2467 = vsub.f32 %v2465, %v2466
      %v2468 = vand.u32 %v2467, 4294901760
      %2469 = vmatpush.msra.mxu0 %v2468
      %v2470 = vand.u32 %v2338, 4294901760
      %v2471 = vsub.f32 %v2338, %v2470
      %v2472 = vand.u32 %v2471, 4294901760
      %v2473 = vsub.f32 %v2471, %v2472
      %v2474 = vand.u32 %v2473, 4294901760
      %2475 = vmatpush.msra.mxu0 %v2474
      %v2476 = vand.u32 %v2337, 4294901760
      %v2477 = vsub.f32 %v2337, %v2476
      %v2478 = vand.u32 %v2477, 4294901760
      %v2479 = vsub.f32 %v2477, %v2478
      %v2480 = vand.u32 %v2479, 4294901760
      %2481 = vmatpush.msra.mxu0 %v2480
      %v2482 = vand.u32 %v2336, 4294901760
      %v2483 = vsub.f32 %v2336, %v2482
      %v2484 = vand.u32 %v2483, 4294901760
      %v2485 = vsub.f32 %v2483, %v2484
      %v2486 = vand.u32 %v2485, 4294901760
      %2487 = vmatpush.msra.mxu0 %v2486
      %v2488 = vand.u32 %v2335, 4294901760
      %v2489 = vsub.f32 %v2335, %v2488
      %v2490 = vand.u32 %v2489, 4294901760
      %v2491 = vsub.f32 %v2489, %v2490
      %v2492 = vand.u32 %v2491, 4294901760
      %2493 = vmatpush.msra.mxu0 %v2492
      %v2494 = vand.u32 %v2334, 4294901760
      %v2495 = vsub.f32 %v2334, %v2494
      %v2496 = vand.u32 %v2495, 4294901760
      %v2497 = vsub.f32 %v2495, %v2496
      %v2498 = vand.u32 %v2497, 4294901760
      %2499 = vmatpush.msra.mxu0 %v2498
      %v2500 = vand.u32 %v2333, 4294901760
      %v2501 = vsub.f32 %v2333, %v2500
      %v2502 = vand.u32 %v2501, 4294901760
      %v2503 = vsub.f32 %v2501, %v2502
      %v2504 = vand.u32 %v2503, 4294901760
      %2505 = vmatpush.msra.mxu0 %v2504
      %v2506 = vand.u32 %v2330, 4294901760
      %2507 = vmatmul.f32.gmra.mxu0 %v2506
      %v2508 = vpop.f32.mrf.mxu0
      %v2509 = vadd.f32 %v2392, %v2508
      %v2510 = vand.u32 %v2331, 4294901760
      %2511 = vmatmul.f32.gmra.mxu0 %v2510
      %v2512 = vpop.f32.mrf.mxu0
      %v2513 = vadd.f32 %v2400, %v2512
      %v2514 = vand.u32 %v2332, 4294901760
      %2515 = vmatmul.f32.gmra.mxu0 %v2514
      %v2516 = vpop.f32.mrf.mxu0
      %v2517 = vadd.f32 %v2408, %v2516
      %2518 = vdwg.mxu0
      %v2519 = vand.u32 %v2348, 4294901760
      %v2520 = vsub.f32 %v2348, %v2519
      %2521 = vmatpush.msra.mxu0 %v2520
      %v2522 = vand.u32 %v2347, 4294901760
      %v2523 = vsub.f32 %v2347, %v2522
      %2524 = vmatpush.msra.mxu0 %v2523
      %v2525 = vand.u32 %v2346, 4294901760
      %v2526 = vsub.f32 %v2346, %v2525
      %2527 = vmatpush.msra.mxu0 %v2526
      %v2528 = vand.u32 %v2345, 4294901760
      %v2529 = vsub.f32 %v2345, %v2528
      %2530 = vmatpush.msra.mxu0 %v2529
      %v2531 = vand.u32 %v2344, 4294901760
      %v2532 = vsub.f32 %v2344, %v2531
      %2533 = vmatpush.msra.mxu0 %v2532
      %v2534 = vand.u32 %v2343, 4294901760
      %v2535 = vsub.f32 %v2343, %v2534
      %2536 = vmatpush.msra.mxu0 %v2535
      %v2537 = vand.u32 %v2342, 4294901760
      %v2538 = vsub.f32 %v2342, %v2537
      %2539 = vmatpush.msra.mxu0 %v2538
      %v2540 = vand.u32 %v2341, 4294901760
      %v2541 = vsub.f32 %v2341, %v2540
      %2542 = vmatpush.msra.mxu0 %v2541
      %v2543 = vand.u32 %v2340, 4294901760
      %v2544 = vsub.f32 %v2340, %v2543
      %2545 = vmatpush.msra.mxu0 %v2544
      %v2546 = vand.u32 %v2339, 4294901760
      %v2547 = vsub.f32 %v2339, %v2546
      %2548 = vmatpush.msra.mxu0 %v2547
      %v2549 = vand.u32 %v2338, 4294901760
      %v2550 = vsub.f32 %v2338, %v2549
      %2551 = vmatpush.msra.mxu0 %v2550
      %v2552 = vand.u32 %v2337, 4294901760
      %v2553 = vsub.f32 %v2337, %v2552
      %2554 = vmatpush.msra.mxu0 %v2553
      %v2555 = vand.u32 %v2336, 4294901760
      %v2556 = vsub.f32 %v2336, %v2555
      %2557 = vmatpush.msra.mxu0 %v2556
      %v2558 = vand.u32 %v2335, 4294901760
      %v2559 = vsub.f32 %v2335, %v2558
      %2560 = vmatpush.msra.mxu0 %v2559
      %v2561 = vand.u32 %v2334, 4294901760
      %v2562 = vsub.f32 %v2334, %v2561
      %2563 = vmatpush.msra.mxu0 %v2562
      %v2564 = vand.u32 %v2333, 4294901760
      %v2565 = vsub.f32 %v2333, %v2564
      %2566 = vmatpush.msra.mxu0 %v2565
      %v2567 = vand.u32 %v2330, 4294901760
      %v2568 = vsub.f32 %v2330, %v2567
      %2569 = vmatmul.f32.gmra.mxu0 %v2568
      %v2570 = vpop.f32.mrf.mxu0
      %v2571 = vadd.f32 %v2509, %v2570
      %v2572 = vand.u32 %v2331, 4294901760
      %v2573 = vsub.f32 %v2331, %v2572
      %2574 = vmatmul.f32.gmra.mxu0 %v2573
      %v2575 = vpop.f32.mrf.mxu0
      %v2576 = vadd.f32 %v2513, %v2575
      %v2577 = vand.u32 %v2332, 4294901760
      %v2578 = vsub.f32 %v2332, %v2577
      %2579 = vmatmul.f32.gmra.mxu0 %v2578
      %v2580 = vpop.f32.mrf.mxu0
      %v2581 = vadd.f32 %v2517, %v2580
      %2582 = vdwg.mxu0
      %v2583 = vand.u32 %v2348, 4294901760
      %2584 = vmatpush.msra.mxu0 %v2583
      %v2585 = vand.u32 %v2347, 4294901760
      %2586 = vmatpush.msra.mxu0 %v2585
      %v2587 = vand.u32 %v2346, 4294901760
      %2588 = vmatpush.msra.mxu0 %v2587
      %v2589 = vand.u32 %v2345, 4294901760
      %2590 = vmatpush.msra.mxu0 %v2589
      %v2591 = vand.u32 %v2344, 4294901760
      %2592 = vmatpush.msra.mxu0 %v2591
      %v2593 = vand.u32 %v2343, 4294901760
      %2594 = vmatpush.msra.mxu0 %v2593
      %v2595 = vand.u32 %v2342, 4294901760
      %2596 = vmatpush.msra.mxu0 %v2595
      %v2597 = vand.u32 %v2341, 4294901760
      %2598 = vmatpush.msra.mxu0 %v2597
      %v2599 = vand.u32 %v2340, 4294901760
      %2600 = vmatpush.msra.mxu0 %v2599
      %v2601 = vand.u32 %v2339, 4294901760
      %2602 = vmatpush.msra.mxu0 %v2601
      %v2603 = vand.u32 %v2338, 4294901760
      %2604 = vmatpush.msra.mxu0 %v2603
      %v2605 = vand.u32 %v2337, 4294901760
      %2606 = vmatpush.msra.mxu0 %v2605
      %v2607 = vand.u32 %v2336, 4294901760
      %2608 = vmatpush.msra.mxu0 %v2607
      %v2609 = vand.u32 %v2335, 4294901760
      %2610 = vmatpush.msra.mxu0 %v2609
      %v2611 = vand.u32 %v2334, 4294901760
      %2612 = vmatpush.msra.mxu0 %v2611
      %v2613 = vand.u32 %v2333, 4294901760
      %2614 = vmatpush.msra.mxu0 %v2613
      %v2615 = vand.u32 %v2330, 4294901760
      %v2616 = vsub.f32 %v2330, %v2615
      %v2617 = vand.u32 %v2616, 4294901760
      %2618 = vmatmul.f32.gmra.mxu0 %v2617
      %v2619 = vpop.f32.mrf.mxu0
      %v2620 = vadd.f32 %v2571, %v2619
      %v2621 = vand.u32 %v2331, 4294901760
      %v2622 = vsub.f32 %v2331, %v2621
      %v2623 = vand.u32 %v2622, 4294901760
      %2624 = vmatmul.f32.gmra.mxu0 %v2623
      %v2625 = vpop.f32.mrf.mxu0
      %v2626 = vadd.f32 %v2576, %v2625
      %v2627 = vand.u32 %v2332, 4294901760
      %v2628 = vsub.f32 %v2332, %v2627
      %v2629 = vand.u32 %v2628, 4294901760
      %2630 = vmatmul.f32.gmra.mxu0 %v2629
      %v2631 = vpop.f32.mrf.mxu0
      %v2632 = vadd.f32 %v2581, %v2631
      %2633 = vdwg.mxu0
      %v2634 = vand.u32 %v2348, 4294901760
      %v2635 = vsub.f32 %v2348, %v2634
      %v2636 = vand.u32 %v2635, 4294901760
      %2637 = vmatpush.msra.mxu0 %v2636
      %v2638 = vand.u32 %v2347, 4294901760
      %v2639 = vsub.f32 %v2347, %v2638
      %v2640 = vand.u32 %v2639, 4294901760
      %2641 = vmatpush.msra.mxu0 %v2640
      %v2642 = vand.u32 %v2346, 4294901760
      %v2643 = vsub.f32 %v2346, %v2642
      %v2644 = vand.u32 %v2643, 4294901760
      %2645 = vmatpush.msra.mxu0 %v2644
      %v2646 = vand.u32 %v2345, 4294901760
      %v2647 = vsub.f32 %v2345, %v2646
      %v2648 = vand.u32 %v2647, 4294901760
      %2649 = vmatpush.msra.mxu0 %v2648
      %v2650 = vand.u32 %v2344, 4294901760
      %v2651 = vsub.f32 %v2344, %v2650
      %v2652 = vand.u32 %v2651, 4294901760
      %2653 = vmatpush.msra.mxu0 %v2652
      %v2654 = vand.u32 %v2343, 4294901760
      %v2655 = vsub.f32 %v2343, %v2654
      %v2656 = vand.u32 %v2655, 4294901760
      %2657 = vmatpush.msra.mxu0 %v2656
      %v2658 = vand.u32 %v2342, 4294901760
      %v2659 = vsub.f32 %v2342, %v2658
      %v2660 = vand.u32 %v2659, 4294901760
      %2661 = vmatpush.msra.mxu0 %v2660
      %v2662 = vand.u32 %v2341, 4294901760
      %v2663 = vsub.f32 %v2341, %v2662
      %v2664 = vand.u32 %v2663, 4294901760
      %2665 = vmatpush.msra.mxu0 %v2664
      %v2666 = vand.u32 %v2340, 4294901760
      %v2667 = vsub.f32 %v2340, %v2666
      %v2668 = vand.u32 %v2667, 4294901760
      %2669 = vmatpush.msra.mxu0 %v2668
      %v2670 = vand.u32 %v2339, 4294901760
      %v2671 = vsub.f32 %v2339, %v2670
      %v2672 = vand.u32 %v2671, 4294901760
      %2673 = vmatpush.msra.mxu0 %v2672
      %v2674 = vand.u32 %v2338, 4294901760
      %v2675 = vsub.f32 %v2338, %v2674
      %v2676 = vand.u32 %v2675, 4294901760
      %2677 = vmatpush.msra.mxu0 %v2676
      %v2678 = vand.u32 %v2337, 4294901760
      %v2679 = vsub.f32 %v2337, %v2678
      %v2680 = vand.u32 %v2679, 4294901760
      %2681 = vmatpush.msra.mxu0 %v2680
      %v2682 = vand.u32 %v2336, 4294901760
      %v2683 = vsub.f32 %v2336, %v2682
      %v2684 = vand.u32 %v2683, 4294901760
      %2685 = vmatpush.msra.mxu0 %v2684
      %v2686 = vand.u32 %v2335, 4294901760
      %v2687 = vsub.f32 %v2335, %v2686
      %v2688 = vand.u32 %v2687, 4294901760
      %2689 = vmatpush.msra.mxu0 %v2688
      %v2690 = vand.u32 %v2334, 4294901760
      %v2691 = vsub.f32 %v2334, %v2690
      %v2692 = vand.u32 %v2691, 4294901760
      %2693 = vmatpush.msra.mxu0 %v2692
      %v2694 = vand.u32 %v2333, 4294901760
      %v2695 = vsub.f32 %v2333, %v2694
      %v2696 = vand.u32 %v2695, 4294901760
      %2697 = vmatpush.msra.mxu0 %v2696
      %v2698 = vand.u32 %v2330, 4294901760
      %2699 = vmatmul.f32.gmra.mxu0 %v2698
      %v2700 = vpop.f32.mrf.mxu0
      %v2701 = vadd.f32 %v2620, %v2700
      %v2702 = vand.u32 %v2331, 4294901760
      %2703 = vmatmul.f32.gmra.mxu0 %v2702
      %v2704 = vpop.f32.mrf.mxu0
      %v2705 = vadd.f32 %v2626, %v2704
      %v2706 = vand.u32 %v2332, 4294901760
      %2707 = vmatmul.f32.gmra.mxu0 %v2706
      %v2708 = vpop.f32.mrf.mxu0
      %v2709 = vadd.f32 %v2632, %v2708
      %2710 = vdwg.mxu0
      %v2711 = vand.u32 %v2348, 4294901760
      %2712 = vmatpush.msra.mxu0 %v2711
      %v2713 = vand.u32 %v2347, 4294901760
      %2714 = vmatpush.msra.mxu0 %v2713
      %v2715 = vand.u32 %v2346, 4294901760
      %2716 = vmatpush.msra.mxu0 %v2715
      %v2717 = vand.u32 %v2345, 4294901760
      %2718 = vmatpush.msra.mxu0 %v2717
      %v2719 = vand.u32 %v2344, 4294901760
      %2720 = vmatpush.msra.mxu0 %v2719
      %v2721 = vand.u32 %v2343, 4294901760
      %2722 = vmatpush.msra.mxu0 %v2721
      %v2723 = vand.u32 %v2342, 4294901760
      %2724 = vmatpush.msra.mxu0 %v2723
      %v2725 = vand.u32 %v2341, 4294901760
      %2726 = vmatpush.msra.mxu0 %v2725
      %v2727 = vand.u32 %v2340, 4294901760
      %2728 = vmatpush.msra.mxu0 %v2727
      %v2729 = vand.u32 %v2339, 4294901760
      %2730 = vmatpush.msra.mxu0 %v2729
      %v2731 = vand.u32 %v2338, 4294901760
      %2732 = vmatpush.msra.mxu0 %v2731
      %v2733 = vand.u32 %v2337, 4294901760
      %2734 = vmatpush.msra.mxu0 %v2733
      %v2735 = vand.u32 %v2336, 4294901760
      %2736 = vmatpush.msra.mxu0 %v2735
      %v2737 = vand.u32 %v2335, 4294901760
      %2738 = vmatpush.msra.mxu0 %v2737
      %v2739 = vand.u32 %v2334, 4294901760
      %2740 = vmatpush.msra.mxu0 %v2739
      %v2741 = vand.u32 %v2333, 4294901760
      %2742 = vmatpush.msra.mxu0 %v2741
      %v2743 = vand.u32 %v2330, 4294901760
      %2744 = vmatmul.f32.gmra.mxu0 %v2743
      %v2745 = vpop.f32.mrf.mxu0
      %v2746 = vadd.f32 %v2701, %v2745
      %v2747 = vand.u32 %v2331, 4294901760
      %2748 = vmatmul.f32.gmra.mxu0 %v2747
      %v2749 = vpop.f32.mrf.mxu0
      %v2750 = vadd.f32 %v2705, %v2749
      %v2751 = vand.u32 %v2332, 4294901760
      %2752 = vmatmul.f32.gmra.mxu0 %v2751
      %v2753 = vpop.f32.mrf.mxu0
      %v2754 = vadd.f32 %v2709, %v2753
      %2755 = vdwg.mxu0
      %v2756 = vadd.f32 %v1866, %v2746
      %v2757 = vadd.f32 %v1867, %v2750
      %v2758 = vadd.f32 %v1868, %v2754
      %2759 = vst.msk [vmem:[%s644] sm:$0xff] %vm662, %v2756
      %2760 = vst.msk [vmem:[%s644 + $0x8] sm:$0xff] %vm662, %v2757
      %2761 = vst.msk [vmem:[%s644 + $0x10] sm:$0x1] %vm669, %v2758
      %p2762 = scmp.lt.s32.totalorder %s28, 1
      %s2763 = scalar_select %p2762, %s28, 1
      %s2764 = smul.addr %s2763, 3
      %s2765 = smul.addr %s2764, 8
      %s2766 = scalar_lea.vmem %s13, %s2765
      // Predicated region
      $region77: #{tpu_custom_call.1} parent=71 // pred_check
        %p2767 = pneg %p392
      $region78: #{tpu_custom_call.1} parent=71 // pred_check_branch
        %2769 = sbr.rel (%p2767) target = $region80
      $region79: #{tpu_custom_call.1} parent=71 // pred_region
        _
      $region80: #{tpu_custom_call.1} parent=71 // pred_fallthru
        _
    $region72: #{tpu_custom_call.1} parent=5 // pred_fallthru
      _
    %p2770 = scmp.le.s32.totalorder 2, %s19
    // Predicated region
    $region81: #{tpu_custom_call.1} parent=5 // pred_check
      %p2771 = pneg %p2770
    $region82: #{tpu_custom_call.1} parent=5 // pred_check_branch
      %2773 = sbr.rel (%p2771) target = $region84
    $region83: #{tpu_custom_call.1} parent=5 // pred_region
      %s2774 = ssub.s32 %s19, 2
      // Predicated region
      $region85: #{tpu_custom_call.1} parent=83 // pred_check
        %p2775 = pneg %p398
      $region86: #{tpu_custom_call.1} parent=83 // pred_check_branch
        %2777 = sbr.rel (%p2775) target = $region88
      $region87: #{tpu_custom_call.1} parent=83 // pred_region
        %p2778 = scmp.lt.s32.totalorder %s30, 1
        %s2779 = scalar_select %p2778, %s30, 1
        %s2780 = smul.addr %s2779, 3
        %s2781 = smul.addr %s2780, 8
        %s2782 = scalar_lea.vmem %s13, %s2781
      $region88: #{tpu_custom_call.1} parent=83 // pred_fallthru
        _
    $region84: #{tpu_custom_call.1} parent=5 // pred_fallthru
      _
  $region6: #{tpu_custom_call.1} parent=0 // loop_footer
    %s23 = sadd.s32 1, %s19
  $region7: #{tpu_custom_call.1} parent=0 // loop_footer_branch
    %18 = sbr.rel target = $region3
  $region8: #{tpu_custom_call.1} parent=0 // loop_exit
    _

</llo_original>
